<compile_context>
chip_gen: v7x
topology: tpu7x:2x2x1
jax: 0.10.0
libtpu: 0.0.40
codegen_flags: <defaults>
</compile_context>

<pallas_src>
import jax
import jax.numpy as jnp
from jax.experimental import pallas as pl
from jax.experimental.pallas import tpu as pltpu

POSE_DIM = 39
H_DIM = 32
LATENT_DIM = 16
PRED_LEN = 14


# ----------------------------------------------------------------------------
# Pallas kernel
# ----------------------------------------------------------------------------
def _lstm_gates(gates, c):
    """LSTM gate nonlinearity, gate order (i, f, g, o).

    The i/f/o gate columns of every weight/bias were pre-scaled by 0.5 in the
    wrapper, so sigmoid(x) = 0.5*(tanh(x/2)+1) is recovered from ONE tanh over
    the full (B, 4H) lane-dense gate vector -> 2 EUP pushes per cell step
    instead of 5.  `c is None` means the previous cell state is exactly zero
    (skip the f*c term)."""
    t = jnp.tanh(gates)
    i = 0.5 * (t[:, 0 * H_DIM:1 * H_DIM] + 1.0)
    f = 0.5 * (t[:, 1 * H_DIM:2 * H_DIM] + 1.0)
    g = t[:, 2 * H_DIM:3 * H_DIM]
    o = 0.5 * (t[:, 3 * H_DIM:4 * H_DIM] + 1.0)
    c_new = i * g if c is None else f * c + i * g
    h_new = o * jnp.tanh(c_new)
    return h_new, c_new


def _vae_kernel(obs_ref, eps_ref,
                wih0_ref, whh0_ref, b0_ref,
                wih1_ref, whh1_ref, b1_ref,
                wmv_ref, bmv_ref,
                wfc_ref, bfc_ref,
                wdih_ref, wdhh_ref, bd_ref,
                wdf_ref, bdf_ref,
                wmlp_ref, bmlp_ref,
                preds_ref, mv_ref):
    S, B, P = obs_ref.shape
    G = 4 * H_DIM

    # Weights resident once (total working set << VMEM on v5e/v6e/v7x).
    whh0 = whh0_ref[...]
    wih1 = wih1_ref[...]
    whh1 = whh1_ref[...]
    wdf = wdf_ref[...]
    wmlp = wmlp_ref[...]

    # Hoisted bias broadcasts (JAX does not CSE broadcast_in_dim per step).
    b1 = jnp.broadcast_to(b1_ref[...], (B, G))
    bdf = jnp.broadcast_to(bdf_ref[...], (B, G))

    # ---- Encoder ------------------------------------------------------------
    # Layer-0 input projection for the WHOLE sequence as one matmul, then
    # reshaped to (S, B, 4H) once so per-step access is a leading-axis index
    # (no unaligned sublane slices on the recurrent chain).
    obs = obs_ref[...]                                           # (S, B, P)
    x0_all = (jnp.dot(obs.reshape(S * B, P), wih0_ref[...],
                      preferred_element_type=jnp.float32)
              + jnp.broadcast_to(b0_ref[...], (S * B, G))
              ).reshape(S, B, G)                                 # (S, B, 4H)

    # t = 0: initial h/c are exactly zero -> skip h@W_hh dots and f*c terms.
    h0, c0 = _lstm_gates(x0_all[0], None)
    g1 = jnp.dot(h0, wih1, preferred_element_type=jnp.float32) + b1
    h1, c1 = _lstm_gates(g1, None)

    # Fully unrolled: static indices + LLO-visible cross-step scheduling.
    for t in range(1, S):
        g0 = x0_all[t] + jnp.dot(h0, whh0, preferred_element_type=jnp.float32)
        h0, c0 = _lstm_gates(g0, c0)
        # Layer 1: two independent dots instead of per-step lane concat.
        g1 = (jnp.dot(h0, wih1, preferred_element_type=jnp.float32)
              + jnp.dot(h1, whh1, preferred_element_type=jnp.float32) + b1)
        h1, c1 = _lstm_gates(g1, c1)
        # TODO(synk): nn.LSTM inter-layer dropout is train-only; omitted (eval).

    # ---- mean / log_var heads (one matmul, single (B, 2L) store) ------------
    mv = (jnp.dot(h1, wmv_ref[...], preferred_element_type=jnp.float32)
          + bmv_ref[...])                                        # (B, 2L)
    mv_ref[...] = mv
    mean = mv[:, :LATENT_DIM]
    log_var = mv[:, LATENT_DIM:2 * LATENT_DIM]

    # ---- Reparameterization: z = mean + exp(0.5*log_var) * eps --------------
    z = mean + jnp.exp(0.5 * log_var) * eps_ref[...]

    # ---- Decoder: FC(z) -> h0, c0 = 0, autoregressive 1-layer LSTM ----------
    dh = (jnp.dot(z, wfc_ref[...], preferred_element_type=jnp.float32)
          + bfc_ref[...])

    # Step 0: input is obs[-1]; cell state is zero.  Two dots, no concat.
    g = (jnp.dot(obs[S - 1], wdih_ref[...], preferred_element_type=jnp.float32)
         + jnp.dot(dh, wdhh_ref[...], preferred_element_type=jnp.float32)
         + bd_ref[...])
    dh, dc = _lstm_gates(g, None)
    dh_states = [dh]

    # Steps 1..13: output MLP folded into the recurrence -> ONE dependent
    # matmul per step.
    for _ in range(1, PRED_LEN):
        g = jnp.dot(dh, wdf, preferred_element_type=jnp.float32) + bdf
        dh, dc = _lstm_gates(g, dc)
        dh_states.append(dh)

    # All 14 output projections as one batched matmul, off the critical path,
    # followed by a single full-slab store.
    dh_all = jnp.stack(dh_states, axis=0).reshape(PRED_LEN * B, H_DIM)
    preds = (jnp.dot(dh_all, wmlp, preferred_element_type=jnp.float32)
             + jnp.broadcast_to(bmlp_ref[...], (PRED_LEN * B, P)))
    preds_ref[...] = preds                                       # (PRED_LEN*B, P)


# ----------------------------------------------------------------------------
# Wrapper (plain-JAX glue: weight transposition / packing / fusion, pallas_call)
# ----------------------------------------------------------------------------
@jax.jit
def vae_forward(obs_s, eps, params):
    S, B, P = obs_s.shape
    f32 = jnp.float32

    # Pre-scale i/f/o gate columns by 0.5 so the kernel recovers sigmoid from a
    # single tanh over the full gate vector (the g gate columns stay unscaled).
    gate_scale = jnp.concatenate([
        jnp.full((H_DIM,), 0.5, f32), jnp.full((H_DIM,), 0.5, f32),
        jnp.ones((H_DIM,), f32), jnp.full((H_DIM,), 0.5, f32)])

    def t2(w):                     # (out, in) -> (in, out)
        return jnp.transpose(w).astype(f32)

    def gate_w(w):                 # transposed + gate-column prescale
        return t2(w) * gate_scale[None, :]

    def gate_b(b_ih, b_hh):
        return ((b_ih + b_hh).astype(f32) * gate_scale).reshape(1, -1)

    # Encoder layer 0 / 1 (split ih/hh; no per-step concat in-kernel).
    wih0 = gate_w(params["enc_w_ih0"])                 # (P, 4H)
    whh0 = gate_w(params["enc_w_hh0"])                 # (H, 4H)
    b0 = gate_b(params["enc_b_ih0"], params["enc_b_hh0"])
    wih1 = gate_w(params["enc_w_ih1"])                 # (H, 4H)
    whh1 = gate_w(params["enc_w_hh1"])                 # (H, 4H)
    b1 = gate_b(params["enc_b_ih1"], params["enc_b_hh1"])

    # Fused mean/log_var head.
    wmv = jnp.concatenate([t2(params["fc_mean_w"]), t2(params["fc_var_w"])],
                          axis=1)                      # (H, 2L)
    bmv = jnp.concatenate([params["fc_mean_b"],
                           params["fc_var_b"]]).astype(f32).reshape(1, -1)

    # Decoder FC (latent -> h).
    wfc = t2(params["dec_fc_w"])                       # (L, H)
    bfc = params["dec_fc_b"].astype(f32).reshape(1, -1)

    # Decoder LSTM (split, prescaled) + output MLP.
    wdih = gate_w(params["dec_w_ih"])                  # (P, 4H)
    wdhh = gate_w(params["dec_w_hh"])                  # (H, 4H)
    bd = gate_b(params["dec_b_ih"], params["dec_b_hh"])
    wmlp = t2(params["mlp_w"])                         # (H, P)
    bmlp = params["mlp_b"].astype(f32).reshape(1, -1)  # (1, P)

    # Fold the output MLP into the recurrence for steps t>=1:
    #   g_t = dh_{t-1} @ (Wmlp^T @ Wih^T + Whh^T) + (bmlp @ Wih^T + b)
    # (prescale already applied to wdih/wdhh/bd columns, which distributes).
    wd_fused = wmlp @ wdih + wdhh                      # (H, 4H)
    bd_fused = bmlp @ wdih + bd                        # (1, 4H)

    kernel_args = (
        obs_s.astype(f32), eps.astype(f32),
        wih0, whh0, b0,
        wih1, whh1, b1,
        wmv, bmv,
        wfc, bfc,
        wdih, wdhh, bd,
        wd_fused, bd_fused,
        wmlp, bmlp,
    )

    vmem = pl.BlockSpec(memory_space=pltpu.MemorySpace.VMEM)
    out_shape = (
        jax.ShapeDtypeStruct((PRED_LEN * B, P), f32),          # preds (flat)
        jax.ShapeDtypeStruct((B, 2 * LATENT_DIM), f32),        # [mean | log_var]
    )

    # NOTE(v7x): a gridless call uses one TensorCore; for large batches add a
    # ("parallel",) grid axis over >=8-row batch tiles to shard across both TCs.
    preds_flat, mv = pl.pallas_call(
        _vae_kernel,
        out_shape=out_shape,
        in_specs=[vmem] * len(kernel_args),
        out_specs=(vmem, vmem),
    )(*kernel_args)

    preds_s = preds_flat.reshape(PRED_LEN, B, P)
    mean = mv[:, :LATENT_DIM]
    log_var = mv[:, LATENT_DIM:]
    return preds_s, mean, log_var


# ----------------------------------------------------------------------------
# Pure-JAX reference (same math, unfused) for a sanity check
# ----------------------------------------------------------------------------
def _cell_ref(x, h, c, w_ih, w_hh, b_ih, b_hh):
    g = x @ w_ih.T + b_ih + h @ w_hh.T + b_hh
    i, f, gg, o = jnp.split(g, 4, axis=-1)
    c_new = jax.nn.sigmoid(f) * c + jax.nn.sigmoid(i) * jnp.tanh(gg)
    h_new = jax.nn.sigmoid(o) * jnp.tanh(c_new)
    return h_new, c_new


def vae_reference(obs_s, eps, p):
    S, B, _ = obs_s.shape
    h0 = c0 = h1 = c1 = jnp.zeros((B, H_DIM), jnp.float32)
    for t in range(S):
        h0, c0 = _cell_ref(obs_s[t], h0, c0, p["enc_w_ih0"], p["enc_w_hh0"],
                           p["enc_b_ih0"], p["enc_b_hh0"])
        h1, c1 = _cell_ref(h0, h1, c1, p["enc_w_ih1"], p["enc_w_hh1"],
                           p["enc_b_ih1"], p["enc_b_hh1"])
    mean = h1 @ p["fc_mean_w"].T + p["fc_mean_b"]
    log_var = h1 @ p["fc_var_w"].T + p["fc_var_b"]
    z = mean + jnp.exp(0.5 * log_var) * eps
    dh = z @ p["dec_fc_w"].T + p["dec_fc_b"]
    dc = jnp.zeros((B, H_DIM), jnp.float32)
    last = obs_s[-1]
    preds = []
    for _ in range(PRED_LEN):
        dh, dc = _cell_ref(last, dh, dc, p["dec_w_ih"], p["dec_w_hh"],
                           p["dec_b_ih"], p["dec_b_hh"])
        curr = dh @ p["mlp_w"].T + p["mlp_b"]
        preds.append(curr)
        last = curr
    return jnp.stack(preds, axis=0), mean, log_var


# ----------------------------------------------------------------------------
# Deterministic parameter init (shapes follow the PyTorch module __init__)
# ----------------------------------------------------------------------------
def init_params(key):
    k = 1.0 / jnp.sqrt(H_DIM)

    def u(key, shape):
        return jax.random.uniform(key, shape, jnp.float32, -k, k)

    names_shapes = [
        ("enc_w_ih0", (4 * H_DIM, POSE_DIM)), ("enc_w_hh0", (4 * H_DIM, H_DIM)),
        ("enc_b_ih0", (4 * H_DIM,)), ("enc_b_hh0", (4 * H_DIM,)),
        ("enc_w_ih1", (4 * H_DIM, H_DIM)), ("enc_w_hh1", (4 * H_DIM, H_DIM)),
        ("enc_b_ih1", (4 * H_DIM,)), ("enc_b_hh1", (4 * H_DIM,)),
        ("fc_mean_w", (LATENT_DIM, H_DIM)), ("fc_mean_b", (LATENT_DIM,)),
        ("fc_var_w", (LATENT_DIM, H_DIM)), ("fc_var_b", (LATENT_DIM,)),
        ("dec_fc_w", (H_DIM, LATENT_DIM)), ("dec_fc_b", (H_DIM,)),
        ("dec_w_ih", (4 * H_DIM, POSE_DIM)), ("dec_w_hh", (4 * H_DIM, H_DIM)),
        ("dec_b_ih", (4 * H_DIM,)), ("dec_b_hh", (4 * H_DIM,)),
        ("mlp_w", (POSE_DIM, H_DIM)), ("mlp_b", (POSE_DIM,)),
    ]
    keys = jax.random.split(key, len(names_shapes))
    return {n: u(kk, s) for (n, s), kk in zip(names_shapes, keys)}


if __name__ == "__main__":
    key = jax.random.PRNGKey(0)
    k_obs, k_eps, k_par = jax.random.split(key, 3)

    SEQ, BATCH = 8, 2
    obs_s = jax.random.normal(k_obs, (SEQ, BATCH, POSE_DIM), jnp.float32)
    eps = jax.random.normal(k_eps, (BATCH, LATENT_DIM), jnp.float32)
    params = init_params(k_par)

    preds_s, mean, log_var = jax.block_until_ready(
        vae_forward(obs_s, eps, params))

    assert preds_s.shape == (PRED_LEN, BATCH, POSE_DIM)
    assert mean.shape == (BATCH, LATENT_DIM)
    assert log_var.shape == (BATCH, LATENT_DIM)

    # Sanity check vs pure-JAX reference of the same math (catches weight
    # packing / prescaling / decoder-fusion regressions).
    r_preds, r_mean, r_logvar = vae_reference(obs_s, eps, params)
    assert jnp.allclose(preds_s, r_preds, rtol=1e-3, atol=1e-3)
    assert jnp.allclose(mean, r_mean, rtol=1e-3, atol=1e-3)
    assert jnp.allclose(log_var, r_logvar, rtol=1e-3, atol=1e-3)

    print("KERNEL_OK")
</pallas_src>

<mosaic_0001>
module attributes {stable_mosaic.version = 11 : i64} {
  func.func @_vae_kernel(%arg0: memref<8x2x39xf32, #tpu.memory_space<vmem>>, %arg1: memref<2x16xf32, #tpu.memory_space<vmem>>, %arg2: memref<39x128xf32, #tpu.memory_space<vmem>>, %arg3: memref<32x128xf32, #tpu.memory_space<vmem>>, %arg4: memref<1x128xf32, #tpu.memory_space<vmem>>, %arg5: memref<32x128xf32, #tpu.memory_space<vmem>>, %arg6: memref<32x128xf32, #tpu.memory_space<vmem>>, %arg7: memref<1x128xf32, #tpu.memory_space<vmem>>, %arg8: memref<32x32xf32, #tpu.memory_space<vmem>>, %arg9: memref<1x32xf32, #tpu.memory_space<vmem>>, %arg10: memref<16x32xf32, #tpu.memory_space<vmem>>, %arg11: memref<1x32xf32, #tpu.memory_space<vmem>>, %arg12: memref<39x128xf32, #tpu.memory_space<vmem>>, %arg13: memref<32x128xf32, #tpu.memory_space<vmem>>, %arg14: memref<1x128xf32, #tpu.memory_space<vmem>>, %arg15: memref<32x128xf32, #tpu.memory_space<vmem>>, %arg16: memref<1x128xf32, #tpu.memory_space<vmem>>, %arg17: memref<32x39xf32, #tpu.memory_space<vmem>>, %arg18: memref<1x39xf32, #tpu.memory_space<vmem>>, %arg19: memref<28x39xf32, #tpu.memory_space<vmem>>, %arg20: memref<2x32xf32, #tpu.memory_space<vmem>>) attributes {dimension_semantics = [], scalar_prefetch = 0 : i64, scratch_operands = 0 : i64, tpu.core_type = #tpu.core_type<tc>} {
    %c0 = arith.constant 0 : index
    %c0_0 = arith.constant 0 : index
    %0 = vector.load %arg3[%c0, %c0_0] : memref<32x128xf32, #tpu.memory_space<vmem>>, vector<32x128xf32>
    %c0_1 = arith.constant 0 : index
    %c0_2 = arith.constant 0 : index
    %1 = vector.load %arg5[%c0_1, %c0_2] : memref<32x128xf32, #tpu.memory_space<vmem>>, vector<32x128xf32>
    %c0_3 = arith.constant 0 : index
    %c0_4 = arith.constant 0 : index
    %2 = vector.load %arg6[%c0_3, %c0_4] : memref<32x128xf32, #tpu.memory_space<vmem>>, vector<32x128xf32>
    %c0_5 = arith.constant 0 : index
    %c0_6 = arith.constant 0 : index
    %3 = vector.load %arg15[%c0_5, %c0_6] : memref<32x128xf32, #tpu.memory_space<vmem>>, vector<32x128xf32>
    %c0_7 = arith.constant 0 : index
    %c0_8 = arith.constant 0 : index
    %4 = vector.load %arg17[%c0_7, %c0_8] : memref<32x39xf32, #tpu.memory_space<vmem>>, vector<32x39xf32>
    %c0_9 = arith.constant 0 : index
    %c0_10 = arith.constant 0 : index
    %5 = vector.load %arg7[%c0_9, %c0_10] : memref<1x128xf32, #tpu.memory_space<vmem>>, vector<1x128xf32>
    %6 = vector.shape_cast %5 : vector<1x128xf32> to vector<1x128xf32>
    %7 = vector.broadcast %6 : vector<1x128xf32> to vector<2x128xf32>
    %c0_11 = arith.constant 0 : index
    %c0_12 = arith.constant 0 : index
    %8 = vector.load %arg16[%c0_11, %c0_12] : memref<1x128xf32, #tpu.memory_space<vmem>>, vector<1x128xf32>
    %9 = vector.shape_cast %8 : vector<1x128xf32> to vector<1x128xf32>
    %10 = vector.broadcast %9 : vector<1x128xf32> to vector<2x128xf32>
    %c0_13 = arith.constant 0 : index
    %c0_14 = arith.constant 0 : index
    %c0_15 = arith.constant 0 : index
    %11 = vector.load %arg0[%c0_13, %c0_14, %c0_15] : memref<8x2x39xf32, #tpu.memory_space<vmem>>, vector<8x2x39xf32>
    %12 = vector.shape_cast %11 : vector<8x2x39xf32> to vector<16x39xf32>
    %c0_16 = arith.constant 0 : index
    %c0_17 = arith.constant 0 : index
    %13 = vector.load %arg2[%c0_16, %c0_17] : memref<39x128xf32, #tpu.memory_space<vmem>>, vector<39x128xf32>
    %cst = arith.constant dense<0.000000e+00> : vector<16x128xf32>
    %14 = tpu.matmul %12, %13, %cst {dimension_numbers = #tpu.dot_dimension_numbers<[1], [0], [0], [1], [0, 0, 1, 1], [], []>} : vector<16x39xf32>, vector<39x128xf32>, vector<16x128xf32> -> vector<16x128xf32>
    %c0_18 = arith.constant 0 : index
    %c0_19 = arith.constant 0 : index
    %15 = vector.load %arg4[%c0_18, %c0_19] : memref<1x128xf32, #tpu.memory_space<vmem>>, vector<1x128xf32>
    %16 = vector.shape_cast %15 : vector<1x128xf32> to vector<1x128xf32>
    %17 = vector.broadcast %16 : vector<1x128xf32> to vector<16x128xf32>
    %18 = arith.addf %14, %17 : vector<16x128xf32>
    %19 = vector.shape_cast %18 : vector<16x128xf32> to vector<8x2x128xf32>
    %20 = vector.extract_strided_slice %19 {offsets = [0, 0, 0], sizes = [1, 2, 128], strides = [1, 1, 1]} : vector<8x2x128xf32> to vector<1x2x128xf32>
    %21 = vector.shape_cast %20 : vector<1x2x128xf32> to vector<2x128xf32>
    %22 = math.tanh %21 : vector<2x128xf32>
    %23 = vector.extract_strided_slice %22 {offsets = [0, 0], sizes = [2, 32], strides = [1, 1]} : vector<2x128xf32> to vector<2x32xf32>
    %cst_20 = arith.constant 1.000000e+00 : f32
    %24 = vector.broadcast %cst_20 : f32 to vector<2x32xf32>
    %25 = arith.addf %23, %24 : vector<2x32xf32>
    %cst_21 = arith.constant 5.000000e-01 : f32
    %26 = vector.broadcast %cst_21 : f32 to vector<2x32xf32>
    %27 = arith.mulf %26, %25 : vector<2x32xf32>
    %28 = vector.extract_strided_slice %22 {offsets = [0, 64], sizes = [2, 32], strides = [1, 1]} : vector<2x128xf32> to vector<2x32xf32>
    %29 = vector.extract_strided_slice %22 {offsets = [0, 96], sizes = [2, 32], strides = [1, 1]} : vector<2x128xf32> to vector<2x32xf32>
    %cst_22 = arith.constant 1.000000e+00 : f32
    %30 = vector.broadcast %cst_22 : f32 to vector<2x32xf32>
    %31 = arith.addf %29, %30 : vector<2x32xf32>
    %cst_23 = arith.constant 5.000000e-01 : f32
    %32 = vector.broadcast %cst_23 : f32 to vector<2x32xf32>
    %33 = arith.mulf %32, %31 : vector<2x32xf32>
    %34 = arith.mulf %27, %28 : vector<2x32xf32>
    %35 = math.tanh %34 : vector<2x32xf32>
    %36 = arith.mulf %33, %35 : vector<2x32xf32>
    %cst_24 = arith.constant dense<0.000000e+00> : vector<2x128xf32>
    %37 = tpu.matmul %36, %1, %cst_24 {dimension_numbers = #tpu.dot_dimension_numbers<[1], [0], [0], [1], [0, 0, 1, 1], [], []>} : vector<2x32xf32>, vector<32x128xf32>, vector<2x128xf32> -> vector<2x128xf32>
    %38 = arith.addf %37, %7 : vector<2x128xf32>
    %39 = math.tanh %38 : vector<2x128xf32>
    %40 = vector.extract_strided_slice %39 {offsets = [0, 0], sizes = [2, 32], strides = [1, 1]} : vector<2x128xf32> to vector<2x32xf32>
    %cst_25 = arith.constant 1.000000e+00 : f32
    %41 = vector.broadcast %cst_25 : f32 to vector<2x32xf32>
    %42 = arith.addf %40, %41 : vector<2x32xf32>
    %cst_26 = arith.constant 5.000000e-01 : f32
    %43 = vector.broadcast %cst_26 : f32 to vector<2x32xf32>
    %44 = arith.mulf %43, %42 : vector<2x32xf32>
    %45 = vector.extract_strided_slice %39 {offsets = [0, 64], sizes = [2, 32], strides = [1, 1]} : vector<2x128xf32> to vector<2x32xf32>
    %46 = vector.extract_strided_slice %39 {offsets = [0, 96], sizes = [2, 32], strides = [1, 1]} : vector<2x128xf32> to vector<2x32xf32>
    %cst_27 = arith.constant 1.000000e+00 : f32
    %47 = vector.broadcast %cst_27 : f32 to vector<2x32xf32>
    %48 = arith.addf %46, %47 : vector<2x32xf32>
    %cst_28 = arith.constant 5.000000e-01 : f32
    %49 = vector.broadcast %cst_28 : f32 to vector<2x32xf32>
    %50 = arith.mulf %49, %48 : vector<2x32xf32>
    %51 = arith.mulf %44, %45 : vector<2x32xf32>
    %52 = math.tanh %51 : vector<2x32xf32>
    %53 = arith.mulf %50, %52 : vector<2x32xf32>
    %54 = vector.extract_strided_slice %19 {offsets = [1, 0, 0], sizes = [1, 2, 128], strides = [1, 1, 1]} : vector<8x2x128xf32> to vector<1x2x128xf32>
    %55 = vector.shape_cast %54 : vector<1x2x128xf32> to vector<2x128xf32>
    %cst_29 = arith.constant dense<0.000000e+00> : vector<2x128xf32>
    %56 = tpu.matmul %36, %0, %cst_29 {dimension_numbers = #tpu.dot_dimension_numbers<[1], [0], [0], [1], [0, 0, 1, 1], [], []>} : vector<2x32xf32>, vector<32x128xf32>, vector<2x128xf32> -> vector<2x128xf32>
    %57 = arith.addf %55, %56 : vector<2x128xf32>
    %58 = math.tanh %57 : vector<2x128xf32>
    %59 = vector.extract_strided_slice %58 {offsets = [0, 0], sizes = [2, 32], strides = [1, 1]} : vector<2x128xf32> to vector<2x32xf32>
    %cst_30 = arith.constant 1.000000e+00 : f32
    %60 = vector.broadcast %cst_30 : f32 to vector<2x32xf32>
    %61 = arith.addf %59, %60 : vector<2x32xf32>
    %cst_31 = arith.constant 5.000000e-01 : f32
    %62 = vector.broadcast %cst_31 : f32 to vector<2x32xf32>
    %63 = arith.mulf %62, %61 : vector<2x32xf32>
    %64 = vector.extract_strided_slice %58 {offsets = [0, 32], sizes = [2, 32], strides = [1, 1]} : vector<2x128xf32> to vector<2x32xf32>
    %cst_32 = arith.constant 1.000000e+00 : f32
    %65 = vector.broadcast %cst_32 : f32 to vector<2x32xf32>
    %66 = arith.addf %64, %65 : vector<2x32xf32>
    %cst_33 = arith.constant 5.000000e-01 : f32
    %67 = vector.broadcast %cst_33 : f32 to vector<2x32xf32>
    %68 = arith.mulf %67, %66 : vector<2x32xf32>
    %69 = vector.extract_strided_slice %58 {offsets = [0, 64], sizes = [2, 32], strides = [1, 1]} : vector<2x128xf32> to vector<2x32xf32>
    %70 = vector.extract_strided_slice %58 {offsets = [0, 96], sizes = [2, 32], strides = [1, 1]} : vector<2x128xf32> to vector<2x32xf32>
    %cst_34 = arith.constant 1.000000e+00 : f32
    %71 = vector.broadcast %cst_34 : f32 to vector<2x32xf32>
    %72 = arith.addf %70, %71 : vector<2x32xf32>
    %cst_35 = arith.constant 5.000000e-01 : f32
    %73 = vector.broadcast %cst_35 : f32 to vector<2x32xf32>
    %74 = arith.mulf %73, %72 : vector<2x32xf32>
    %75 = arith.mulf %68, %34 : vector<2x32xf32>
    %76 = arith.mulf %63, %69 : vector<2x32xf32>
    %77 = arith.addf %75, %76 : vector<2x32xf32>
    %78 = math.tanh %77 : vector<2x32xf32>
    %79 = arith.mulf %74, %78 : vector<2x32xf32>
    %cst_36 = arith.constant dense<0.000000e+00> : vector<2x128xf32>
    %80 = tpu.matmul %79, %1, %cst_36 {dimension_numbers = #tpu.dot_dimension_numbers<[1], [0], [0], [1], [0, 0, 1, 1], [], []>} : vector<2x32xf32>, vector<32x128xf32>, vector<2x128xf32> -> vector<2x128xf32>
    %cst_37 = arith.constant dense<0.000000e+00> : vector<2x128xf32>
    %81 = tpu.matmul %53, %2, %cst_37 {dimension_numbers = #tpu.dot_dimension_numbers<[1], [0], [0], [1], [0, 0, 1, 1], [], []>} : vector<2x32xf32>, vector<32x128xf32>, vector<2x128xf32> -> vector<2x128xf32>
    %82 = arith.addf %80, %81 : vector<2x128xf32>
    %83 = arith.addf %82, %7 : vector<2x128xf32>
    %84 = math.tanh %83 : vector<2x128xf32>
    %85 = vector.extract_strided_slice %84 {offsets = [0, 0], sizes = [2, 32], strides = [1, 1]} : vector<2x128xf32> to vector<2x32xf32>
    %cst_38 = arith.constant 1.000000e+00 : f32
    %86 = vector.broadcast %cst_38 : f32 to vector<2x32xf32>
    %87 = arith.addf %85, %86 : vector<2x32xf32>
    %cst_39 = arith.constant 5.000000e-01 : f32
    %88 = vector.broadcast %cst_39 : f32 to vector<2x32xf32>
    %89 = arith.mulf %88, %87 : vector<2x32xf32>
    %90 = vector.extract_strided_slice %84 {offsets = [0, 32], sizes = [2, 32], strides = [1, 1]} : vector<2x128xf32> to vector<2x32xf32>
    %cst_40 = arith.constant 1.000000e+00 : f32
    %91 = vector.broadcast %cst_40 : f32 to vector<2x32xf32>
    %92 = arith.addf %90, %91 : vector<2x32xf32>
    %cst_41 = arith.constant 5.000000e-01 : f32
    %93 = vector.broadcast %cst_41 : f32 to vector<2x32xf32>
    %94 = arith.mulf %93, %92 : vector<2x32xf32>
    %95 = vector.extract_strided_slice %84 {offsets = [0, 64], sizes = [2, 32], strides = [1, 1]} : vector<2x128xf32> to vector<2x32xf32>
    %96 = vector.extract_strided_slice %84 {offsets = [0, 96], sizes = [2, 32], strides = [1, 1]} : vector<2x128xf32> to vector<2x32xf32>
    %cst_42 = arith.constant 1.000000e+00 : f32
    %97 = vector.broadcast %cst_42 : f32 to vector<2x32xf32>
    %98 = arith.addf %96, %97 : vector<2x32xf32>
    %cst_43 = arith.constant 5.000000e-01 : f32
    %99 = vector.broadcast %cst_43 : f32 to vector<2x32xf32>
    %100 = arith.mulf %99, %98 : vector<2x32xf32>
    %101 = arith.mulf %94, %51 : vector<2x32xf32>
    %102 = arith.mulf %89, %95 : vector<2x32xf32>
    %103 = arith.addf %101, %102 : vector<2x32xf32>
    %104 = math.tanh %103 : vector<2x32xf32>
    %105 = arith.mulf %100, %104 : vector<2x32xf32>
    %106 = vector.extract_strided_slice %19 {offsets = [2, 0, 0], sizes = [1, 2, 128], strides = [1, 1, 1]} : vector<8x2x128xf32> to vector<1x2x128xf32>
    %107 = vector.shape_cast %106 : vector<1x2x128xf32> to vector<2x128xf32>
    %cst_44 = arith.constant dense<0.000000e+00> : vector<2x128xf32>
    %108 = tpu.matmul %79, %0, %cst_44 {dimension_numbers = #tpu.dot_dimension_numbers<[1], [0], [0], [1], [0, 0, 1, 1], [], []>} : vector<2x32xf32>, vector<32x128xf32>, vector<2x128xf32> -> vector<2x128xf32>
    %109 = arith.addf %107, %108 : vector<2x128xf32>
    %110 = math.tanh %109 : vector<2x128xf32>
    %111 = vector.extract_strided_slice %110 {offsets = [0, 0], sizes = [2, 32], strides = [1, 1]} : vector<2x128xf32> to vector<2x32xf32>
    %cst_45 = arith.constant 1.000000e+00 : f32
    %112 = vector.broadcast %cst_45 : f32 to vector<2x32xf32>
    %113 = arith.addf %111, %112 : vector<2x32xf32>
    %cst_46 = arith.constant 5.000000e-01 : f32
    %114 = vector.broadcast %cst_46 : f32 to vector<2x32xf32>
    %115 = arith.mulf %114, %113 : vector<2x32xf32>
    %116 = vector.extract_strided_slice %110 {offsets = [0, 32], sizes = [2, 32], strides = [1, 1]} : vector<2x128xf32> to vector<2x32xf32>
    %cst_47 = arith.constant 1.000000e+00 : f32
    %117 = vector.broadcast %cst_47 : f32 to vector<2x32xf32>
    %118 = arith.addf %116, %117 : vector<2x32xf32>
    %cst_48 = arith.constant 5.000000e-01 : f32
    %119 = vector.broadcast %cst_48 : f32 to vector<2x32xf32>
    %120 = arith.mulf %119, %118 : vector<2x32xf32>
    %121 = vector.extract_strided_slice %110 {offsets = [0, 64], sizes = [2, 32], strides = [1, 1]} : vector<2x128xf32> to vector<2x32xf32>
    %122 = vector.extract_strided_slice %110 {offsets = [0, 96], sizes = [2, 32], strides = [1, 1]} : vector<2x128xf32> to vector<2x32xf32>
    %cst_49 = arith.constant 1.000000e+00 : f32
    %123 = vector.broadcast %cst_49 : f32 to vector<2x32xf32>
    %124 = arith.addf %122, %123 : vector<2x32xf32>
    %cst_50 = arith.constant 5.000000e-01 : f32
    %125 = vector.broadcast %cst_50 : f32 to vector<2x32xf32>
    %126 = arith.mulf %125, %124 : vector<2x32xf32>
    %127 = arith.mulf %120, %77 : vector<2x32xf32>
    %128 = arith.mulf %115, %121 : vector<2x32xf32>
    %129 = arith.addf %127, %128 : vector<2x32xf32>
    %130 = math.tanh %129 : vector<2x32xf32>
    %131 = arith.mulf %126, %130 : vector<2x32xf32>
    %cst_51 = arith.constant dense<0.000000e+00> : vector<2x128xf32>
    %132 = tpu.matmul %131, %1, %cst_51 {dimension_numbers = #tpu.dot_dimension_numbers<[1], [0], [0], [1], [0, 0, 1, 1], [], []>} : vector<2x32xf32>, vector<32x128xf32>, vector<2x128xf32> -> vector<2x128xf32>
    %cst_52 = arith.constant dense<0.000000e+00> : vector<2x128xf32>
    %133 = tpu.matmul %105, %2, %cst_52 {dimension_numbers = #tpu.dot_dimension_numbers<[1], [0], [0], [1], [0, 0, 1, 1], [], []>} : vector<2x32xf32>, vector<32x128xf32>, vector<2x128xf32> -> vector<2x128xf32>
    %134 = arith.addf %132, %133 : vector<2x128xf32>
    %135 = arith.addf %134, %7 : vector<2x128xf32>
    %136 = math.tanh %135 : vector<2x128xf32>
    %137 = vector.extract_strided_slice %136 {offsets = [0, 0], sizes = [2, 32], strides = [1, 1]} : vector<2x128xf32> to vector<2x32xf32>
    %cst_53 = arith.constant 1.000000e+00 : f32
    %138 = vector.broadcast %cst_53 : f32 to vector<2x32xf32>
    %139 = arith.addf %137, %138 : vector<2x32xf32>
    %cst_54 = arith.constant 5.000000e-01 : f32
    %140 = vector.broadcast %cst_54 : f32 to vector<2x32xf32>
    %141 = arith.mulf %140, %139 : vector<2x32xf32>
    %142 = vector.extract_strided_slice %136 {offsets = [0, 32], sizes = [2, 32], strides = [1, 1]} : vector<2x128xf32> to vector<2x32xf32>
    %cst_55 = arith.constant 1.000000e+00 : f32
    %143 = vector.broadcast %cst_55 : f32 to vector<2x32xf32>
    %144 = arith.addf %142, %143 : vector<2x32xf32>
    %cst_56 = arith.constant 5.000000e-01 : f32
    %145 = vector.broadcast %cst_56 : f32 to vector<2x32xf32>
    %146 = arith.mulf %145, %144 : vector<2x32xf32>
    %147 = vector.extract_strided_slice %136 {offsets = [0, 64], sizes = [2, 32], strides = [1, 1]} : vector<2x128xf32> to vector<2x32xf32>
    %148 = vector.extract_strided_slice %136 {offsets = [0, 96], sizes = [2, 32], strides = [1, 1]} : vector<2x128xf32> to vector<2x32xf32>
    %cst_57 = arith.constant 1.000000e+00 : f32
    %149 = vector.broadcast %cst_57 : f32 to vector<2x32xf32>
    %150 = arith.addf %148, %149 : vector<2x32xf32>
    %cst_58 = arith.constant 5.000000e-01 : f32
    %151 = vector.broadcast %cst_58 : f32 to vector<2x32xf32>
    %152 = arith.mulf %151, %150 : vector<2x32xf32>
    %153 = arith.mulf %146, %103 : vector<2x32xf32>
    %154 = arith.mulf %141, %147 : vector<2x32xf32>
    %155 = arith.addf %153, %154 : vector<2x32xf32>
    %156 = math.tanh %155 : vector<2x32xf32>
    %157 = arith.mulf %152, %156 : vector<2x32xf32>
    %158 = vector.extract_strided_slice %19 {offsets = [3, 0, 0], sizes = [1, 2, 128], strides = [1, 1, 1]} : vector<8x2x128xf32> to vector<1x2x128xf32>
    %159 = vector.shape_cast %158 : vector<1x2x128xf32> to vector<2x128xf32>
    %cst_59 = arith.constant dense<0.000000e+00> : vector<2x128xf32>
    %160 = tpu.matmul %131, %0, %cst_59 {dimension_numbers = #tpu.dot_dimension_numbers<[1], [0], [0], [1], [0, 0, 1, 1], [], []>} : vector<2x32xf32>, vector<32x128xf32>, vector<2x128xf32> -> vector<2x128xf32>
    %161 = arith.addf %159, %160 : vector<2x128xf32>
    %162 = math.tanh %161 : vector<2x128xf32>
    %163 = vector.extract_strided_slice %162 {offsets = [0, 0], sizes = [2, 32], strides = [1, 1]} : vector<2x128xf32> to vector<2x32xf32>
    %cst_60 = arith.constant 1.000000e+00 : f32
    %164 = vector.broadcast %cst_60 : f32 to vector<2x32xf32>
    %165 = arith.addf %163, %164 : vector<2x32xf32>
    %cst_61 = arith.constant 5.000000e-01 : f32
    %166 = vector.broadcast %cst_61 : f32 to vector<2x32xf32>
    %167 = arith.mulf %166, %165 : vector<2x32xf32>
    %168 = vector.extract_strided_slice %162 {offsets = [0, 32], sizes = [2, 32], strides = [1, 1]} : vector<2x128xf32> to vector<2x32xf32>
    %cst_62 = arith.constant 1.000000e+00 : f32
    %169 = vector.broadcast %cst_62 : f32 to vector<2x32xf32>
    %170 = arith.addf %168, %169 : vector<2x32xf32>
    %cst_63 = arith.constant 5.000000e-01 : f32
    %171 = vector.broadcast %cst_63 : f32 to vector<2x32xf32>
    %172 = arith.mulf %171, %170 : vector<2x32xf32>
    %173 = vector.extract_strided_slice %162 {offsets = [0, 64], sizes = [2, 32], strides = [1, 1]} : vector<2x128xf32> to vector<2x32xf32>
    %174 = vector.extract_strided_slice %162 {offsets = [0, 96], sizes = [2, 32], strides = [1, 1]} : vector<2x128xf32> to vector<2x32xf32>
    %cst_64 = arith.constant 1.000000e+00 : f32
    %175 = vector.broadcast %cst_64 : f32 to vector<2x32xf32>
    %176 = arith.addf %174, %175 : vector<2x32xf32>
    %cst_65 = arith.constant 5.000000e-01 : f32
    %177 = vector.broadcast %cst_65 : f32 to vector<2x32xf32>
    %178 = arith.mulf %177, %176 : vector<2x32xf32>
    %179 = arith.mulf %172, %129 : vector<2x32xf32>
    %180 = arith.mulf %167, %173 : vector<2x32xf32>
    %181 = arith.addf %179, %180 : vector<2x32xf32>
    %182 = math.tanh %181 : vector<2x32xf32>
    %183 = arith.mulf %178, %182 : vector<2x32xf32>
    %cst_66 = arith.constant dense<0.000000e+00> : vector<2x128xf32>
    %184 = tpu.matmul %183, %1, %cst_66 {dimension_numbers = #tpu.dot_dimension_numbers<[1], [0], [0], [1], [0, 0, 1, 1], [], []>} : vector<2x32xf32>, vector<32x128xf32>, vector<2x128xf32> -> vector<2x128xf32>
    %cst_67 = arith.constant dense<0.000000e+00> : vector<2x128xf32>
    %185 = tpu.matmul %157, %2, %cst_67 {dimension_numbers = #tpu.dot_dimension_numbers<[1], [0], [0], [1], [0, 0, 1, 1], [], []>} : vector<2x32xf32>, vector<32x128xf32>, vector<2x128xf32> -> vector<2x128xf32>
    %186 = arith.addf %184, %185 : vector<2x128xf32>
    %187 = arith.addf %186, %7 : vector<2x128xf32>
    %188 = math.tanh %187 : vector<2x128xf32>
    %189 = vector.extract_strided_slice %188 {offsets = [0, 0], sizes = [2, 32], strides = [1, 1]} : vector<2x128xf32> to vector<2x32xf32>
    %cst_68 = arith.constant 1.000000e+00 : f32
    %190 = vector.broadcast %cst_68 : f32 to vector<2x32xf32>
    %191 = arith.addf %189, %190 : vector<2x32xf32>
    %cst_69 = arith.constant 5.000000e-01 : f32
    %192 = vector.broadcast %cst_69 : f32 to vector<2x32xf32>
    %193 = arith.mulf %192, %191 : vector<2x32xf32>
    %194 = vector.extract_strided_slice %188 {offsets = [0, 32], sizes = [2, 32], strides = [1, 1]} : vector<2x128xf32> to vector<2x32xf32>
    %cst_70 = arith.constant 1.000000e+00 : f32
    %195 = vector.broadcast %cst_70 : f32 to vector<2x32xf32>
    %196 = arith.addf %194, %195 : vector<2x32xf32>
    %cst_71 = arith.constant 5.000000e-01 : f32
    %197 = vector.broadcast %cst_71 : f32 to vector<2x32xf32>
    %198 = arith.mulf %197, %196 : vector<2x32xf32>
    %199 = vector.extract_strided_slice %188 {offsets = [0, 64], sizes = [2, 32], strides = [1, 1]} : vector<2x128xf32> to vector<2x32xf32>
    %200 = vector.extract_strided_slice %188 {offsets = [0, 96], sizes = [2, 32], strides = [1, 1]} : vector<2x128xf32> to vector<2x32xf32>
    %cst_72 = arith.constant 1.000000e+00 : f32
    %201 = vector.broadcast %cst_72 : f32 to vector<2x32xf32>
    %202 = arith.addf %200, %201 : vector<2x32xf32>
    %cst_73 = arith.constant 5.000000e-01 : f32
    %203 = vector.broadcast %cst_73 : f32 to vector<2x32xf32>
    %204 = arith.mulf %203, %202 : vector<2x32xf32>
    %205 = arith.mulf %198, %155 : vector<2x32xf32>
    %206 = arith.mulf %193, %199 : vector<2x32xf32>
    %207 = arith.addf %205, %206 : vector<2x32xf32>
    %208 = math.tanh %207 : vector<2x32xf32>
    %209 = arith.mulf %204, %208 : vector<2x32xf32>
    %210 = vector.extract_strided_slice %19 {offsets = [4, 0, 0], sizes = [1, 2, 128], strides = [1, 1, 1]} : vector<8x2x128xf32> to vector<1x2x128xf32>
    %211 = vector.shape_cast %210 : vector<1x2x128xf32> to vector<2x128xf32>
    %cst_74 = arith.constant dense<0.000000e+00> : vector<2x128xf32>
    %212 = tpu.matmul %183, %0, %cst_74 {dimension_numbers = #tpu.dot_dimension_numbers<[1], [0], [0], [1], [0, 0, 1, 1], [], []>} : vector<2x32xf32>, vector<32x128xf32>, vector<2x128xf32> -> vector<2x128xf32>
    %213 = arith.addf %211, %212 : vector<2x128xf32>
    %214 = math.tanh %213 : vector<2x128xf32>
    %215 = vector.extract_strided_slice %214 {offsets = [0, 0], sizes = [2, 32], strides = [1, 1]} : vector<2x128xf32> to vector<2x32xf32>
    %cst_75 = arith.constant 1.000000e+00 : f32
    %216 = vector.broadcast %cst_75 : f32 to vector<2x32xf32>
    %217 = arith.addf %215, %216 : vector<2x32xf32>
    %cst_76 = arith.constant 5.000000e-01 : f32
    %218 = vector.broadcast %cst_76 : f32 to vector<2x32xf32>
    %219 = arith.mulf %218, %217 : vector<2x32xf32>
    %220 = vector.extract_strided_slice %214 {offsets = [0, 32], sizes = [2, 32], strides = [1, 1]} : vector<2x128xf32> to vector<2x32xf32>
    %cst_77 = arith.constant 1.000000e+00 : f32
    %221 = vector.broadcast %cst_77 : f32 to vector<2x32xf32>
    %222 = arith.addf %220, %221 : vector<2x32xf32>
    %cst_78 = arith.constant 5.000000e-01 : f32
    %223 = vector.broadcast %cst_78 : f32 to vector<2x32xf32>
    %224 = arith.mulf %223, %222 : vector<2x32xf32>
    %225 = vector.extract_strided_slice %214 {offsets = [0, 64], sizes = [2, 32], strides = [1, 1]} : vector<2x128xf32> to vector<2x32xf32>
    %226 = vector.extract_strided_slice %214 {offsets = [0, 96], sizes = [2, 32], strides = [1, 1]} : vector<2x128xf32> to vector<2x32xf32>
    %cst_79 = arith.constant 1.000000e+00 : f32
    %227 = vector.broadcast %cst_79 : f32 to vector<2x32xf32>
    %228 = arith.addf %226, %227 : vector<2x32xf32>
    %cst_80 = arith.constant 5.000000e-01 : f32
    %229 = vector.broadcast %cst_80 : f32 to vector<2x32xf32>
    %230 = arith.mulf %229, %228 : vector<2x32xf32>
    %231 = arith.mulf %224, %181 : vector<2x32xf32>
    %232 = arith.mulf %219, %225 : vector<2x32xf32>
    %233 = arith.addf %231, %232 : vector<2x32xf32>
    %234 = math.tanh %233 : vector<2x32xf32>
    %235 = arith.mulf %230, %234 : vector<2x32xf32>
    %cst_81 = arith.constant dense<0.000000e+00> : vector<2x128xf32>
    %236 = tpu.matmul %235, %1, %cst_81 {dimension_numbers = #tpu.dot_dimension_numbers<[1], [0], [0], [1], [0, 0, 1, 1], [], []>} : vector<2x32xf32>, vector<32x128xf32>, vector<2x128xf32> -> vector<2x128xf32>
    %cst_82 = arith.constant dense<0.000000e+00> : vector<2x128xf32>
    %237 = tpu.matmul %209, %2, %cst_82 {dimension_numbers = #tpu.dot_dimension_numbers<[1], [0], [0], [1], [0, 0, 1, 1], [], []>} : vector<2x32xf32>, vector<32x128xf32>, vector<2x128xf32> -> vector<2x128xf32>
    %238 = arith.addf %236, %237 : vector<2x128xf32>
    %239 = arith.addf %238, %7 : vector<2x128xf32>
    %240 = math.tanh %239 : vector<2x128xf32>
    %241 = vector.extract_strided_slice %240 {offsets = [0, 0], sizes = [2, 32], strides = [1, 1]} : vector<2x128xf32> to vector<2x32xf32>
    %cst_83 = arith.constant 1.000000e+00 : f32
    %242 = vector.broadcast %cst_83 : f32 to vector<2x32xf32>
    %243 = arith.addf %241, %242 : vector<2x32xf32>
    %cst_84 = arith.constant 5.000000e-01 : f32
    %244 = vector.broadcast %cst_84 : f32 to vector<2x32xf32>
    %245 = arith.mulf %244, %243 : vector<2x32xf32>
    %246 = vector.extract_strided_slice %240 {offsets = [0, 32], sizes = [2, 32], strides = [1, 1]} : vector<2x128xf32> to vector<2x32xf32>
    %cst_85 = arith.constant 1.000000e+00 : f32
    %247 = vector.broadcast %cst_85 : f32 to vector<2x32xf32>
    %248 = arith.addf %246, %247 : vector<2x32xf32>
    %cst_86 = arith.constant 5.000000e-01 : f32
    %249 = vector.broadcast %cst_86 : f32 to vector<2x32xf32>
    %250 = arith.mulf %249, %248 : vector<2x32xf32>
    %251 = vector.extract_strided_slice %240 {offsets = [0, 64], sizes = [2, 32], strides = [1, 1]} : vector<2x128xf32> to vector<2x32xf32>
    %252 = vector.extract_strided_slice %240 {offsets = [0, 96], sizes = [2, 32], strides = [1, 1]} : vector<2x128xf32> to vector<2x32xf32>
    %cst_87 = arith.constant 1.000000e+00 : f32
    %253 = vector.broadcast %cst_87 : f32 to vector<2x32xf32>
    %254 = arith.addf %252, %253 : vector<2x32xf32>
    %cst_88 = arith.constant 5.000000e-01 : f32
    %255 = vector.broadcast %cst_88 : f32 to vector<2x32xf32>
    %256 = arith.mulf %255, %254 : vector<2x32xf32>
    %257 = arith.mulf %250, %207 : vector<2x32xf32>
    %258 = arith.mulf %245, %251 : vector<2x32xf32>
    %259 = arith.addf %257, %258 : vector<2x32xf32>
    %260 = math.tanh %259 : vector<2x32xf32>
    %261 = arith.mulf %256, %260 : vector<2x32xf32>
    %262 = vector.extract_strided_slice %19 {offsets = [5, 0, 0], sizes = [1, 2, 128], strides = [1, 1, 1]} : vector<8x2x128xf32> to vector<1x2x128xf32>
    %263 = vector.shape_cast %262 : vector<1x2x128xf32> to vector<2x128xf32>
    %cst_89 = arith.constant dense<0.000000e+00> : vector<2x128xf32>
    %264 = tpu.matmul %235, %0, %cst_89 {dimension_numbers = #tpu.dot_dimension_numbers<[1], [0], [0], [1], [0, 0, 1, 1], [], []>} : vector<2x32xf32>, vector<32x128xf32>, vector<2x128xf32> -> vector<2x128xf32>
    %265 = arith.addf %263, %264 : vector<2x128xf32>
    %266 = math.tanh %265 : vector<2x128xf32>
    %267 = vector.extract_strided_slice %266 {offsets = [0, 0], sizes = [2, 32], strides = [1, 1]} : vector<2x128xf32> to vector<2x32xf32>
    %cst_90 = arith.constant 1.000000e+00 : f32
    %268 = vector.broadcast %cst_90 : f32 to vector<2x32xf32>
    %269 = arith.addf %267, %268 : vector<2x32xf32>
    %cst_91 = arith.constant 5.000000e-01 : f32
    %270 = vector.broadcast %cst_91 : f32 to vector<2x32xf32>
    %271 = arith.mulf %270, %269 : vector<2x32xf32>
    %272 = vector.extract_strided_slice %266 {offsets = [0, 32], sizes = [2, 32], strides = [1, 1]} : vector<2x128xf32> to vector<2x32xf32>
    %cst_92 = arith.constant 1.000000e+00 : f32
    %273 = vector.broadcast %cst_92 : f32 to vector<2x32xf32>
    %274 = arith.addf %272, %273 : vector<2x32xf32>
    %cst_93 = arith.constant 5.000000e-01 : f32
    %275 = vector.broadcast %cst_93 : f32 to vector<2x32xf32>
    %276 = arith.mulf %275, %274 : vector<2x32xf32>
    %277 = vector.extract_strided_slice %266 {offsets = [0, 64], sizes = [2, 32], strides = [1, 1]} : vector<2x128xf32> to vector<2x32xf32>
    %278 = vector.extract_strided_slice %266 {offsets = [0, 96], sizes = [2, 32], strides = [1, 1]} : vector<2x128xf32> to vector<2x32xf32>
    %cst_94 = arith.constant 1.000000e+00 : f32
    %279 = vector.broadcast %cst_94 : f32 to vector<2x32xf32>
    %280 = arith.addf %278, %279 : vector<2x32xf32>
    %cst_95 = arith.constant 5.000000e-01 : f32
    %281 = vector.broadcast %cst_95 : f32 to vector<2x32xf32>
    %282 = arith.mulf %281, %280 : vector<2x32xf32>
    %283 = arith.mulf %276, %233 : vector<2x32xf32>
    %284 = arith.mulf %271, %277 : vector<2x32xf32>
    %285 = arith.addf %283, %284 : vector<2x32xf32>
    %286 = math.tanh %285 : vector<2x32xf32>
    %287 = arith.mulf %282, %286 : vector<2x32xf32>
    %cst_96 = arith.constant dense<0.000000e+00> : vector<2x128xf32>
    %288 = tpu.matmul %287, %1, %cst_96 {dimension_numbers = #tpu.dot_dimension_numbers<[1], [0], [0], [1], [0, 0, 1, 1], [], []>} : vector<2x32xf32>, vector<32x128xf32>, vector<2x128xf32> -> vector<2x128xf32>
    %cst_97 = arith.constant dense<0.000000e+00> : vector<2x128xf32>
    %289 = tpu.matmul %261, %2, %cst_97 {dimension_numbers = #tpu.dot_dimension_numbers<[1], [0], [0], [1], [0, 0, 1, 1], [], []>} : vector<2x32xf32>, vector<32x128xf32>, vector<2x128xf32> -> vector<2x128xf32>
    %290 = arith.addf %288, %289 : vector<2x128xf32>
    %291 = arith.addf %290, %7 : vector<2x128xf32>
    %292 = math.tanh %291 : vector<2x128xf32>
    %293 = vector.extract_strided_slice %292 {offsets = [0, 0], sizes = [2, 32], strides = [1, 1]} : vector<2x128xf32> to vector<2x32xf32>
    %cst_98 = arith.constant 1.000000e+00 : f32
    %294 = vector.broadcast %cst_98 : f32 to vector<2x32xf32>
    %295 = arith.addf %293, %294 : vector<2x32xf32>
    %cst_99 = arith.constant 5.000000e-01 : f32
    %296 = vector.broadcast %cst_99 : f32 to vector<2x32xf32>
    %297 = arith.mulf %296, %295 : vector<2x32xf32>
    %298 = vector.extract_strided_slice %292 {offsets = [0, 32], sizes = [2, 32], strides = [1, 1]} : vector<2x128xf32> to vector<2x32xf32>
    %cst_100 = arith.constant 1.000000e+00 : f32
    %299 = vector.broadcast %cst_100 : f32 to vector<2x32xf32>
    %300 = arith.addf %298, %299 : vector<2x32xf32>
    %cst_101 = arith.constant 5.000000e-01 : f32
    %301 = vector.broadcast %cst_101 : f32 to vector<2x32xf32>
    %302 = arith.mulf %301, %300 : vector<2x32xf32>
    %303 = vector.extract_strided_slice %292 {offsets = [0, 64], sizes = [2, 32], strides = [1, 1]} : vector<2x128xf32> to vector<2x32xf32>
    %304 = vector.extract_strided_slice %292 {offsets = [0, 96], sizes = [2, 32], strides = [1, 1]} : vector<2x128xf32> to vector<2x32xf32>
    %cst_102 = arith.constant 1.000000e+00 : f32
    %305 = vector.broadcast %cst_102 : f32 to vector<2x32xf32>
    %306 = arith.addf %304, %305 : vector<2x32xf32>
    %cst_103 = arith.constant 5.000000e-01 : f32
    %307 = vector.broadcast %cst_103 : f32 to vector<2x32xf32>
    %308 = arith.mulf %307, %306 : vector<2x32xf32>
    %309 = arith.mulf %302, %259 : vector<2x32xf32>
    %310 = arith.mulf %297, %303 : vector<2x32xf32>
    %311 = arith.addf %309, %310 : vector<2x32xf32>
    %312 = math.tanh %311 : vector<2x32xf32>
    %313 = arith.mulf %308, %312 : vector<2x32xf32>
    %314 = vector.extract_strided_slice %19 {offsets = [6, 0, 0], sizes = [1, 2, 128], strides = [1, 1, 1]} : vector<8x2x128xf32> to vector<1x2x128xf32>
    %315 = vector.shape_cast %314 : vector<1x2x128xf32> to vector<2x128xf32>
    %cst_104 = arith.constant dense<0.000000e+00> : vector<2x128xf32>
    %316 = tpu.matmul %287, %0, %cst_104 {dimension_numbers = #tpu.dot_dimension_numbers<[1], [0], [0], [1], [0, 0, 1, 1], [], []>} : vector<2x32xf32>, vector<32x128xf32>, vector<2x128xf32> -> vector<2x128xf32>
    %317 = arith.addf %315, %316 : vector<2x128xf32>
    %318 = math.tanh %317 : vector<2x128xf32>
    %319 = vector.extract_strided_slice %318 {offsets = [0, 0], sizes = [2, 32], strides = [1, 1]} : vector<2x128xf32> to vector<2x32xf32>
    %cst_105 = arith.constant 1.000000e+00 : f32
    %320 = vector.broadcast %cst_105 : f32 to vector<2x32xf32>
    %321 = arith.addf %319, %320 : vector<2x32xf32>
    %cst_106 = arith.constant 5.000000e-01 : f32
    %322 = vector.broadcast %cst_106 : f32 to vector<2x32xf32>
    %323 = arith.mulf %322, %321 : vector<2x32xf32>
    %324 = vector.extract_strided_slice %318 {offsets = [0, 32], sizes = [2, 32], strides = [1, 1]} : vector<2x128xf32> to vector<2x32xf32>
    %cst_107 = arith.constant 1.000000e+00 : f32
    %325 = vector.broadcast %cst_107 : f32 to vector<2x32xf32>
    %326 = arith.addf %324, %325 : vector<2x32xf32>
    %cst_108 = arith.constant 5.000000e-01 : f32
    %327 = vector.broadcast %cst_108 : f32 to vector<2x32xf32>
    %328 = arith.mulf %327, %326 : vector<2x32xf32>
    %329 = vector.extract_strided_slice %318 {offsets = [0, 64], sizes = [2, 32], strides = [1, 1]} : vector<2x128xf32> to vector<2x32xf32>
    %330 = vector.extract_strided_slice %318 {offsets = [0, 96], sizes = [2, 32], strides = [1, 1]} : vector<2x128xf32> to vector<2x32xf32>
    %cst_109 = arith.constant 1.000000e+00 : f32
    %331 = vector.broadcast %cst_109 : f32 to vector<2x32xf32>
    %332 = arith.addf %330, %331 : vector<2x32xf32>
    %cst_110 = arith.constant 5.000000e-01 : f32
    %333 = vector.broadcast %cst_110 : f32 to vector<2x32xf32>
    %334 = arith.mulf %333, %332 : vector<2x32xf32>
    %335 = arith.mulf %328, %285 : vector<2x32xf32>
    %336 = arith.mulf %323, %329 : vector<2x32xf32>
    %337 = arith.addf %335, %336 : vector<2x32xf32>
    %338 = math.tanh %337 : vector<2x32xf32>
    %339 = arith.mulf %334, %338 : vector<2x32xf32>
    %cst_111 = arith.constant dense<0.000000e+00> : vector<2x128xf32>
    %340 = tpu.matmul %339, %1, %cst_111 {dimension_numbers = #tpu.dot_dimension_numbers<[1], [0], [0], [1], [0, 0, 1, 1], [], []>} : vector<2x32xf32>, vector<32x128xf32>, vector<2x128xf32> -> vector<2x128xf32>
    %cst_112 = arith.constant dense<0.000000e+00> : vector<2x128xf32>
    %341 = tpu.matmul %313, %2, %cst_112 {dimension_numbers = #tpu.dot_dimension_numbers<[1], [0], [0], [1], [0, 0, 1, 1], [], []>} : vector<2x32xf32>, vector<32x128xf32>, vector<2x128xf32> -> vector<2x128xf32>
    %342 = arith.addf %340, %341 : vector<2x128xf32>
    %343 = arith.addf %342, %7 : vector<2x128xf32>
    %344 = math.tanh %343 : vector<2x128xf32>
    %345 = vector.extract_strided_slice %344 {offsets = [0, 0], sizes = [2, 32], strides = [1, 1]} : vector<2x128xf32> to vector<2x32xf32>
    %cst_113 = arith.constant 1.000000e+00 : f32
    %346 = vector.broadcast %cst_113 : f32 to vector<2x32xf32>
    %347 = arith.addf %345, %346 : vector<2x32xf32>
    %cst_114 = arith.constant 5.000000e-01 : f32
    %348 = vector.broadcast %cst_114 : f32 to vector<2x32xf32>
    %349 = arith.mulf %348, %347 : vector<2x32xf32>
    %350 = vector.extract_strided_slice %344 {offsets = [0, 32], sizes = [2, 32], strides = [1, 1]} : vector<2x128xf32> to vector<2x32xf32>
    %cst_115 = arith.constant 1.000000e+00 : f32
    %351 = vector.broadcast %cst_115 : f32 to vector<2x32xf32>
    %352 = arith.addf %350, %351 : vector<2x32xf32>
    %cst_116 = arith.constant 5.000000e-01 : f32
    %353 = vector.broadcast %cst_116 : f32 to vector<2x32xf32>
    %354 = arith.mulf %353, %352 : vector<2x32xf32>
    %355 = vector.extract_strided_slice %344 {offsets = [0, 64], sizes = [2, 32], strides = [1, 1]} : vector<2x128xf32> to vector<2x32xf32>
    %356 = vector.extract_strided_slice %344 {offsets = [0, 96], sizes = [2, 32], strides = [1, 1]} : vector<2x128xf32> to vector<2x32xf32>
    %cst_117 = arith.constant 1.000000e+00 : f32
    %357 = vector.broadcast %cst_117 : f32 to vector<2x32xf32>
    %358 = arith.addf %356, %357 : vector<2x32xf32>
    %cst_118 = arith.constant 5.000000e-01 : f32
    %359 = vector.broadcast %cst_118 : f32 to vector<2x32xf32>
    %360 = arith.mulf %359, %358 : vector<2x32xf32>
    %361 = arith.mulf %354, %311 : vector<2x32xf32>
    %362 = arith.mulf %349, %355 : vector<2x32xf32>
    %363 = arith.addf %361, %362 : vector<2x32xf32>
    %364 = math.tanh %363 : vector<2x32xf32>
    %365 = arith.mulf %360, %364 : vector<2x32xf32>
    %366 = vector.extract_strided_slice %19 {offsets = [7, 0, 0], sizes = [1, 2, 128], strides = [1, 1, 1]} : vector<8x2x128xf32> to vector<1x2x128xf32>
    %367 = vector.shape_cast %366 : vector<1x2x128xf32> to vector<2x128xf32>
    %cst_119 = arith.constant dense<0.000000e+00> : vector<2x128xf32>
    %368 = tpu.matmul %339, %0, %cst_119 {dimension_numbers = #tpu.dot_dimension_numbers<[1], [0], [0], [1], [0, 0, 1, 1], [], []>} : vector<2x32xf32>, vector<32x128xf32>, vector<2x128xf32> -> vector<2x128xf32>
    %369 = arith.addf %367, %368 : vector<2x128xf32>
    %370 = math.tanh %369 : vector<2x128xf32>
    %371 = vector.extract_strided_slice %370 {offsets = [0, 0], sizes = [2, 32], strides = [1, 1]} : vector<2x128xf32> to vector<2x32xf32>
    %cst_120 = arith.constant 1.000000e+00 : f32
    %372 = vector.broadcast %cst_120 : f32 to vector<2x32xf32>
    %373 = arith.addf %371, %372 : vector<2x32xf32>
    %cst_121 = arith.constant 5.000000e-01 : f32
    %374 = vector.broadcast %cst_121 : f32 to vector<2x32xf32>
    %375 = arith.mulf %374, %373 : vector<2x32xf32>
    %376 = vector.extract_strided_slice %370 {offsets = [0, 32], sizes = [2, 32], strides = [1, 1]} : vector<2x128xf32> to vector<2x32xf32>
    %cst_122 = arith.constant 1.000000e+00 : f32
    %377 = vector.broadcast %cst_122 : f32 to vector<2x32xf32>
    %378 = arith.addf %376, %377 : vector<2x32xf32>
    %cst_123 = arith.constant 5.000000e-01 : f32
    %379 = vector.broadcast %cst_123 : f32 to vector<2x32xf32>
    %380 = arith.mulf %379, %378 : vector<2x32xf32>
    %381 = vector.extract_strided_slice %370 {offsets = [0, 64], sizes = [2, 32], strides = [1, 1]} : vector<2x128xf32> to vector<2x32xf32>
    %382 = vector.extract_strided_slice %370 {offsets = [0, 96], sizes = [2, 32], strides = [1, 1]} : vector<2x128xf32> to vector<2x32xf32>
    %cst_124 = arith.constant 1.000000e+00 : f32
    %383 = vector.broadcast %cst_124 : f32 to vector<2x32xf32>
    %384 = arith.addf %382, %383 : vector<2x32xf32>
    %cst_125 = arith.constant 5.000000e-01 : f32
    %385 = vector.broadcast %cst_125 : f32 to vector<2x32xf32>
    %386 = arith.mulf %385, %384 : vector<2x32xf32>
    %387 = arith.mulf %380, %337 : vector<2x32xf32>
    %388 = arith.mulf %375, %381 : vector<2x32xf32>
    %389 = arith.addf %387, %388 : vector<2x32xf32>
    %390 = math.tanh %389 : vector<2x32xf32>
    %391 = arith.mulf %386, %390 : vector<2x32xf32>
    %cst_126 = arith.constant dense<0.000000e+00> : vector<2x128xf32>
    %392 = tpu.matmul %391, %1, %cst_126 {dimension_numbers = #tpu.dot_dimension_numbers<[1], [0], [0], [1], [0, 0, 1, 1], [], []>} : vector<2x32xf32>, vector<32x128xf32>, vector<2x128xf32> -> vector<2x128xf32>
    %cst_127 = arith.constant dense<0.000000e+00> : vector<2x128xf32>
    %393 = tpu.matmul %365, %2, %cst_127 {dimension_numbers = #tpu.dot_dimension_numbers<[1], [0], [0], [1], [0, 0, 1, 1], [], []>} : vector<2x32xf32>, vector<32x128xf32>, vector<2x128xf32> -> vector<2x128xf32>
    %394 = arith.addf %392, %393 : vector<2x128xf32>
    %395 = arith.addf %394, %7 : vector<2x128xf32>
    %396 = math.tanh %395 : vector<2x128xf32>
    %397 = vector.extract_strided_slice %396 {offsets = [0, 0], sizes = [2, 32], strides = [1, 1]} : vector<2x128xf32> to vector<2x32xf32>
    %cst_128 = arith.constant 1.000000e+00 : f32
    %398 = vector.broadcast %cst_128 : f32 to vector<2x32xf32>
    %399 = arith.addf %397, %398 : vector<2x32xf32>
    %cst_129 = arith.constant 5.000000e-01 : f32
    %400 = vector.broadcast %cst_129 : f32 to vector<2x32xf32>
    %401 = arith.mulf %400, %399 : vector<2x32xf32>
    %402 = vector.extract_strided_slice %396 {offsets = [0, 32], sizes = [2, 32], strides = [1, 1]} : vector<2x128xf32> to vector<2x32xf32>
    %cst_130 = arith.constant 1.000000e+00 : f32
    %403 = vector.broadcast %cst_130 : f32 to vector<2x32xf32>
    %404 = arith.addf %402, %403 : vector<2x32xf32>
    %cst_131 = arith.constant 5.000000e-01 : f32
    %405 = vector.broadcast %cst_131 : f32 to vector<2x32xf32>
    %406 = arith.mulf %405, %404 : vector<2x32xf32>
    %407 = vector.extract_strided_slice %396 {offsets = [0, 64], sizes = [2, 32], strides = [1, 1]} : vector<2x128xf32> to vector<2x32xf32>
    %408 = vector.extract_strided_slice %396 {offsets = [0, 96], sizes = [2, 32], strides = [1, 1]} : vector<2x128xf32> to vector<2x32xf32>
    %cst_132 = arith.constant 1.000000e+00 : f32
    %409 = vector.broadcast %cst_132 : f32 to vector<2x32xf32>
    %410 = arith.addf %408, %409 : vector<2x32xf32>
    %cst_133 = arith.constant 5.000000e-01 : f32
    %411 = vector.broadcast %cst_133 : f32 to vector<2x32xf32>
    %412 = arith.mulf %411, %410 : vector<2x32xf32>
    %413 = arith.mulf %406, %363 : vector<2x32xf32>
    %414 = arith.mulf %401, %407 : vector<2x32xf32>
    %415 = arith.addf %413, %414 : vector<2x32xf32>
    %416 = math.tanh %415 : vector<2x32xf32>
    %417 = arith.mulf %412, %416 : vector<2x32xf32>
    %c0_134 = arith.constant 0 : index
    %c0_135 = arith.constant 0 : index
    %418 = vector.load %arg8[%c0_134, %c0_135] : memref<32x32xf32, #tpu.memory_space<vmem>>, vector<32x32xf32>
    %cst_136 = arith.constant dense<0.000000e+00> : vector<2x32xf32>
    %419 = tpu.matmul %417, %418, %cst_136 {dimension_numbers = #tpu.dot_dimension_numbers<[1], [0], [0], [1], [0, 0, 1, 1], [], []>} : vector<2x32xf32>, vector<32x32xf32>, vector<2x32xf32> -> vector<2x32xf32>
    %c0_137 = arith.constant 0 : index
    %c0_138 = arith.constant 0 : index
    %420 = vector.load %arg9[%c0_137, %c0_138] : memref<1x32xf32, #tpu.memory_space<vmem>>, vector<1x32xf32>
    %421 = vector.broadcast %420 : vector<1x32xf32> to vector<2x32xf32>
    %422 = arith.addf %419, %421 : vector<2x32xf32>
    %c0_139 = arith.constant 0 : index
    %c0_140 = arith.constant 0 : index
    %423 = vector.load %arg20[%c0_139, %c0_140] : memref<2x32xf32, #tpu.memory_space<vmem>>, vector<2x32xf32>
    tpu.vector_store %arg20[%c0_139, %c0_140], %422 {strides = array<i32>} : memref<2x32xf32, #tpu.memory_space<vmem>>, vector<2x32xf32>,
    %424 = vector.extract_strided_slice %422 {offsets = [0, 0], sizes = [2, 16], strides = [1, 1]} : vector<2x32xf32> to vector<2x16xf32>
    %425 = vector.extract_strided_slice %422 {offsets = [0, 16], sizes = [2, 16], strides = [1, 1]} : vector<2x32xf32> to vector<2x16xf32>
    %cst_141 = arith.constant 5.000000e-01 : f32
    %426 = vector.broadcast %cst_141 : f32 to vector<2x16xf32>
    %427 = arith.mulf %426, %425 : vector<2x16xf32>
    %428 = math.exp %427 : vector<2x16xf32>
    %c0_142 = arith.constant 0 : index
    %c0_143 = arith.constant 0 : index
    %429 = vector.load %arg1[%c0_142, %c0_143] : memref<2x16xf32, #tpu.memory_space<vmem>>, vector<2x16xf32>
    %430 = arith.mulf %428, %429 : vector<2x16xf32>
    %431 = arith.addf %424, %430 : vector<2x16xf32>
    %c0_144 = arith.constant 0 : index
    %c0_145 = arith.constant 0 : index
    %432 = vector.load %arg10[%c0_144, %c0_145] : memref<16x32xf32, #tpu.memory_space<vmem>>, vector<16x32xf32>
    %cst_146 = arith.constant dense<0.000000e+00> : vector<2x32xf32>
    %433 = tpu.matmul %431, %432, %cst_146 {dimension_numbers = #tpu.dot_dimension_numbers<[1], [0], [0], [1], [0, 0, 1, 1], [], []>} : vector<2x16xf32>, vector<16x32xf32>, vector<2x32xf32> -> vector<2x32xf32>
    %c0_147 = arith.constant 0 : index
    %c0_148 = arith.constant 0 : index
    %434 = vector.load %arg11[%c0_147, %c0_148] : memref<1x32xf32, #tpu.memory_space<vmem>>, vector<1x32xf32>
    %435 = vector.broadcast %434 : vector<1x32xf32> to vector<2x32xf32>
    %436 = arith.addf %433, %435 : vector<2x32xf32>
    %437 = vector.extract_strided_slice %11 {offsets = [7, 0, 0], sizes = [1, 2, 39], strides = [1, 1, 1]} : vector<8x2x39xf32> to vector<1x2x39xf32>
    %438 = vector.shape_cast %437 : vector<1x2x39xf32> to vector<2x39xf32>
    %c0_149 = arith.constant 0 : index
    %c0_150 = arith.constant 0 : index
    %439 = vector.load %arg12[%c0_149, %c0_150] : memref<39x128xf32, #tpu.memory_space<vmem>>, vector<39x128xf32>
    %cst_151 = arith.constant dense<0.000000e+00> : vector<2x128xf32>
    %440 = tpu.matmul %438, %439, %cst_151 {dimension_numbers = #tpu.dot_dimension_numbers<[1], [0], [0], [1], [0, 0, 1, 1], [], []>} : vector<2x39xf32>, vector<39x128xf32>, vector<2x128xf32> -> vector<2x128xf32>
    %c0_152 = arith.constant 0 : index
    %c0_153 = arith.constant 0 : index
    %441 = vector.load %arg13[%c0_152, %c0_153] : memref<32x128xf32, #tpu.memory_space<vmem>>, vector<32x128xf32>
    %cst_154 = arith.constant dense<0.000000e+00> : vector<2x128xf32>
    %442 = tpu.matmul %436, %441, %cst_154 {dimension_numbers = #tpu.dot_dimension_numbers<[1], [0], [0], [1], [0, 0, 1, 1], [], []>} : vector<2x32xf32>, vector<32x128xf32>, vector<2x128xf32> -> vector<2x128xf32>
    %443 = arith.addf %440, %442 : vector<2x128xf32>
    %c0_155 = arith.constant 0 : index
    %c0_156 = arith.constant 0 : index
    %444 = vector.load %arg14[%c0_155, %c0_156] : memref<1x128xf32, #tpu.memory_space<vmem>>, vector<1x128xf32>
    %445 = vector.broadcast %444 : vector<1x128xf32> to vector<2x128xf32>
    %446 = arith.addf %443, %445 : vector<2x128xf32>
    %447 = math.tanh %446 : vector<2x128xf32>
    %448 = vector.extract_strided_slice %447 {offsets = [0, 0], sizes = [2, 32], strides = [1, 1]} : vector<2x128xf32> to vector<2x32xf32>
    %cst_157 = arith.constant 1.000000e+00 : f32
    %449 = vector.broadcast %cst_157 : f32 to vector<2x32xf32>
    %450 = arith.addf %448, %449 : vector<2x32xf32>
    %cst_158 = arith.constant 5.000000e-01 : f32
    %451 = vector.broadcast %cst_158 : f32 to vector<2x32xf32>
    %452 = arith.mulf %451, %450 : vector<2x32xf32>
    %453 = vector.extract_strided_slice %447 {offsets = [0, 64], sizes = [2, 32], strides = [1, 1]} : vector<2x128xf32> to vector<2x32xf32>
    %454 = vector.extract_strided_slice %447 {offsets = [0, 96], sizes = [2, 32], strides = [1, 1]} : vector<2x128xf32> to vector<2x32xf32>
    %cst_159 = arith.constant 1.000000e+00 : f32
    %455 = vector.broadcast %cst_159 : f32 to vector<2x32xf32>
    %456 = arith.addf %454, %455 : vector<2x32xf32>
    %cst_160 = arith.constant 5.000000e-01 : f32
    %457 = vector.broadcast %cst_160 : f32 to vector<2x32xf32>
    %458 = arith.mulf %457, %456 : vector<2x32xf32>
    %459 = arith.mulf %452, %453 : vector<2x32xf32>
    %460 = math.tanh %459 : vector<2x32xf32>
    %461 = arith.mulf %458, %460 : vector<2x32xf32>
    %cst_161 = arith.constant dense<0.000000e+00> : vector<2x128xf32>
    %462 = tpu.matmul %461, %3, %cst_161 {dimension_numbers = #tpu.dot_dimension_numbers<[1], [0], [0], [1], [0, 0, 1, 1], [], []>} : vector<2x32xf32>, vector<32x128xf32>, vector<2x128xf32> -> vector<2x128xf32>
    %463 = arith.addf %462, %10 : vector<2x128xf32>
    %464 = math.tanh %463 : vector<2x128xf32>
    %465 = vector.extract_strided_slice %464 {offsets = [0, 0], sizes = [2, 32], strides = [1, 1]} : vector<2x128xf32> to vector<2x32xf32>
    %cst_162 = arith.constant 1.000000e+00 : f32
    %466 = vector.broadcast %cst_162 : f32 to vector<2x32xf32>
    %467 = arith.addf %465, %466 : vector<2x32xf32>
    %cst_163 = arith.constant 5.000000e-01 : f32
    %468 = vector.broadcast %cst_163 : f32 to vector<2x32xf32>
    %469 = arith.mulf %468, %467 : vector<2x32xf32>
    %470 = vector.extract_strided_slice %464 {offsets = [0, 32], sizes = [2, 32], strides = [1, 1]} : vector<2x128xf32> to vector<2x32xf32>
    %cst_164 = arith.constant 1.000000e+00 : f32
    %471 = vector.broadcast %cst_164 : f32 to vector<2x32xf32>
    %472 = arith.addf %470, %471 : vector<2x32xf32>
    %cst_165 = arith.constant 5.000000e-01 : f32
    %473 = vector.broadcast %cst_165 : f32 to vector<2x32xf32>
    %474 = arith.mulf %473, %472 : vector<2x32xf32>
    %475 = vector.extract_strided_slice %464 {offsets = [0, 64], sizes = [2, 32], strides = [1, 1]} : vector<2x128xf32> to vector<2x32xf32>
    %476 = vector.extract_strided_slice %464 {offsets = [0, 96], sizes = [2, 32], strides = [1, 1]} : vector<2x128xf32> to vector<2x32xf32>
    %cst_166 = arith.constant 1.000000e+00 : f32
    %477 = vector.broadcast %cst_166 : f32 to vector<2x32xf32>
    %478 = arith.addf %476, %477 : vector<2x32xf32>
    %cst_167 = arith.constant 5.000000e-01 : f32
    %479 = vector.broadcast %cst_167 : f32 to vector<2x32xf32>
    %480 = arith.mulf %479, %478 : vector<2x32xf32>
    %481 = arith.mulf %474, %459 : vector<2x32xf32>
    %482 = arith.mulf %469, %475 : vector<2x32xf32>
    %483 = arith.addf %481, %482 : vector<2x32xf32>
    %484 = math.tanh %483 : vector<2x32xf32>
    %485 = arith.mulf %480, %484 : vector<2x32xf32>
    %cst_168 = arith.constant dense<0.000000e+00> : vector<2x128xf32>
    %486 = tpu.matmul %485, %3, %cst_168 {dimension_numbers = #tpu.dot_dimension_numbers<[1], [0], [0], [1], [0, 0, 1, 1], [], []>} : vector<2x32xf32>, vector<32x128xf32>, vector<2x128xf32> -> vector<2x128xf32>
    %487 = arith.addf %486, %10 : vector<2x128xf32>
    %488 = math.tanh %487 : vector<2x128xf32>
    %489 = vector.extract_strided_slice %488 {offsets = [0, 0], sizes = [2, 32], strides = [1, 1]} : vector<2x128xf32> to vector<2x32xf32>
    %cst_169 = arith.constant 1.000000e+00 : f32
    %490 = vector.broadcast %cst_169 : f32 to vector<2x32xf32>
    %491 = arith.addf %489, %490 : vector<2x32xf32>
    %cst_170 = arith.constant 5.000000e-01 : f32
    %492 = vector.broadcast %cst_170 : f32 to vector<2x32xf32>
    %493 = arith.mulf %492, %491 : vector<2x32xf32>
    %494 = vector.extract_strided_slice %488 {offsets = [0, 32], sizes = [2, 32], strides = [1, 1]} : vector<2x128xf32> to vector<2x32xf32>
    %cst_171 = arith.constant 1.000000e+00 : f32
    %495 = vector.broadcast %cst_171 : f32 to vector<2x32xf32>
    %496 = arith.addf %494, %495 : vector<2x32xf32>
    %cst_172 = arith.constant 5.000000e-01 : f32
    %497 = vector.broadcast %cst_172 : f32 to vector<2x32xf32>
    %498 = arith.mulf %497, %496 : vector<2x32xf32>
    %499 = vector.extract_strided_slice %488 {offsets = [0, 64], sizes = [2, 32], strides = [1, 1]} : vector<2x128xf32> to vector<2x32xf32>
    %500 = vector.extract_strided_slice %488 {offsets = [0, 96], sizes = [2, 32], strides = [1, 1]} : vector<2x128xf32> to vector<2x32xf32>
    %cst_173 = arith.constant 1.000000e+00 : f32
    %501 = vector.broadcast %cst_173 : f32 to vector<2x32xf32>
    %502 = arith.addf %500, %501 : vector<2x32xf32>
    %cst_174 = arith.constant 5.000000e-01 : f32
    %503 = vector.broadcast %cst_174 : f32 to vector<2x32xf32>
    %504 = arith.mulf %503, %502 : vector<2x32xf32>
    %505 = arith.mulf %498, %483 : vector<2x32xf32>
    %506 = arith.mulf %493, %499 : vector<2x32xf32>
    %507 = arith.addf %505, %506 : vector<2x32xf32>
    %508 = math.tanh %507 : vector<2x32xf32>
    %509 = arith.mulf %504, %508 : vector<2x32xf32>
    %cst_175 = arith.constant dense<0.000000e+00> : vector<2x128xf32>
    %510 = tpu.matmul %509, %3, %cst_175 {dimension_numbers = #tpu.dot_dimension_numbers<[1], [0], [0], [1], [0, 0, 1, 1], [], []>} : vector<2x32xf32>, vector<32x128xf32>, vector<2x128xf32> -> vector<2x128xf32>
    %511 = arith.addf %510, %10 : vector<2x128xf32>
    %512 = math.tanh %511 : vector<2x128xf32>
    %513 = vector.extract_strided_slice %512 {offsets = [0, 0], sizes = [2, 32], strides = [1, 1]} : vector<2x128xf32> to vector<2x32xf32>
    %cst_176 = arith.constant 1.000000e+00 : f32
    %514 = vector.broadcast %cst_176 : f32 to vector<2x32xf32>
    %515 = arith.addf %513, %514 : vector<2x32xf32>
    %cst_177 = arith.constant 5.000000e-01 : f32
    %516 = vector.broadcast %cst_177 : f32 to vector<2x32xf32>
    %517 = arith.mulf %516, %515 : vector<2x32xf32>
    %518 = vector.extract_strided_slice %512 {offsets = [0, 32], sizes = [2, 32], strides = [1, 1]} : vector<2x128xf32> to vector<2x32xf32>
    %cst_178 = arith.constant 1.000000e+00 : f32
    %519 = vector.broadcast %cst_178 : f32 to vector<2x32xf32>
    %520 = arith.addf %518, %519 : vector<2x32xf32>
    %cst_179 = arith.constant 5.000000e-01 : f32
    %521 = vector.broadcast %cst_179 : f32 to vector<2x32xf32>
    %522 = arith.mulf %521, %520 : vector<2x32xf32>
    %523 = vector.extract_strided_slice %512 {offsets = [0, 64], sizes = [2, 32], strides = [1, 1]} : vector<2x128xf32> to vector<2x32xf32>
    %524 = vector.extract_strided_slice %512 {offsets = [0, 96], sizes = [2, 32], strides = [1, 1]} : vector<2x128xf32> to vector<2x32xf32>
    %cst_180 = arith.constant 1.000000e+00 : f32
    %525 = vector.broadcast %cst_180 : f32 to vector<2x32xf32>
    %526 = arith.addf %524, %525 : vector<2x32xf32>
    %cst_181 = arith.constant 5.000000e-01 : f32
    %527 = vector.broadcast %cst_181 : f32 to vector<2x32xf32>
    %528 = arith.mulf %527, %526 : vector<2x32xf32>
    %529 = arith.mulf %522, %507 : vector<2x32xf32>
    %530 = arith.mulf %517, %523 : vector<2x32xf32>
    %531 = arith.addf %529, %530 : vector<2x32xf32>
    %532 = math.tanh %531 : vector<2x32xf32>
    %533 = arith.mulf %528, %532 : vector<2x32xf32>
    %cst_182 = arith.constant dense<0.000000e+00> : vector<2x128xf32>
    %534 = tpu.matmul %533, %3, %cst_182 {dimension_numbers = #tpu.dot_dimension_numbers<[1], [0], [0], [1], [0, 0, 1, 1], [], []>} : vector<2x32xf32>, vector<32x128xf32>, vector<2x128xf32> -> vector<2x128xf32>
    %535 = arith.addf %534, %10 : vector<2x128xf32>
    %536 = math.tanh %535 : vector<2x128xf32>
    %537 = vector.extract_strided_slice %536 {offsets = [0, 0], sizes = [2, 32], strides = [1, 1]} : vector<2x128xf32> to vector<2x32xf32>
    %cst_183 = arith.constant 1.000000e+00 : f32
    %538 = vector.broadcast %cst_183 : f32 to vector<2x32xf32>
    %539 = arith.addf %537, %538 : vector<2x32xf32>
    %cst_184 = arith.constant 5.000000e-01 : f32
    %540 = vector.broadcast %cst_184 : f32 to vector<2x32xf32>
    %541 = arith.mulf %540, %539 : vector<2x32xf32>
    %542 = vector.extract_strided_slice %536 {offsets = [0, 32], sizes = [2, 32], strides = [1, 1]} : vector<2x128xf32> to vector<2x32xf32>
    %cst_185 = arith.constant 1.000000e+00 : f32
    %543 = vector.broadcast %cst_185 : f32 to vector<2x32xf32>
    %544 = arith.addf %542, %543 : vector<2x32xf32>
    %cst_186 = arith.constant 5.000000e-01 : f32
    %545 = vector.broadcast %cst_186 : f32 to vector<2x32xf32>
    %546 = arith.mulf %545, %544 : vector<2x32xf32>
    %547 = vector.extract_strided_slice %536 {offsets = [0, 64], sizes = [2, 32], strides = [1, 1]} : vector<2x128xf32> to vector<2x32xf32>
    %548 = vector.extract_strided_slice %536 {offsets = [0, 96], sizes = [2, 32], strides = [1, 1]} : vector<2x128xf32> to vector<2x32xf32>
    %cst_187 = arith.constant 1.000000e+00 : f32
    %549 = vector.broadcast %cst_187 : f32 to vector<2x32xf32>
    %550 = arith.addf %548, %549 : vector<2x32xf32>
    %cst_188 = arith.constant 5.000000e-01 : f32
    %551 = vector.broadcast %cst_188 : f32 to vector<2x32xf32>
    %552 = arith.mulf %551, %550 : vector<2x32xf32>
    %553 = arith.mulf %546, %531 : vector<2x32xf32>
    %554 = arith.mulf %541, %547 : vector<2x32xf32>
    %555 = arith.addf %553, %554 : vector<2x32xf32>
    %556 = math.tanh %555 : vector<2x32xf32>
    %557 = arith.mulf %552, %556 : vector<2x32xf32>
    %cst_189 = arith.constant dense<0.000000e+00> : vector<2x128xf32>
    %558 = tpu.matmul %557, %3, %cst_189 {dimension_numbers = #tpu.dot_dimension_numbers<[1], [0], [0], [1], [0, 0, 1, 1], [], []>} : vector<2x32xf32>, vector<32x128xf32>, vector<2x128xf32> -> vector<2x128xf32>
    %559 = arith.addf %558, %10 : vector<2x128xf32>
    %560 = math.tanh %559 : vector<2x128xf32>
    %561 = vector.extract_strided_slice %560 {offsets = [0, 0], sizes = [2, 32], strides = [1, 1]} : vector<2x128xf32> to vector<2x32xf32>
    %cst_190 = arith.constant 1.000000e+00 : f32
    %562 = vector.broadcast %cst_190 : f32 to vector<2x32xf32>
    %563 = arith.addf %561, %562 : vector<2x32xf32>
    %cst_191 = arith.constant 5.000000e-01 : f32
    %564 = vector.broadcast %cst_191 : f32 to vector<2x32xf32>
    %565 = arith.mulf %564, %563 : vector<2x32xf32>
    %566 = vector.extract_strided_slice %560 {offsets = [0, 32], sizes = [2, 32], strides = [1, 1]} : vector<2x128xf32> to vector<2x32xf32>
    %cst_192 = arith.constant 1.000000e+00 : f32
    %567 = vector.broadcast %cst_192 : f32 to vector<2x32xf32>
    %568 = arith.addf %566, %567 : vector<2x32xf32>
    %cst_193 = arith.constant 5.000000e-01 : f32
    %569 = vector.broadcast %cst_193 : f32 to vector<2x32xf32>
    %570 = arith.mulf %569, %568 : vector<2x32xf32>
    %571 = vector.extract_strided_slice %560 {offsets = [0, 64], sizes = [2, 32], strides = [1, 1]} : vector<2x128xf32> to vector<2x32xf32>
    %572 = vector.extract_strided_slice %560 {offsets = [0, 96], sizes = [2, 32], strides = [1, 1]} : vector<2x128xf32> to vector<2x32xf32>
    %cst_194 = arith.constant 1.000000e+00 : f32
    %573 = vector.broadcast %cst_194 : f32 to vector<2x32xf32>
    %574 = arith.addf %572, %573 : vector<2x32xf32>
    %cst_195 = arith.constant 5.000000e-01 : f32
    %575 = vector.broadcast %cst_195 : f32 to vector<2x32xf32>
    %576 = arith.mulf %575, %574 : vector<2x32xf32>
    %577 = arith.mulf %570, %555 : vector<2x32xf32>
    %578 = arith.mulf %565, %571 : vector<2x32xf32>
    %579 = arith.addf %577, %578 : vector<2x32xf32>
    %580 = math.tanh %579 : vector<2x32xf32>
    %581 = arith.mulf %576, %580 : vector<2x32xf32>
    %cst_196 = arith.constant dense<0.000000e+00> : vector<2x128xf32>
    %582 = tpu.matmul %581, %3, %cst_196 {dimension_numbers = #tpu.dot_dimension_numbers<[1], [0], [0], [1], [0, 0, 1, 1], [], []>} : vector<2x32xf32>, vector<32x128xf32>, vector<2x128xf32> -> vector<2x128xf32>
    %583 = arith.addf %582, %10 : vector<2x128xf32>
    %584 = math.tanh %583 : vector<2x128xf32>
    %585 = vector.extract_strided_slice %584 {offsets = [0, 0], sizes = [2, 32], strides = [1, 1]} : vector<2x128xf32> to vector<2x32xf32>
    %cst_197 = arith.constant 1.000000e+00 : f32
    %586 = vector.broadcast %cst_197 : f32 to vector<2x32xf32>
    %587 = arith.addf %585, %586 : vector<2x32xf32>
    %cst_198 = arith.constant 5.000000e-01 : f32
    %588 = vector.broadcast %cst_198 : f32 to vector<2x32xf32>
    %589 = arith.mulf %588, %587 : vector<2x32xf32>
    %590 = vector.extract_strided_slice %584 {offsets = [0, 32], sizes = [2, 32], strides = [1, 1]} : vector<2x128xf32> to vector<2x32xf32>
    %cst_199 = arith.constant 1.000000e+00 : f32
    %591 = vector.broadcast %cst_199 : f32 to vector<2x32xf32>
    %592 = arith.addf %590, %591 : vector<2x32xf32>
    %cst_200 = arith.constant 5.000000e-01 : f32
    %593 = vector.broadcast %cst_200 : f32 to vector<2x32xf32>
    %594 = arith.mulf %593, %592 : vector<2x32xf32>
    %595 = vector.extract_strided_slice %584 {offsets = [0, 64], sizes = [2, 32], strides = [1, 1]} : vector<2x128xf32> to vector<2x32xf32>
    %596 = vector.extract_strided_slice %584 {offsets = [0, 96], sizes = [2, 32], strides = [1, 1]} : vector<2x128xf32> to vector<2x32xf32>
    %cst_201 = arith.constant 1.000000e+00 : f32
    %597 = vector.broadcast %cst_201 : f32 to vector<2x32xf32>
    %598 = arith.addf %596, %597 : vector<2x32xf32>
    %cst_202 = arith.constant 5.000000e-01 : f32
    %599 = vector.broadcast %cst_202 : f32 to vector<2x32xf32>
    %600 = arith.mulf %599, %598 : vector<2x32xf32>
    %601 = arith.mulf %594, %579 : vector<2x32xf32>
    %602 = arith.mulf %589, %595 : vector<2x32xf32>
    %603 = arith.addf %601, %602 : vector<2x32xf32>
    %604 = math.tanh %603 : vector<2x32xf32>
    %605 = arith.mulf %600, %604 : vector<2x32xf32>
    %cst_203 = arith.constant dense<0.000000e+00> : vector<2x128xf32>
    %606 = tpu.matmul %605, %3, %cst_203 {dimension_numbers = #tpu.dot_dimension_numbers<[1], [0], [0], [1], [0, 0, 1, 1], [], []>} : vector<2x32xf32>, vector<32x128xf32>, vector<2x128xf32> -> vector<2x128xf32>
    %607 = arith.addf %606, %10 : vector<2x128xf32>
    %608 = math.tanh %607 : vector<2x128xf32>
    %609 = vector.extract_strided_slice %608 {offsets = [0, 0], sizes = [2, 32], strides = [1, 1]} : vector<2x128xf32> to vector<2x32xf32>
    %cst_204 = arith.constant 1.000000e+00 : f32
    %610 = vector.broadcast %cst_204 : f32 to vector<2x32xf32>
    %611 = arith.addf %609, %610 : vector<2x32xf32>
    %cst_205 = arith.constant 5.000000e-01 : f32
    %612 = vector.broadcast %cst_205 : f32 to vector<2x32xf32>
    %613 = arith.mulf %612, %611 : vector<2x32xf32>
    %614 = vector.extract_strided_slice %608 {offsets = [0, 32], sizes = [2, 32], strides = [1, 1]} : vector<2x128xf32> to vector<2x32xf32>
    %cst_206 = arith.constant 1.000000e+00 : f32
    %615 = vector.broadcast %cst_206 : f32 to vector<2x32xf32>
    %616 = arith.addf %614, %615 : vector<2x32xf32>
    %cst_207 = arith.constant 5.000000e-01 : f32
    %617 = vector.broadcast %cst_207 : f32 to vector<2x32xf32>
    %618 = arith.mulf %617, %616 : vector<2x32xf32>
    %619 = vector.extract_strided_slice %608 {offsets = [0, 64], sizes = [2, 32], strides = [1, 1]} : vector<2x128xf32> to vector<2x32xf32>
    %620 = vector.extract_strided_slice %608 {offsets = [0, 96], sizes = [2, 32], strides = [1, 1]} : vector<2x128xf32> to vector<2x32xf32>
    %cst_208 = arith.constant 1.000000e+00 : f32
    %621 = vector.broadcast %cst_208 : f32 to vector<2x32xf32>
    %622 = arith.addf %620, %621 : vector<2x32xf32>
    %cst_209 = arith.constant 5.000000e-01 : f32
    %623 = vector.broadcast %cst_209 : f32 to vector<2x32xf32>
    %624 = arith.mulf %623, %622 : vector<2x32xf32>
    %625 = arith.mulf %618, %603 : vector<2x32xf32>
    %626 = arith.mulf %613, %619 : vector<2x32xf32>
    %627 = arith.addf %625, %626 : vector<2x32xf32>
    %628 = math.tanh %627 : vector<2x32xf32>
    %629 = arith.mulf %624, %628 : vector<2x32xf32>
    %cst_210 = arith.constant dense<0.000000e+00> : vector<2x128xf32>
    %630 = tpu.matmul %629, %3, %cst_210 {dimension_numbers = #tpu.dot_dimension_numbers<[1], [0], [0], [1], [0, 0, 1, 1], [], []>} : vector<2x32xf32>, vector<32x128xf32>, vector<2x128xf32> -> vector<2x128xf32>
    %631 = arith.addf %630, %10 : vector<2x128xf32>
    %632 = math.tanh %631 : vector<2x128xf32>
    %633 = vector.extract_strided_slice %632 {offsets = [0, 0], sizes = [2, 32], strides = [1, 1]} : vector<2x128xf32> to vector<2x32xf32>
    %cst_211 = arith.constant 1.000000e+00 : f32
    %634 = vector.broadcast %cst_211 : f32 to vector<2x32xf32>
    %635 = arith.addf %633, %634 : vector<2x32xf32>
    %cst_212 = arith.constant 5.000000e-01 : f32
    %636 = vector.broadcast %cst_212 : f32 to vector<2x32xf32>
    %637 = arith.mulf %636, %635 : vector<2x32xf32>
    %638 = vector.extract_strided_slice %632 {offsets = [0, 32], sizes = [2, 32], strides = [1, 1]} : vector<2x128xf32> to vector<2x32xf32>
    %cst_213 = arith.constant 1.000000e+00 : f32
    %639 = vector.broadcast %cst_213 : f32 to vector<2x32xf32>
    %640 = arith.addf %638, %639 : vector<2x32xf32>
    %cst_214 = arith.constant 5.000000e-01 : f32
    %641 = vector.broadcast %cst_214 : f32 to vector<2x32xf32>
    %642 = arith.mulf %641, %640 : vector<2x32xf32>
    %643 = vector.extract_strided_slice %632 {offsets = [0, 64], sizes = [2, 32], strides = [1, 1]} : vector<2x128xf32> to vector<2x32xf32>
    %644 = vector.extract_strided_slice %632 {offsets = [0, 96], sizes = [2, 32], strides = [1, 1]} : vector<2x128xf32> to vector<2x32xf32>
    %cst_215 = arith.constant 1.000000e+00 : f32
    %645 = vector.broadcast %cst_215 : f32 to vector<2x32xf32>
    %646 = arith.addf %644, %645 : vector<2x32xf32>
    %cst_216 = arith.constant 5.000000e-01 : f32
    %647 = vector.broadcast %cst_216 : f32 to vector<2x32xf32>
    %648 = arith.mulf %647, %646 : vector<2x32xf32>
    %649 = arith.mulf %642, %627 : vector<2x32xf32>
    %650 = arith.mulf %637, %643 : vector<2x32xf32>
    %651 = arith.addf %649, %650 : vector<2x32xf32>
    %652 = math.tanh %651 : vector<2x32xf32>
    %653 = arith.mulf %648, %652 : vector<2x32xf32>
    %cst_217 = arith.constant dense<0.000000e+00> : vector<2x128xf32>
    %654 = tpu.matmul %653, %3, %cst_217 {dimension_numbers = #tpu.dot_dimension_numbers<[1], [0], [0], [1], [0, 0, 1, 1], [], []>} : vector<2x32xf32>, vector<32x128xf32>, vector<2x128xf32> -> vector<2x128xf32>
    %655 = arith.addf %654, %10 : vector<2x128xf32>
    %656 = math.tanh %655 : vector<2x128xf32>
    %657 = vector.extract_strided_slice %656 {offsets = [0, 0], sizes = [2, 32], strides = [1, 1]} : vector<2x128xf32> to vector<2x32xf32>
    %cst_218 = arith.constant 1.000000e+00 : f32
    %658 = vector.broadcast %cst_218 : f32 to vector<2x32xf32>
    %659 = arith.addf %657, %658 : vector<2x32xf32>
    %cst_219 = arith.constant 5.000000e-01 : f32
    %660 = vector.broadcast %cst_219 : f32 to vector<2x32xf32>
    %661 = arith.mulf %660, %659 : vector<2x32xf32>
    %662 = vector.extract_strided_slice %656 {offsets = [0, 32], sizes = [2, 32], strides = [1, 1]} : vector<2x128xf32> to vector<2x32xf32>
    %cst_220 = arith.constant 1.000000e+00 : f32
    %663 = vector.broadcast %cst_220 : f32 to vector<2x32xf32>
    %664 = arith.addf %662, %663 : vector<2x32xf32>
    %cst_221 = arith.constant 5.000000e-01 : f32
    %665 = vector.broadcast %cst_221 : f32 to vector<2x32xf32>
    %666 = arith.mulf %665, %664 : vector<2x32xf32>
    %667 = vector.extract_strided_slice %656 {offsets = [0, 64], sizes = [2, 32], strides = [1, 1]} : vector<2x128xf32> to vector<2x32xf32>
    %668 = vector.extract_strided_slice %656 {offsets = [0, 96], sizes = [2, 32], strides = [1, 1]} : vector<2x128xf32> to vector<2x32xf32>
    %cst_222 = arith.constant 1.000000e+00 : f32
    %669 = vector.broadcast %cst_222 : f32 to vector<2x32xf32>
    %670 = arith.addf %668, %669 : vector<2x32xf32>
    %cst_223 = arith.constant 5.000000e-01 : f32
    %671 = vector.broadcast %cst_223 : f32 to vector<2x32xf32>
    %672 = arith.mulf %671, %670 : vector<2x32xf32>
    %673 = arith.mulf %666, %651 : vector<2x32xf32>
    %674 = arith.mulf %661, %667 : vector<2x32xf32>
    %675 = arith.addf %673, %674 : vector<2x32xf32>
    %676 = math.tanh %675 : vector<2x32xf32>
    %677 = arith.mulf %672, %676 : vector<2x32xf32>
    %cst_224 = arith.constant dense<0.000000e+00> : vector<2x128xf32>
    %678 = tpu.matmul %677, %3, %cst_224 {dimension_numbers = #tpu.dot_dimension_numbers<[1], [0], [0], [1], [0, 0, 1, 1], [], []>} : vector<2x32xf32>, vector<32x128xf32>, vector<2x128xf32> -> vector<2x128xf32>
    %679 = arith.addf %678, %10 : vector<2x128xf32>
    %680 = math.tanh %679 : vector<2x128xf32>
    %681 = vector.extract_strided_slice %680 {offsets = [0, 0], sizes = [2, 32], strides = [1, 1]} : vector<2x128xf32> to vector<2x32xf32>
    %cst_225 = arith.constant 1.000000e+00 : f32
    %682 = vector.broadcast %cst_225 : f32 to vector<2x32xf32>
    %683 = arith.addf %681, %682 : vector<2x32xf32>
    %cst_226 = arith.constant 5.000000e-01 : f32
    %684 = vector.broadcast %cst_226 : f32 to vector<2x32xf32>
    %685 = arith.mulf %684, %683 : vector<2x32xf32>
    %686 = vector.extract_strided_slice %680 {offsets = [0, 32], sizes = [2, 32], strides = [1, 1]} : vector<2x128xf32> to vector<2x32xf32>
    %cst_227 = arith.constant 1.000000e+00 : f32
    %687 = vector.broadcast %cst_227 : f32 to vector<2x32xf32>
    %688 = arith.addf %686, %687 : vector<2x32xf32>
    %cst_228 = arith.constant 5.000000e-01 : f32
    %689 = vector.broadcast %cst_228 : f32 to vector<2x32xf32>
    %690 = arith.mulf %689, %688 : vector<2x32xf32>
    %691 = vector.extract_strided_slice %680 {offsets = [0, 64], sizes = [2, 32], strides = [1, 1]} : vector<2x128xf32> to vector<2x32xf32>
    %692 = vector.extract_strided_slice %680 {offsets = [0, 96], sizes = [2, 32], strides = [1, 1]} : vector<2x128xf32> to vector<2x32xf32>
    %cst_229 = arith.constant 1.000000e+00 : f32
    %693 = vector.broadcast %cst_229 : f32 to vector<2x32xf32>
    %694 = arith.addf %692, %693 : vector<2x32xf32>
    %cst_230 = arith.constant 5.000000e-01 : f32
    %695 = vector.broadcast %cst_230 : f32 to vector<2x32xf32>
    %696 = arith.mulf %695, %694 : vector<2x32xf32>
    %697 = arith.mulf %690, %675 : vector<2x32xf32>
    %698 = arith.mulf %685, %691 : vector<2x32xf32>
    %699 = arith.addf %697, %698 : vector<2x32xf32>
    %700 = math.tanh %699 : vector<2x32xf32>
    %701 = arith.mulf %696, %700 : vector<2x32xf32>
    %cst_231 = arith.constant dense<0.000000e+00> : vector<2x128xf32>
    %702 = tpu.matmul %701, %3, %cst_231 {dimension_numbers = #tpu.dot_dimension_numbers<[1], [0], [0], [1], [0, 0, 1, 1], [], []>} : vector<2x32xf32>, vector<32x128xf32>, vector<2x128xf32> -> vector<2x128xf32>
    %703 = arith.addf %702, %10 : vector<2x128xf32>
    %704 = math.tanh %703 : vector<2x128xf32>
    %705 = vector.extract_strided_slice %704 {offsets = [0, 0], sizes = [2, 32], strides = [1, 1]} : vector<2x128xf32> to vector<2x32xf32>
    %cst_232 = arith.constant 1.000000e+00 : f32
    %706 = vector.broadcast %cst_232 : f32 to vector<2x32xf32>
    %707 = arith.addf %705, %706 : vector<2x32xf32>
    %cst_233 = arith.constant 5.000000e-01 : f32
    %708 = vector.broadcast %cst_233 : f32 to vector<2x32xf32>
    %709 = arith.mulf %708, %707 : vector<2x32xf32>
    %710 = vector.extract_strided_slice %704 {offsets = [0, 32], sizes = [2, 32], strides = [1, 1]} : vector<2x128xf32> to vector<2x32xf32>
    %cst_234 = arith.constant 1.000000e+00 : f32
    %711 = vector.broadcast %cst_234 : f32 to vector<2x32xf32>
    %712 = arith.addf %710, %711 : vector<2x32xf32>
    %cst_235 = arith.constant 5.000000e-01 : f32
    %713 = vector.broadcast %cst_235 : f32 to vector<2x32xf32>
    %714 = arith.mulf %713, %712 : vector<2x32xf32>
    %715 = vector.extract_strided_slice %704 {offsets = [0, 64], sizes = [2, 32], strides = [1, 1]} : vector<2x128xf32> to vector<2x32xf32>
    %716 = vector.extract_strided_slice %704 {offsets = [0, 96], sizes = [2, 32], strides = [1, 1]} : vector<2x128xf32> to vector<2x32xf32>
    %cst_236 = arith.constant 1.000000e+00 : f32
    %717 = vector.broadcast %cst_236 : f32 to vector<2x32xf32>
    %718 = arith.addf %716, %717 : vector<2x32xf32>
    %cst_237 = arith.constant 5.000000e-01 : f32
    %719 = vector.broadcast %cst_237 : f32 to vector<2x32xf32>
    %720 = arith.mulf %719, %718 : vector<2x32xf32>
    %721 = arith.mulf %714, %699 : vector<2x32xf32>
    %722 = arith.mulf %709, %715 : vector<2x32xf32>
    %723 = arith.addf %721, %722 : vector<2x32xf32>
    %724 = math.tanh %723 : vector<2x32xf32>
    %725 = arith.mulf %720, %724 : vector<2x32xf32>
    %cst_238 = arith.constant dense<0.000000e+00> : vector<2x128xf32>
    %726 = tpu.matmul %725, %3, %cst_238 {dimension_numbers = #tpu.dot_dimension_numbers<[1], [0], [0], [1], [0, 0, 1, 1], [], []>} : vector<2x32xf32>, vector<32x128xf32>, vector<2x128xf32> -> vector<2x128xf32>
    %727 = arith.addf %726, %10 : vector<2x128xf32>
    %728 = math.tanh %727 : vector<2x128xf32>
    %729 = vector.extract_strided_slice %728 {offsets = [0, 0], sizes = [2, 32], strides = [1, 1]} : vector<2x128xf32> to vector<2x32xf32>
    %cst_239 = arith.constant 1.000000e+00 : f32
    %730 = vector.broadcast %cst_239 : f32 to vector<2x32xf32>
    %731 = arith.addf %729, %730 : vector<2x32xf32>
    %cst_240 = arith.constant 5.000000e-01 : f32
    %732 = vector.broadcast %cst_240 : f32 to vector<2x32xf32>
    %733 = arith.mulf %732, %731 : vector<2x32xf32>
    %734 = vector.extract_strided_slice %728 {offsets = [0, 32], sizes = [2, 32], strides = [1, 1]} : vector<2x128xf32> to vector<2x32xf32>
    %cst_241 = arith.constant 1.000000e+00 : f32
    %735 = vector.broadcast %cst_241 : f32 to vector<2x32xf32>
    %736 = arith.addf %734, %735 : vector<2x32xf32>
    %cst_242 = arith.constant 5.000000e-01 : f32
    %737 = vector.broadcast %cst_242 : f32 to vector<2x32xf32>
    %738 = arith.mulf %737, %736 : vector<2x32xf32>
    %739 = vector.extract_strided_slice %728 {offsets = [0, 64], sizes = [2, 32], strides = [1, 1]} : vector<2x128xf32> to vector<2x32xf32>
    %740 = vector.extract_strided_slice %728 {offsets = [0, 96], sizes = [2, 32], strides = [1, 1]} : vector<2x128xf32> to vector<2x32xf32>
    %cst_243 = arith.constant 1.000000e+00 : f32
    %741 = vector.broadcast %cst_243 : f32 to vector<2x32xf32>
    %742 = arith.addf %740, %741 : vector<2x32xf32>
    %cst_244 = arith.constant 5.000000e-01 : f32
    %743 = vector.broadcast %cst_244 : f32 to vector<2x32xf32>
    %744 = arith.mulf %743, %742 : vector<2x32xf32>
    %745 = arith.mulf %738, %723 : vector<2x32xf32>
    %746 = arith.mulf %733, %739 : vector<2x32xf32>
    %747 = arith.addf %745, %746 : vector<2x32xf32>
    %748 = math.tanh %747 : vector<2x32xf32>
    %749 = arith.mulf %744, %748 : vector<2x32xf32>
    %cst_245 = arith.constant dense<0.000000e+00> : vector<2x128xf32>
    %750 = tpu.matmul %749, %3, %cst_245 {dimension_numbers = #tpu.dot_dimension_numbers<[1], [0], [0], [1], [0, 0, 1, 1], [], []>} : vector<2x32xf32>, vector<32x128xf32>, vector<2x128xf32> -> vector<2x128xf32>
    %751 = arith.addf %750, %10 : vector<2x128xf32>
    %752 = math.tanh %751 : vector<2x128xf32>
    %753 = vector.extract_strided_slice %752 {offsets = [0, 0], sizes = [2, 32], strides = [1, 1]} : vector<2x128xf32> to vector<2x32xf32>
    %cst_246 = arith.constant 1.000000e+00 : f32
    %754 = vector.broadcast %cst_246 : f32 to vector<2x32xf32>
    %755 = arith.addf %753, %754 : vector<2x32xf32>
    %cst_247 = arith.constant 5.000000e-01 : f32
    %756 = vector.broadcast %cst_247 : f32 to vector<2x32xf32>
    %757 = arith.mulf %756, %755 : vector<2x32xf32>
    %758 = vector.extract_strided_slice %752 {offsets = [0, 32], sizes = [2, 32], strides = [1, 1]} : vector<2x128xf32> to vector<2x32xf32>
    %cst_248 = arith.constant 1.000000e+00 : f32
    %759 = vector.broadcast %cst_248 : f32 to vector<2x32xf32>
    %760 = arith.addf %758, %759 : vector<2x32xf32>
    %cst_249 = arith.constant 5.000000e-01 : f32
    %761 = vector.broadcast %cst_249 : f32 to vector<2x32xf32>
    %762 = arith.mulf %761, %760 : vector<2x32xf32>
    %763 = vector.extract_strided_slice %752 {offsets = [0, 64], sizes = [2, 32], strides = [1, 1]} : vector<2x128xf32> to vector<2x32xf32>
    %764 = vector.extract_strided_slice %752 {offsets = [0, 96], sizes = [2, 32], strides = [1, 1]} : vector<2x128xf32> to vector<2x32xf32>
    %cst_250 = arith.constant 1.000000e+00 : f32
    %765 = vector.broadcast %cst_250 : f32 to vector<2x32xf32>
    %766 = arith.addf %764, %765 : vector<2x32xf32>
    %cst_251 = arith.constant 5.000000e-01 : f32
    %767 = vector.broadcast %cst_251 : f32 to vector<2x32xf32>
    %768 = arith.mulf %767, %766 : vector<2x32xf32>
    %769 = arith.mulf %762, %747 : vector<2x32xf32>
    %770 = arith.mulf %757, %763 : vector<2x32xf32>
    %771 = arith.addf %769, %770 : vector<2x32xf32>
    %772 = math.tanh %771 : vector<2x32xf32>
    %773 = arith.mulf %768, %772 : vector<2x32xf32>
    %774 = vector.shape_cast %461 : vector<2x32xf32> to vector<1x2x32xf32>
    %775 = vector.shape_cast %485 : vector<2x32xf32> to vector<1x2x32xf32>
    %776 = vector.shape_cast %509 : vector<2x32xf32> to vector<1x2x32xf32>
    %777 = vector.shape_cast %533 : vector<2x32xf32> to vector<1x2x32xf32>
    %778 = vector.shape_cast %557 : vector<2x32xf32> to vector<1x2x32xf32>
    %779 = vector.shape_cast %581 : vector<2x32xf32> to vector<1x2x32xf32>
    %780 = vector.shape_cast %605 : vector<2x32xf32> to vector<1x2x32xf32>
    %781 = vector.shape_cast %629 : vector<2x32xf32> to vector<1x2x32xf32>
    %782 = vector.shape_cast %653 : vector<2x32xf32> to vector<1x2x32xf32>
    %783 = vector.shape_cast %677 : vector<2x32xf32> to vector<1x2x32xf32>
    %784 = vector.shape_cast %701 : vector<2x32xf32> to vector<1x2x32xf32>
    %785 = vector.shape_cast %725 : vector<2x32xf32> to vector<1x2x32xf32>
    %786 = vector.shape_cast %749 : vector<2x32xf32> to vector<1x2x32xf32>
    %787 = vector.shape_cast %773 : vector<2x32xf32> to vector<1x2x32xf32>
    %788 = tpu.concatenate %774, %775, %776, %777, %778, %779, %780, %781, %782, %783, %784, %785, %786, %787 in 0 : vector<1x2x32xf32>, vector<1x2x32xf32>, vector<1x2x32xf32>, vector<1x2x32xf32>, vector<1x2x32xf32>, vector<1x2x32xf32>, vector<1x2x32xf32>, vector<1x2x32xf32>, vector<1x2x32xf32>, vector<1x2x32xf32>, vector<1x2x32xf32>, vector<1x2x32xf32>, vector<1x2x32xf32>, vector<1x2x32xf32> -> vector<14x2x32xf32>
    %789 = vector.shape_cast %788 : vector<14x2x32xf32> to vector<28x32xf32>
    %cst_252 = arith.constant dense<0.000000e+00> : vector<28x39xf32>
    %790 = tpu.matmul %789, %4, %cst_252 {dimension_numbers = #tpu.dot_dimension_numbers<[1], [0], [0], [1], [0, 0, 1, 1], [], []>} : vector<28x32xf32>, vector<32x39xf32>, vector<28x39xf32> -> vector<28x39xf32>
    %c0_253 = arith.constant 0 : index
    %c0_254 = arith.constant 0 : index
    %791 = vector.load %arg18[%c0_253, %c0_254] : memref<1x39xf32, #tpu.memory_space<vmem>>, vector<1x39xf32>
    %792 = vector.shape_cast %791 : vector<1x39xf32> to vector<1x39xf32>
    %793 = vector.broadcast %792 : vector<1x39xf32> to vector<28x39xf32>
    %794 = arith.addf %790, %793 : vector<28x39xf32>
    %c0_255 = arith.constant 0 : index
    %c0_256 = arith.constant 0 : index
    %795 = vector.load %arg19[%c0_255, %c0_256] : memref<28x39xf32, #tpu.memory_space<vmem>>, vector<28x39xf32>
    tpu.vector_store %arg19[%c0_255, %c0_256], %794 {strides = array<i32>} : memref<28x39xf32, #tpu.memory_space<vmem>>, vector<28x39xf32>,
    return
  }
}

</mosaic_0001>

<llo_original>
// kernel: vae_forward.1
$region0: #{vae_forward.1}
  #allocation0 [shape = 'u32[]', space=smem, size = 0x4, offset = 0x4, fixed_abs, tag = 'smem constant byte address 0x4 - core index']
  #allocation1 [shape = 'u32[144,128]{1,0:T(1,128)}', space=vmem, size = 0x12000, scoped, tag = 'internal scratch']
  %s0 = inlined_call_operand.vmem [shape: f32[8,2,39], index: 0, kind: input, shape index: {}]
  %s1 = inlined_call_operand.vmem [shape: f32[2,16], index: 1, kind: input, shape index: {}]
  %s2 = inlined_call_operand.vmem [shape: f32[39,128], index: 2, kind: input, shape index: {}]
  %s3 = inlined_call_operand.vmem [shape: f32[32,128], index: 3, kind: input, shape index: {}]
  %s4 = inlined_call_operand.vmem [shape: f32[1,128], index: 4, kind: input, shape index: {}]
  %s5 = inlined_call_operand.vmem [shape: f32[32,128], index: 5, kind: input, shape index: {}]
  %s6 = inlined_call_operand.vmem [shape: f32[32,128], index: 6, kind: input, shape index: {}]
  %s7 = inlined_call_operand.vmem [shape: f32[1,128], index: 7, kind: input, shape index: {}]
  %s8 = inlined_call_operand.vmem [shape: f32[32,32], index: 8, kind: input, shape index: {}]
  %s9 = inlined_call_operand.vmem [shape: f32[1,32], index: 9, kind: input, shape index: {}]
  %s10 = inlined_call_operand.vmem [shape: f32[16,32], index: 10, kind: input, shape index: {}]
  %s11 = inlined_call_operand.vmem [shape: f32[1,32], index: 11, kind: input, shape index: {}]
  %s12 = inlined_call_operand.vmem [shape: f32[39,128], index: 12, kind: input, shape index: {}]
  %s13 = inlined_call_operand.vmem [shape: f32[32,128], index: 13, kind: input, shape index: {}]
  %s14 = inlined_call_operand.vmem [shape: f32[1,128], index: 14, kind: input, shape index: {}]
  %s15 = inlined_call_operand.vmem [shape: f32[32,128], index: 15, kind: input, shape index: {}]
  %s16 = inlined_call_operand.vmem [shape: f32[1,128], index: 16, kind: input, shape index: {}]
  %s17 = inlined_call_operand.vmem [shape: f32[32,39], index: 17, kind: input, shape index: {}]
  %s18 = inlined_call_operand.vmem [shape: f32[1,39], index: 18, kind: input, shape index: {}]
  %s19 = inlined_call_operand.vmem [shape: f32[28,39], index: 19, kind: output, shape index: {0}]
  %s20 = inlined_call_operand.vmem [shape: f32[2,32], index: 20, kind: output, shape index: {1}]
  %21 = xla_tuple %s19, %s20
  %s22 = sld [smem:[#allocation0]]
  $region94: #{vae_forward.1} parent=0
    _
  %s24 = ssub.s32 1, %s22
  %s25 = scalar_select 0, %s24, %s22
  // Predicated region
  $region2: #{vae_forward.1} parent=0 // pred_check
    _
  $region3: #{vae_forward.1} parent=0 // pred_check_branch
    %27 = sbr.rel (0) target = $region5
  $region4: #{vae_forward.1} parent=0 // pred_region
    _
  $region5: #{vae_forward.1} parent=0 // pred_fallthru
    _
  // Predicated region
  $region6: #{vae_forward.1} parent=0 // pred_check
    _
  $region7: #{vae_forward.1} parent=0 // pred_check_branch
    %29 = sbr.rel (0) target = $region9
  $region8: #{vae_forward.1} parent=0 // pred_region
    _
  $region9: #{vae_forward.1} parent=0 // pred_fallthru
    _
  // Predicated region
  $region10: #{vae_forward.1} parent=0 // pred_check
    _
  $region11: #{vae_forward.1} parent=0 // pred_check_branch
    %31 = sbr.rel (0) target = $region13
  $region12: #{vae_forward.1} parent=0 // pred_region
    _
  $region13: #{vae_forward.1} parent=0 // pred_fallthru
    _
  // Predicated region
  $region14: #{vae_forward.1} parent=0 // pred_check
    _
  $region15: #{vae_forward.1} parent=0 // pred_check_branch
    %33 = sbr.rel (0) target = $region17
  $region16: #{vae_forward.1} parent=0 // pred_region
    _
  $region17: #{vae_forward.1} parent=0 // pred_fallthru
    _
  // Predicated region
  $region18: #{vae_forward.1} parent=0 // pred_check
    _
  $region19: #{vae_forward.1} parent=0 // pred_check_branch
    %35 = sbr.rel (0) target = $region21
  $region20: #{vae_forward.1} parent=0 // pred_region
    _
  $region21: #{vae_forward.1} parent=0 // pred_fallthru
    _
  // Predicated region
  $region22: #{vae_forward.1} parent=0 // pred_check
    _
  $region23: #{vae_forward.1} parent=0 // pred_check_branch
    %37 = sbr.rel (0) target = $region25
  $region24: #{vae_forward.1} parent=0 // pred_region
    _
  $region25: #{vae_forward.1} parent=0 // pred_fallthru
    _
  // Predicated region
  $region26: #{vae_forward.1} parent=0 // pred_check
    _
  $region27: #{vae_forward.1} parent=0 // pred_check_branch
    %39 = sbr.rel (0) target = $region29
  $region28: #{vae_forward.1} parent=0 // pred_region
    _
  $region29: #{vae_forward.1} parent=0 // pred_fallthru
    _
  // Predicated region
  $region30: #{vae_forward.1} parent=0 // pred_check
    _
  $region31: #{vae_forward.1} parent=0 // pred_check_branch
    %41 = sbr.rel (0) target = $region33
  $region32: #{vae_forward.1} parent=0 // pred_region
    _
  $region33: #{vae_forward.1} parent=0 // pred_fallthru
    _
  // Predicated region
  $region34: #{vae_forward.1} parent=0 // pred_check
    _
  $region35: #{vae_forward.1} parent=0 // pred_check_branch
    %43 = sbr.rel (0) target = $region37
  $region36: #{vae_forward.1} parent=0 // pred_region
    _
  $region37: #{vae_forward.1} parent=0 // pred_fallthru
    _
  // Predicated region
  $region38: #{vae_forward.1} parent=0 // pred_check
    _
  $region39: #{vae_forward.1} parent=0 // pred_check_branch
    %45 = sbr.rel (0) target = $region41
  $region40: #{vae_forward.1} parent=0 // pred_region
    _
  $region41: #{vae_forward.1} parent=0 // pred_fallthru
    _
  // Predicated region
  $region42: #{vae_forward.1} parent=0 // pred_check
    _
  $region43: #{vae_forward.1} parent=0 // pred_check_branch
    %47 = sbr.rel (0) target = $region45
  $region44: #{vae_forward.1} parent=0 // pred_region
    _
  $region45: #{vae_forward.1} parent=0 // pred_fallthru
    _
  // Predicated region
  $region46: #{vae_forward.1} parent=0 // pred_check
    _
  $region47: #{vae_forward.1} parent=0 // pred_check_branch
    %49 = sbr.rel (0) target = $region49
  $region48: #{vae_forward.1} parent=0 // pred_region
    _
  $region49: #{vae_forward.1} parent=0 // pred_fallthru
    _
  // Predicated region
  $region50: #{vae_forward.1} parent=0 // pred_check
    _
  $region51: #{vae_forward.1} parent=0 // pred_check_branch
    %51 = sbr.rel (0) target = $region53
  $region52: #{vae_forward.1} parent=0 // pred_region
    _
  $region53: #{vae_forward.1} parent=0 // pred_fallthru
    _
  // Predicated region
  $region54: #{vae_forward.1} parent=0 // pred_check
    _
  $region55: #{vae_forward.1} parent=0 // pred_check_branch
    %53 = sbr.rel (0) target = $region57
  $region56: #{vae_forward.1} parent=0 // pred_region
    _
  $region57: #{vae_forward.1} parent=0 // pred_fallthru
    _
  // Predicated region
  $region58: #{vae_forward.1} parent=0 // pred_check
    _
  $region59: #{vae_forward.1} parent=0 // pred_check_branch
    %55 = sbr.rel (0) target = $region61
  $region60: #{vae_forward.1} parent=0 // pred_region
    _
  $region61: #{vae_forward.1} parent=0 // pred_fallthru
    _
  // Predicated region
  $region62: #{vae_forward.1} parent=0 // pred_check
    _
  $region63: #{vae_forward.1} parent=0 // pred_check_branch
    %57 = sbr.rel (0) target = $region65
  $region64: #{vae_forward.1} parent=0 // pred_region
    _
  $region65: #{vae_forward.1} parent=0 // pred_fallthru
    _
  // Predicated region
  $region66: #{vae_forward.1} parent=0 // pred_check
    _
  $region67: #{vae_forward.1} parent=0 // pred_check_branch
    %59 = sbr.rel (0) target = $region69
  $region68: #{vae_forward.1} parent=0 // pred_region
    _
  $region69: #{vae_forward.1} parent=0 // pred_fallthru
    _
  // Predicated region
  $region70: #{vae_forward.1} parent=0 // pred_check
    _
  $region71: #{vae_forward.1} parent=0 // pred_check_branch
    %61 = sbr.rel (0) target = $region73
  $region72: #{vae_forward.1} parent=0 // pred_region
    _
  $region73: #{vae_forward.1} parent=0 // pred_fallthru
    _
  // Predicated region
  $region74: #{vae_forward.1} parent=0 // pred_check
    _
  $region75: #{vae_forward.1} parent=0 // pred_check_branch
    %63 = sbr.rel (0) target = $region77
  $region76: #{vae_forward.1} parent=0 // pred_region
    _
  $region77: #{vae_forward.1} parent=0 // pred_fallthru
    _
  %v64 = vld [vmem:[%s3] sm:$0xff]
  %v65 = vld [vmem:[%s3 + $0x8] sm:$0xff]
  %v66 = vld [vmem:[%s3 + $0x10] sm:$0xff]
  %v67 = vld [vmem:[%s3 + $0x18] sm:$0xff]
  %v68 = vld [vmem:[%s5] sm:$0xff]
  %v69 = vld [vmem:[%s5 + $0x8] sm:$0xff]
  %v70 = vld [vmem:[%s5 + $0x10] sm:$0xff]
  %v71 = vld [vmem:[%s5 + $0x18] sm:$0xff]
  %v72 = vld [vmem:[%s6] sm:$0xff]
  %v73 = vld [vmem:[%s6 + $0x8] sm:$0xff]
  %v74 = vld [vmem:[%s6 + $0x10] sm:$0xff]
  %v75 = vld [vmem:[%s6 + $0x18] sm:$0xff]
  %v76 = vld [vmem:[%s15] sm:$0xff]
  %v77 = vld [vmem:[%s15 + $0x8] sm:$0xff]
  %v78 = vld [vmem:[%s15 + $0x10] sm:$0xff]
  %v79 = vld [vmem:[%s15 + $0x18] sm:$0xff]
  %v80 = vld [vmem:[%s17] sm:$0xff]
  %v81 = vld [vmem:[%s17 + $0x8] sm:$0xff]
  %v82 = vld [vmem:[%s17 + $0x10] sm:$0xff]
  %v83 = vld [vmem:[%s17 + $0x18] sm:$0xff]
  %v84 = vld [vmem:[%s7] sm:$0x1]
  %v86 = vlaneseq
  %v87 = vshrl.u32 %v86, 7
  %v88 = vsub.s32 0, %v87
  %v89 = vrot.slane %v84, %v88
  %v91 = vld [vmem:[%s16] sm:$0x1]
  %v93 = vlaneseq
  %v94 = vshrl.u32 %v93, 7
  %v95 = vsub.s32 0, %v94
  %v96 = vrot.slane %v91, %v95
  %v98 = vld [vmem:[%s0] sm:$0x3]
  %v99 = vld [vmem:[%s0 + $0x2] sm:$0x3]
  %v100 = vld [vmem:[%s0 + $0x4] sm:$0x3]
  %v101 = vld [vmem:[%s0 + $0x6] sm:$0x3]
  %v102 = vld [vmem:[%s0 + $0x8] sm:$0x3]
  %v103 = vld [vmem:[%s0 + $0xa] sm:$0x3]
  %v104 = vld [vmem:[%s0 + $0xc] sm:$0x3]
  %v105 = vld [vmem:[%s0 + $0xe] sm:$0x3]
  %v106 = vld [vmem:[%s2] sm:$0xff]
  %v107 = vld [vmem:[%s2 + $0x8] sm:$0xff]
  %v108 = vld [vmem:[%s2 + $0x10] sm:$0xff]
  %v109 = vld [vmem:[%s2 + $0x18] sm:$0xff]
  %v110 = vld [vmem:[%s2 + $0x20] sm:$0x7f]
  %v111 = vld [vmem:[%s4] sm:$0x1]
  %v113 = vlaneseq
  %v114 = vshrl.u32 %v113, 7
  %v115 = vsub.s32 0, %v114
  %v116 = vrot.slane %v111, %v115
  %v126 = vcombine.low %v98, %v99
  %v127 = vcombine.low %v100, %v101
  %v129 = vunpack.c.l.s4 1983009808
  %v130 = vunpack.c.0.s8 %v129
  %v131 = vlaneseq
  %v132 = vshrl.u32 %v131, 7
  %v133 = vsub.s32 %v130, %v132
  %v134 = vrot.slane %v126, %v133
  %v136 = vunpack.c.l.s4 1983009808
  %v137 = vunpack.c.0.s8 %v136
  %v138 = vlaneseq
  %v139 = vshrl.u32 %v138, 7
  %v140 = vsub.s32 %v137, %v139
  %v141 = vrot.slane %v127, %v140
  %v142 = vcombine.low %v134, %v141
  %v143 = vcombine.low %v102, %v103
  %v144 = vcombine.low %v104, %v105
  %v146 = vunpack.c.l.s4 1983009808
  %v147 = vunpack.c.0.s8 %v146
  %v148 = vlaneseq
  %v149 = vshrl.u32 %v148, 7
  %v150 = vsub.s32 %v147, %v149
  %v151 = vrot.slane %v143, %v150
  %v153 = vunpack.c.l.s4 1983009808
  %v154 = vunpack.c.0.s8 %v153
  %v155 = vlaneseq
  %v156 = vshrl.u32 %v155, 7
  %v157 = vsub.s32 %v154, %v156
  %v158 = vrot.slane %v144, %v157
  %v159 = vcombine.low %v151, %v158
  %vm160 = vcmask 318464
  %v161 = vsel %vm160, %v142, 0
  %v163 = vsel %vm160, %v159, 0
  %vm165 = vcmask 1046528
  %v167 = vsel %vm165, %v110, 0
  %169 = vmatprep.subr.mxu0 0.0
  %170 = vmatpush1.msra.mxu0 %v106
  %171 = vmatprep.subr.mxu0 0.0
  %172 = vmatpush1.msra.mxu0 %v107
  %173 = vmatprep.subr.mxu0 0.0
  %174 = vmatpush1.msra.mxu0 %v108
  %175 = vmatprep.subr.mxu0 0.0
  %176 = vmatpush1.msra.mxu0 %v109
  %177 = vmatprep.subr.mxu0 0.0
  %178 = vmatpush1.msra.mxu0 %v167
  %179 = vmatprep.subr.mxu0 0.0
  %180 = vmatpush1.msra.mxu0 0.0
  %181 = vmatprep.subr.mxu0 0.0
  %182 = vmatpush1.msra.mxu0 0.0
  %183 = vmatprep.subr.mxu0 0.0
  %184 = vmatpush1.msra.mxu0 0.0
  %185 = vmatprep.subr.mxu0 0.0
  %186 = vmatpush1.msra.mxu0 0.0
  %187 = vmatprep.subr.mxu0 0.0
  %188 = vmatpush1.msra.mxu0 0.0
  %189 = vmatprep.subr.mxu0 0.0
  %190 = vmatpush1.msra.mxu0 0.0
  %191 = vmatprep.subr.mxu0 0.0
  %192 = vmatpush1.msra.mxu0 0.0
  %193 = vmatprep.subr.mxu0 0.0
  %194 = vmatpush1.msra.mxu0 0.0
  %195 = vmatprep.subr.mxu0 0.0
  %196 = vmatpush1.msra.mxu0 0.0
  %197 = vmatprep.subr.mxu0 0.0
  %198 = vmatpush1.msra.mxu0 0.0
  %199 = vmatprep.subr.mxu0 0.0
  %200 = vmatpush1.msra.mxu0 0.0
  %201 = vmatprep.subr.mxu0 0.0
  %202 = vmatpush1.msra.mxu0 0.0
  %203 = vmatprep.subr.mxu0 0.0
  %204 = vmatpush1.msra.mxu0 0.0
  %205 = vmatprep.subr.mxu0 0.0
  %206 = vmatpush1.msra.mxu0 0.0
  %207 = vmatprep.subr.mxu0 0.0
  %208 = vmatpush1.msra.mxu0 0.0
  %209 = vmatprep.subr.mxu0 0.0
  %210 = vmatpush1.msra.mxu0 0.0
  %211 = vmatprep.subr.mxu0 0.0
  %212 = vmatpush1.msra.mxu0 0.0
  %213 = vmatprep.subr.mxu0 0.0
  %214 = vmatpush1.msra.mxu0 0.0
  %215 = vmatprep.subr.mxu0 0.0
  %216 = vmatpush1.msra.mxu0 0.0
  %217 = vmatprep.subr.mxu0 0.0
  %218 = vmatpush1.msra.mxu0 0.0
  %219 = vmatprep.subr.mxu0 0.0
  %220 = vmatpush1.msra.mxu0 0.0
  %221 = vmatprep.subr.mxu0 0.0
  %222 = vmatpush1.msra.mxu0 0.0
  %223 = vmatprep.subr.mxu0 0.0
  %224 = vmatpush1.msra.mxu0 0.0
  %225 = vmatprep.subr.mxu0 0.0
  %226 = vmatpush1.msra.mxu0 0.0
  %227 = vmatprep.subr.mxu0 0.0
  %228 = vmatpush1.msra.mxu0 0.0
  %229 = vmatprep.subr.mxu0 0.0
  %230 = vmatpush1.msra.mxu0 0.0
  %231 = vmatprep.subr.mxu0 0.0
  %232 = vmatpush1.msra.mxu0 0.0
  %233 = vmatprep.mubr.f32.mxu0 0.0
  %234 = vmatmul.mubr.f32.gmra.mrb[0].mxu0 %v161
  %v235 = vpop.f32.mrb[0].mxu0
  %v236 = vadd.f32 %v116, %v235
  %v237 = vpop.f32.mrb[0].mxu0
  %238 = vmatprep.mubr.f32.mxu0 0.0
  %239 = vmatmul.mubr.f32.gmra.mrb[0].mxu0 %v163
  %v240 = vpop.f32.mrb[0].mxu0
  %v241 = vadd.f32 %v116, %v240
  %v242 = vpop.f32.mrb[0].mxu0
  %243 = vdwg.mxu0
  %v246 = vcombine.high %v236, %v236
  %v248 = vunpack.c.l.s4 1983009808
  %v249 = vunpack.c.0.s8 %v248
  %v250 = vlaneseq
  %v251 = vshrl.u32 %v250, 7
  %v252 = vsub.s32 %v249, %v251
  %v253 = vrot.slane %v236, %v252
  %v255 = vunpack.c.l.s4 1983009808
  %v256 = vunpack.c.0.s8 %v255
  %v257 = vlaneseq
  %v258 = vshrl.u32 %v257, 7
  %v259 = vsub.s32 %v256, %v258
  %v260 = vrot.slane %v246, %v259
  %v261 = vcombine.high %v253, %v253
  %v262 = vcombine.high %v260, %v260
  %v263 = vcombine.high %v241, %v241
  %v265 = vunpack.c.l.s4 1983009808
  %v266 = vunpack.c.0.s8 %v265
  %v267 = vlaneseq
  %v268 = vshrl.u32 %v267, 7
  %v269 = vsub.s32 %v266, %v268
  %v270 = vrot.slane %v241, %v269
  %v272 = vunpack.c.l.s4 1983009808
  %v273 = vunpack.c.0.s8 %v272
  %v274 = vlaneseq
  %v275 = vshrl.u32 %v274, 7
  %v276 = vsub.s32 %v273, %v275
  %v277 = vrot.slane %v263, %v276
  %v278 = vcombine.high %v270, %v270
  %v279 = vcombine.high %v277, %v277
  %v288 = vtanh.pop %v253
  %v289 = vadd.f32 %v288, 1.0
  %v290 = vmul.f32 %v289, 0.5
  %292 = vrot.lane.b32.xlu0 %v288, 64
  %v293 = vpop.permute.xlu0 %292
  %v295 = vmul.f32 %v290, %v293
  %v296 = vtanh.pop %v295
  %298 = vrot.lane.b32.xlu0 %v296, 96
  %v299 = vpop.permute.xlu0 %298
  %v301 = vmul.f32 %v290, %v299
  %v304 = vunpack.c.l.s4 1983009808
  %v305 = vunpack.c.0.s8 %v304
  %v306 = vlaneseq
  %v307 = vshrl.u32 %v306, 7
  %v308 = vsub.s32 %v305, %v307
  %v309 = vrot.slane %v301, %v308
  %310 = vrot.lane.b32.xlu0 %v309, 32
  %v311 = vpop.permute.xlu0 %310
  %vm312 = vcmask 261120
  %v313 = vsel %vm312, %v311, 0
  %315 = vmatprep.subr.mxu0 0.0
  %316 = vmatpush1.msra.mxu0 %v68
  %317 = vmatprep.subr.mxu0 0.0
  %318 = vmatpush1.msra.mxu0 %v69
  %319 = vmatprep.subr.mxu0 0.0
  %320 = vmatpush1.msra.mxu0 %v70
  %321 = vmatprep.subr.mxu0 0.0
  %322 = vmatpush1.msra.mxu0 %v71
  %323 = vmatprep.subr.mxu0 0.0
  %324 = vmatpush1.msra.mxu0 0.0
  %325 = vmatprep.subr.mxu0 0.0
  %326 = vmatpush1.msra.mxu0 0.0
  %327 = vmatprep.subr.mxu0 0.0
  %328 = vmatpush1.msra.mxu0 0.0
  %329 = vmatprep.subr.mxu0 0.0
  %330 = vmatpush1.msra.mxu0 0.0
  %331 = vmatprep.subr.mxu0 0.0
  %332 = vmatpush1.msra.mxu0 0.0
  %333 = vmatprep.subr.mxu0 0.0
  %334 = vmatpush1.msra.mxu0 0.0
  %335 = vmatprep.subr.mxu0 0.0
  %336 = vmatpush1.msra.mxu0 0.0
  %337 = vmatprep.subr.mxu0 0.0
  %338 = vmatpush1.msra.mxu0 0.0
  %339 = vmatprep.subr.mxu0 0.0
  %340 = vmatpush1.msra.mxu0 0.0
  %341 = vmatprep.subr.mxu0 0.0
  %342 = vmatpush1.msra.mxu0 0.0
  %343 = vmatprep.subr.mxu0 0.0
  %344 = vmatpush1.msra.mxu0 0.0
  %345 = vmatprep.subr.mxu0 0.0
  %346 = vmatpush1.msra.mxu0 0.0
  %347 = vmatprep.subr.mxu0 0.0
  %348 = vmatpush1.msra.mxu0 0.0
  %349 = vmatprep.subr.mxu0 0.0
  %350 = vmatpush1.msra.mxu0 0.0
  %351 = vmatprep.subr.mxu0 0.0
  %352 = vmatpush1.msra.mxu0 0.0
  %353 = vmatprep.subr.mxu0 0.0
  %354 = vmatpush1.msra.mxu0 0.0
  %355 = vmatprep.subr.mxu0 0.0
  %356 = vmatpush1.msra.mxu0 0.0
  %357 = vmatprep.subr.mxu0 0.0
  %358 = vmatpush1.msra.mxu0 0.0
  %359 = vmatprep.subr.mxu0 0.0
  %360 = vmatpush1.msra.mxu0 0.0
  %361 = vmatprep.subr.mxu0 0.0
  %362 = vmatpush1.msra.mxu0 0.0
  %363 = vmatprep.subr.mxu0 0.0
  %364 = vmatpush1.msra.mxu0 0.0
  %365 = vmatprep.subr.mxu0 0.0
  %366 = vmatpush1.msra.mxu0 0.0
  %367 = vmatprep.subr.mxu0 0.0
  %368 = vmatpush1.msra.mxu0 0.0
  %369 = vmatprep.subr.mxu0 0.0
  %370 = vmatpush1.msra.mxu0 0.0
  %371 = vmatprep.subr.mxu0 0.0
  %372 = vmatpush1.msra.mxu0 0.0
  %373 = vmatprep.subr.mxu0 0.0
  %374 = vmatpush1.msra.mxu0 0.0
  %375 = vmatprep.subr.mxu0 0.0
  %376 = vmatpush1.msra.mxu0 0.0
  %377 = vmatprep.subr.mxu0 0.0
  %378 = vmatpush1.msra.mxu0 0.0
  %379 = vmatprep.mubr.f32.mxu0 0.0
  %380 = vmatmul.mubr.f32.gmra.mrb[0].mxu0 %v313
  %v381 = vpop.f32.mrb[0].mxu0
  %v382 = vadd.f32 %v89, %v381
  %v383 = vpop.f32.mrb[0].mxu0
  %384 = vdwg.mxu0
  %v385 = vtanh.pop %v382
  %v386 = vadd.f32 %v385, 1.0
  %v387 = vmul.f32 %v386, 0.5
  %389 = vrot.lane.b32.xlu0 %v385, 64
  %v390 = vpop.permute.xlu0 %389
  %v392 = vmul.f32 %v387, %v390
  %v393 = vtanh.pop %v392
  %395 = vrot.lane.b32.xlu0 %v393, 96
  %v396 = vpop.permute.xlu0 %395
  %v398 = vmul.f32 %v387, %v396
  %399 = vmatprep.subr.mxu0 0.0
  %400 = vmatpush1.msra.mxu0 %v64
  %401 = vmatprep.subr.mxu0 0.0
  %402 = vmatpush1.msra.mxu0 %v65
  %403 = vmatprep.subr.mxu0 0.0
  %404 = vmatpush1.msra.mxu0 %v66
  %405 = vmatprep.subr.mxu0 0.0
  %406 = vmatpush1.msra.mxu0 %v67
  %407 = vmatprep.subr.mxu0 0.0
  %408 = vmatpush1.msra.mxu0 0.0
  %409 = vmatprep.subr.mxu0 0.0
  %410 = vmatpush1.msra.mxu0 0.0
  %411 = vmatprep.subr.mxu0 0.0
  %412 = vmatpush1.msra.mxu0 0.0
  %413 = vmatprep.subr.mxu0 0.0
  %414 = vmatpush1.msra.mxu0 0.0
  %415 = vmatprep.subr.mxu0 0.0
  %416 = vmatpush1.msra.mxu0 0.0
  %417 = vmatprep.subr.mxu0 0.0
  %418 = vmatpush1.msra.mxu0 0.0
  %419 = vmatprep.subr.mxu0 0.0
  %420 = vmatpush1.msra.mxu0 0.0
  %421 = vmatprep.subr.mxu0 0.0
  %422 = vmatpush1.msra.mxu0 0.0
  %423 = vmatprep.subr.mxu0 0.0
  %424 = vmatpush1.msra.mxu0 0.0
  %425 = vmatprep.subr.mxu0 0.0
  %426 = vmatpush1.msra.mxu0 0.0
  %427 = vmatprep.subr.mxu0 0.0
  %428 = vmatpush1.msra.mxu0 0.0
  %429 = vmatprep.subr.mxu0 0.0
  %430 = vmatpush1.msra.mxu0 0.0
  %431 = vmatprep.subr.mxu0 0.0
  %432 = vmatpush1.msra.mxu0 0.0
  %433 = vmatprep.subr.mxu0 0.0
  %434 = vmatpush1.msra.mxu0 0.0
  %435 = vmatprep.subr.mxu0 0.0
  %436 = vmatpush1.msra.mxu0 0.0
  %437 = vmatprep.subr.mxu0 0.0
  %438 = vmatpush1.msra.mxu0 0.0
  %439 = vmatprep.subr.mxu0 0.0
  %440 = vmatpush1.msra.mxu0 0.0
  %441 = vmatprep.subr.mxu0 0.0
  %442 = vmatpush1.msra.mxu0 0.0
  %443 = vmatprep.subr.mxu0 0.0
  %444 = vmatpush1.msra.mxu0 0.0
  %445 = vmatprep.subr.mxu0 0.0
  %446 = vmatpush1.msra.mxu0 0.0
  %447 = vmatprep.subr.mxu0 0.0
  %448 = vmatpush1.msra.mxu0 0.0
  %449 = vmatprep.subr.mxu0 0.0
  %450 = vmatpush1.msra.mxu0 0.0
  %451 = vmatprep.subr.mxu0 0.0
  %452 = vmatpush1.msra.mxu0 0.0
  %453 = vmatprep.subr.mxu0 0.0
  %454 = vmatpush1.msra.mxu0 0.0
  %455 = vmatprep.subr.mxu0 0.0
  %456 = vmatpush1.msra.mxu0 0.0
  %457 = vmatprep.subr.mxu0 0.0
  %458 = vmatpush1.msra.mxu0 0.0
  %459 = vmatprep.subr.mxu0 0.0
  %460 = vmatpush1.msra.mxu0 0.0
  %461 = vmatprep.subr.mxu0 0.0
  %462 = vmatpush1.msra.mxu0 0.0
  %463 = vmatprep.mubr.f32.mxu0 0.0
  %464 = vmatmul.mubr.f32.gmra.mrb[0].mxu0 %v313
  %v465 = vpop.f32.mrb[0].mxu0
  %v466 = vadd.f32 0.0, %v465
  %v467 = vpop.f32.mrb[0].mxu0
  %468 = vdwg.mxu0
  %v469 = vadd.f32 %v261, %v466
  %v470 = vtanh.pop %v469
  %v471 = vadd.f32 %v470, 1.0
  %v472 = vmul.f32 %v471, 0.5
  %474 = vrot.lane.b32.xlu0 %v295, 32
  %v475 = vpop.permute.xlu0 %474
  %v477 = vmul.f32 %v472, %v475
  %479 = vrot.lane.b32.xlu0 %v470, 64
  %v480 = vpop.permute.xlu0 %479
  %v482 = vmul.f32 %v472, %v480
  %484 = vrot.lane.b32.xlu0 %v482, 32
  %v485 = vpop.permute.xlu0 %484
  %v487 = vadd.f32 %v477, %v485
  %v488 = vtanh.pop %v487
  %490 = vrot.lane.b32.xlu0 %v488, 64
  %v491 = vpop.permute.xlu0 %490
  %v493 = vmul.f32 %v472, %v491
  %495 = vrot.lane.b32.xlu0 %v398, 32
  %v496 = vpop.permute.xlu0 %495
  %v497 = vsel %vm312, %v496, 0
  %499 = vmatprep.subr.mxu0 0.0
  %500 = vmatpush1.msra.mxu0 %v72
  %501 = vmatprep.subr.mxu0 0.0
  %502 = vmatpush1.msra.mxu0 %v73
  %503 = vmatprep.subr.mxu0 0.0
  %504 = vmatpush1.msra.mxu0 %v74
  %505 = vmatprep.subr.mxu0 0.0
  %506 = vmatpush1.msra.mxu0 %v75
  %507 = vmatprep.subr.mxu0 0.0
  %508 = vmatpush1.msra.mxu0 0.0
  %509 = vmatprep.subr.mxu0 0.0
  %510 = vmatpush1.msra.mxu0 0.0
  %511 = vmatprep.subr.mxu0 0.0
  %512 = vmatpush1.msra.mxu0 0.0
  %513 = vmatprep.subr.mxu0 0.0
  %514 = vmatpush1.msra.mxu0 0.0
  %515 = vmatprep.subr.mxu0 0.0
  %516 = vmatpush1.msra.mxu0 0.0
  %517 = vmatprep.subr.mxu0 0.0
  %518 = vmatpush1.msra.mxu0 0.0
  %519 = vmatprep.subr.mxu0 0.0
  %520 = vmatpush1.msra.mxu0 0.0
  %521 = vmatprep.subr.mxu0 0.0
  %522 = vmatpush1.msra.mxu0 0.0
  %523 = vmatprep.subr.mxu0 0.0
  %524 = vmatpush1.msra.mxu0 0.0
  %525 = vmatprep.subr.mxu0 0.0
  %526 = vmatpush1.msra.mxu0 0.0
  %527 = vmatprep.subr.mxu0 0.0
  %528 = vmatpush1.msra.mxu0 0.0
  %529 = vmatprep.subr.mxu0 0.0
  %530 = vmatpush1.msra.mxu0 0.0
  %531 = vmatprep.subr.mxu0 0.0
  %532 = vmatpush1.msra.mxu0 0.0
  %533 = vmatprep.subr.mxu0 0.0
  %534 = vmatpush1.msra.mxu0 0.0
  %535 = vmatprep.subr.mxu0 0.0
  %536 = vmatpush1.msra.mxu0 0.0
  %537 = vmatprep.subr.mxu0 0.0
  %538 = vmatpush1.msra.mxu0 0.0
  %539 = vmatprep.subr.mxu0 0.0
  %540 = vmatpush1.msra.mxu0 0.0
  %541 = vmatprep.subr.mxu0 0.0
  %542 = vmatpush1.msra.mxu0 0.0
  %543 = vmatprep.subr.mxu0 0.0
  %544 = vmatpush1.msra.mxu0 0.0
  %545 = vmatprep.subr.mxu0 0.0
  %546 = vmatpush1.msra.mxu0 0.0
  %547 = vmatprep.subr.mxu0 0.0
  %548 = vmatpush1.msra.mxu0 0.0
  %549 = vmatprep.subr.mxu0 0.0
  %550 = vmatpush1.msra.mxu0 0.0
  %551 = vmatprep.subr.mxu0 0.0
  %552 = vmatpush1.msra.mxu0 0.0
  %553 = vmatprep.subr.mxu0 0.0
  %554 = vmatpush1.msra.mxu0 0.0
  %555 = vmatprep.subr.mxu0 0.0
  %556 = vmatpush1.msra.mxu0 0.0
  %557 = vmatprep.subr.mxu0 0.0
  %558 = vmatpush1.msra.mxu0 0.0
  %559 = vmatprep.subr.mxu0 0.0
  %560 = vmatpush1.msra.mxu0 0.0
  %561 = vmatprep.subr.mxu0 0.0
  %562 = vmatpush1.msra.mxu0 0.0
  %563 = vmatprep.mubr.f32.mxu0 0.0
  %564 = vmatmul.mubr.f32.gmra.mrb[0].mxu0 %v497
  %v565 = vpop.f32.mrb[0].mxu0
  %v566 = vadd.f32 0.0, %v565
  %v567 = vpop.f32.mrb[0].mxu0
  %568 = vdwg.mxu0
  %v571 = vunpack.c.l.s4 1983009808
  %v572 = vunpack.c.0.s8 %v571
  %v573 = vlaneseq
  %v574 = vshrl.u32 %v573, 7
  %v575 = vsub.s32 %v572, %v574
  %v576 = vrot.slane %v493, %v575
  %577 = vrot.lane.b32.xlu0 %v576, 32
  %v578 = vpop.permute.xlu0 %577
  %v579 = vsel %vm312, %v578, 0
  %581 = vmatprep.subr.mxu0 0.0
  %582 = vmatpush1.msra.mxu0 %v68
  %583 = vmatprep.subr.mxu0 0.0
  %584 = vmatpush1.msra.mxu0 %v69
  %585 = vmatprep.subr.mxu0 0.0
  %586 = vmatpush1.msra.mxu0 %v70
  %587 = vmatprep.subr.mxu0 0.0
  %588 = vmatpush1.msra.mxu0 %v71
  %589 = vmatprep.subr.mxu0 0.0
  %590 = vmatpush1.msra.mxu0 0.0
  %591 = vmatprep.subr.mxu0 0.0
  %592 = vmatpush1.msra.mxu0 0.0
  %593 = vmatprep.subr.mxu0 0.0
  %594 = vmatpush1.msra.mxu0 0.0
  %595 = vmatprep.subr.mxu0 0.0
  %596 = vmatpush1.msra.mxu0 0.0
  %597 = vmatprep.subr.mxu0 0.0
  %598 = vmatpush1.msra.mxu0 0.0
  %599 = vmatprep.subr.mxu0 0.0
  %600 = vmatpush1.msra.mxu0 0.0
  %601 = vmatprep.subr.mxu0 0.0
  %602 = vmatpush1.msra.mxu0 0.0
  %603 = vmatprep.subr.mxu0 0.0
  %604 = vmatpush1.msra.mxu0 0.0
  %605 = vmatprep.subr.mxu0 0.0
  %606 = vmatpush1.msra.mxu0 0.0
  %607 = vmatprep.subr.mxu0 0.0
  %608 = vmatpush1.msra.mxu0 0.0
  %609 = vmatprep.subr.mxu0 0.0
  %610 = vmatpush1.msra.mxu0 0.0
  %611 = vmatprep.subr.mxu0 0.0
  %612 = vmatpush1.msra.mxu0 0.0
  %613 = vmatprep.subr.mxu0 0.0
  %614 = vmatpush1.msra.mxu0 0.0
  %615 = vmatprep.subr.mxu0 0.0
  %616 = vmatpush1.msra.mxu0 0.0
  %617 = vmatprep.subr.mxu0 0.0
  %618 = vmatpush1.msra.mxu0 0.0
  %619 = vmatprep.subr.mxu0 0.0
  %620 = vmatpush1.msra.mxu0 0.0
  %621 = vmatprep.subr.mxu0 0.0
  %622 = vmatpush1.msra.mxu0 0.0
  %623 = vmatprep.subr.mxu0 0.0
  %624 = vmatpush1.msra.mxu0 0.0
  %625 = vmatprep.subr.mxu0 0.0
  %626 = vmatpush1.msra.mxu0 0.0
  %627 = vmatprep.subr.mxu0 0.0
  %628 = vmatpush1.msra.mxu0 0.0
  %629 = vmatprep.subr.mxu0 0.0
  %630 = vmatpush1.msra.mxu0 0.0
  %631 = vmatprep.subr.mxu0 0.0
  %632 = vmatpush1.msra.mxu0 0.0
  %633 = vmatprep.subr.mxu0 0.0
  %634 = vmatpush1.msra.mxu0 0.0
  %635 = vmatprep.subr.mxu0 0.0
  %636 = vmatpush1.msra.mxu0 0.0
  %637 = vmatprep.subr.mxu0 0.0
  %638 = vmatpush1.msra.mxu0 0.0
  %639 = vmatprep.subr.mxu0 0.0
  %640 = vmatpush1.msra.mxu0 0.0
  %641 = vmatprep.subr.mxu0 0.0
  %642 = vmatpush1.msra.mxu0 0.0
  %643 = vmatprep.subr.mxu0 0.0
  %644 = vmatpush1.msra.mxu0 0.0
  %645 = vmatprep.mubr.f32.mxu0 0.0
  %646 = vmatmul.mubr.f32.gmra.mrb[0].mxu0 %v579
  %v647 = vpop.f32.mrb[0].mxu0
  %v648 = vadd.f32 %v566, %v647
  %v649 = vpop.f32.mrb[0].mxu0
  %650 = vdwg.mxu0
  %v651 = vadd.f32 %v648, %v89
  %v652 = vtanh.pop %v651
  %v653 = vadd.f32 %v652, 1.0
  %v654 = vmul.f32 %v653, 0.5
  %656 = vrot.lane.b32.xlu0 %v392, 32
  %v657 = vpop.permute.xlu0 %656
  %v659 = vmul.f32 %v654, %v657
  %661 = vrot.lane.b32.xlu0 %v652, 64
  %v662 = vpop.permute.xlu0 %661
  %v664 = vmul.f32 %v654, %v662
  %666 = vrot.lane.b32.xlu0 %v664, 32
  %v667 = vpop.permute.xlu0 %666
  %v669 = vadd.f32 %v659, %v667
  %v670 = vtanh.pop %v669
  %672 = vrot.lane.b32.xlu0 %v670, 64
  %v673 = vpop.permute.xlu0 %672
  %v675 = vmul.f32 %v654, %v673
  %676 = vmatprep.subr.mxu0 0.0
  %677 = vmatpush1.msra.mxu0 %v64
  %678 = vmatprep.subr.mxu0 0.0
  %679 = vmatpush1.msra.mxu0 %v65
  %680 = vmatprep.subr.mxu0 0.0
  %681 = vmatpush1.msra.mxu0 %v66
  %682 = vmatprep.subr.mxu0 0.0
  %683 = vmatpush1.msra.mxu0 %v67
  %684 = vmatprep.subr.mxu0 0.0
  %685 = vmatpush1.msra.mxu0 0.0
  %686 = vmatprep.subr.mxu0 0.0
  %687 = vmatpush1.msra.mxu0 0.0
  %688 = vmatprep.subr.mxu0 0.0
  %689 = vmatpush1.msra.mxu0 0.0
  %690 = vmatprep.subr.mxu0 0.0
  %691 = vmatpush1.msra.mxu0 0.0
  %692 = vmatprep.subr.mxu0 0.0
  %693 = vmatpush1.msra.mxu0 0.0
  %694 = vmatprep.subr.mxu0 0.0
  %695 = vmatpush1.msra.mxu0 0.0
  %696 = vmatprep.subr.mxu0 0.0
  %697 = vmatpush1.msra.mxu0 0.0
  %698 = vmatprep.subr.mxu0 0.0
  %699 = vmatpush1.msra.mxu0 0.0
  %700 = vmatprep.subr.mxu0 0.0
  %701 = vmatpush1.msra.mxu0 0.0
  %702 = vmatprep.subr.mxu0 0.0
  %703 = vmatpush1.msra.mxu0 0.0
  %704 = vmatprep.subr.mxu0 0.0
  %705 = vmatpush1.msra.mxu0 0.0
  %706 = vmatprep.subr.mxu0 0.0
  %707 = vmatpush1.msra.mxu0 0.0
  %708 = vmatprep.subr.mxu0 0.0
  %709 = vmatpush1.msra.mxu0 0.0
  %710 = vmatprep.subr.mxu0 0.0
  %711 = vmatpush1.msra.mxu0 0.0
  %712 = vmatprep.subr.mxu0 0.0
  %713 = vmatpush1.msra.mxu0 0.0
  %714 = vmatprep.subr.mxu0 0.0
  %715 = vmatpush1.msra.mxu0 0.0
  %716 = vmatprep.subr.mxu0 0.0
  %717 = vmatpush1.msra.mxu0 0.0
  %718 = vmatprep.subr.mxu0 0.0
  %719 = vmatpush1.msra.mxu0 0.0
  %720 = vmatprep.subr.mxu0 0.0
  %721 = vmatpush1.msra.mxu0 0.0
  %722 = vmatprep.subr.mxu0 0.0
  %723 = vmatpush1.msra.mxu0 0.0
  %724 = vmatprep.subr.mxu0 0.0
  %725 = vmatpush1.msra.mxu0 0.0
  %726 = vmatprep.subr.mxu0 0.0
  %727 = vmatpush1.msra.mxu0 0.0
  %728 = vmatprep.subr.mxu0 0.0
  %729 = vmatpush1.msra.mxu0 0.0
  %730 = vmatprep.subr.mxu0 0.0
  %731 = vmatpush1.msra.mxu0 0.0
  %732 = vmatprep.subr.mxu0 0.0
  %733 = vmatpush1.msra.mxu0 0.0
  %734 = vmatprep.subr.mxu0 0.0
  %735 = vmatpush1.msra.mxu0 0.0
  %736 = vmatprep.subr.mxu0 0.0
  %737 = vmatpush1.msra.mxu0 0.0
  %738 = vmatprep.subr.mxu0 0.0
  %739 = vmatpush1.msra.mxu0 0.0
  %740 = vmatprep.mubr.f32.mxu0 0.0
  %741 = vmatmul.mubr.f32.gmra.mrb[0].mxu0 %v579
  %v742 = vpop.f32.mrb[0].mxu0
  %v743 = vadd.f32 0.0, %v742
  %v744 = vpop.f32.mrb[0].mxu0
  %745 = vdwg.mxu0
  %v746 = vadd.f32 %v260, %v743
  %v747 = vtanh.pop %v746
  %v748 = vadd.f32 %v747, 1.0
  %v749 = vmul.f32 %v748, 0.5
  %v750 = vmul.f32 %v749, %v487
  %752 = vrot.lane.b32.xlu0 %v747, 64
  %v753 = vpop.permute.xlu0 %752
  %v755 = vmul.f32 %v749, %v753
  %757 = vrot.lane.b32.xlu0 %v755, 32
  %v758 = vpop.permute.xlu0 %757
  %v760 = vadd.f32 %v750, %v758
  %v761 = vtanh.pop %v760
  %763 = vrot.lane.b32.xlu0 %v761, 64
  %v764 = vpop.permute.xlu0 %763
  %v766 = vmul.f32 %v749, %v764
  %768 = vrot.lane.b32.xlu0 %v675, 32
  %v769 = vpop.permute.xlu0 %768
  %v770 = vsel %vm312, %v769, 0
  %772 = vmatprep.subr.mxu0 0.0
  %773 = vmatpush1.msra.mxu0 %v72
  %774 = vmatprep.subr.mxu0 0.0
  %775 = vmatpush1.msra.mxu0 %v73
  %776 = vmatprep.subr.mxu0 0.0
  %777 = vmatpush1.msra.mxu0 %v74
  %778 = vmatprep.subr.mxu0 0.0
  %779 = vmatpush1.msra.mxu0 %v75
  %780 = vmatprep.subr.mxu0 0.0
  %781 = vmatpush1.msra.mxu0 0.0
  %782 = vmatprep.subr.mxu0 0.0
  %783 = vmatpush1.msra.mxu0 0.0
  %784 = vmatprep.subr.mxu0 0.0
  %785 = vmatpush1.msra.mxu0 0.0
  %786 = vmatprep.subr.mxu0 0.0
  %787 = vmatpush1.msra.mxu0 0.0
  %788 = vmatprep.subr.mxu0 0.0
  %789 = vmatpush1.msra.mxu0 0.0
  %790 = vmatprep.subr.mxu0 0.0
  %791 = vmatpush1.msra.mxu0 0.0
  %792 = vmatprep.subr.mxu0 0.0
  %793 = vmatpush1.msra.mxu0 0.0
  %794 = vmatprep.subr.mxu0 0.0
  %795 = vmatpush1.msra.mxu0 0.0
  %796 = vmatprep.subr.mxu0 0.0
  %797 = vmatpush1.msra.mxu0 0.0
  %798 = vmatprep.subr.mxu0 0.0
  %799 = vmatpush1.msra.mxu0 0.0
  %800 = vmatprep.subr.mxu0 0.0
  %801 = vmatpush1.msra.mxu0 0.0
  %802 = vmatprep.subr.mxu0 0.0
  %803 = vmatpush1.msra.mxu0 0.0
  %804 = vmatprep.subr.mxu0 0.0
  %805 = vmatpush1.msra.mxu0 0.0
  %806 = vmatprep.subr.mxu0 0.0
  %807 = vmatpush1.msra.mxu0 0.0
  %808 = vmatprep.subr.mxu0 0.0
  %809 = vmatpush1.msra.mxu0 0.0
  %810 = vmatprep.subr.mxu0 0.0
  %811 = vmatpush1.msra.mxu0 0.0
  %812 = vmatprep.subr.mxu0 0.0
  %813 = vmatpush1.msra.mxu0 0.0
  %814 = vmatprep.subr.mxu0 0.0
  %815 = vmatpush1.msra.mxu0 0.0
  %816 = vmatprep.subr.mxu0 0.0
  %817 = vmatpush1.msra.mxu0 0.0
  %818 = vmatprep.subr.mxu0 0.0
  %819 = vmatpush1.msra.mxu0 0.0
  %820 = vmatprep.subr.mxu0 0.0
  %821 = vmatpush1.msra.mxu0 0.0
  %822 = vmatprep.subr.mxu0 0.0
  %823 = vmatpush1.msra.mxu0 0.0
  %824 = vmatprep.subr.mxu0 0.0
  %825 = vmatpush1.msra.mxu0 0.0
  %826 = vmatprep.subr.mxu0 0.0
  %827 = vmatpush1.msra.mxu0 0.0
  %828 = vmatprep.subr.mxu0 0.0
  %829 = vmatpush1.msra.mxu0 0.0
  %830 = vmatprep.subr.mxu0 0.0
  %831 = vmatpush1.msra.mxu0 0.0
  %832 = vmatprep.subr.mxu0 0.0
  %833 = vmatpush1.msra.mxu0 0.0
  %834 = vmatprep.subr.mxu0 0.0
  %835 = vmatpush1.msra.mxu0 0.0
  %836 = vmatprep.mubr.f32.mxu0 0.0
  %837 = vmatmul.mubr.f32.gmra.mrb[0].mxu0 %v770
  %v838 = vpop.f32.mrb[0].mxu0
  %v839 = vadd.f32 0.0, %v838
  %v840 = vpop.f32.mrb[0].mxu0
  %841 = vdwg.mxu0
  %v844 = vunpack.c.l.s4 1983009808
  %v845 = vunpack.c.0.s8 %v844
  %v846 = vlaneseq
  %v847 = vshrl.u32 %v846, 7
  %v848 = vsub.s32 %v845, %v847
  %v849 = vrot.slane %v766, %v848
  %850 = vrot.lane.b32.xlu0 %v849, 32
  %v851 = vpop.permute.xlu0 %850
  %v852 = vsel %vm312, %v851, 0
  %854 = vmatprep.subr.mxu0 0.0
  %855 = vmatpush1.msra.mxu0 %v68
  %856 = vmatprep.subr.mxu0 0.0
  %857 = vmatpush1.msra.mxu0 %v69
  %858 = vmatprep.subr.mxu0 0.0
  %859 = vmatpush1.msra.mxu0 %v70
  %860 = vmatprep.subr.mxu0 0.0
  %861 = vmatpush1.msra.mxu0 %v71
  %862 = vmatprep.subr.mxu0 0.0
  %863 = vmatpush1.msra.mxu0 0.0
  %864 = vmatprep.subr.mxu0 0.0
  %865 = vmatpush1.msra.mxu0 0.0
  %866 = vmatprep.subr.mxu0 0.0
  %867 = vmatpush1.msra.mxu0 0.0
  %868 = vmatprep.subr.mxu0 0.0
  %869 = vmatpush1.msra.mxu0 0.0
  %870 = vmatprep.subr.mxu0 0.0
  %871 = vmatpush1.msra.mxu0 0.0
  %872 = vmatprep.subr.mxu0 0.0
  %873 = vmatpush1.msra.mxu0 0.0
  %874 = vmatprep.subr.mxu0 0.0
  %875 = vmatpush1.msra.mxu0 0.0
  %876 = vmatprep.subr.mxu0 0.0
  %877 = vmatpush1.msra.mxu0 0.0
  %878 = vmatprep.subr.mxu0 0.0
  %879 = vmatpush1.msra.mxu0 0.0
  %880 = vmatprep.subr.mxu0 0.0
  %881 = vmatpush1.msra.mxu0 0.0
  %882 = vmatprep.subr.mxu0 0.0
  %883 = vmatpush1.msra.mxu0 0.0
  %884 = vmatprep.subr.mxu0 0.0
  %885 = vmatpush1.msra.mxu0 0.0
  %886 = vmatprep.subr.mxu0 0.0
  %887 = vmatpush1.msra.mxu0 0.0
  %888 = vmatprep.subr.mxu0 0.0
  %889 = vmatpush1.msra.mxu0 0.0
  %890 = vmatprep.subr.mxu0 0.0
  %891 = vmatpush1.msra.mxu0 0.0
  %892 = vmatprep.subr.mxu0 0.0
  %893 = vmatpush1.msra.mxu0 0.0
  %894 = vmatprep.subr.mxu0 0.0
  %895 = vmatpush1.msra.mxu0 0.0
  %896 = vmatprep.subr.mxu0 0.0
  %897 = vmatpush1.msra.mxu0 0.0
  %898 = vmatprep.subr.mxu0 0.0
  %899 = vmatpush1.msra.mxu0 0.0
  %900 = vmatprep.subr.mxu0 0.0
  %901 = vmatpush1.msra.mxu0 0.0
  %902 = vmatprep.subr.mxu0 0.0
  %903 = vmatpush1.msra.mxu0 0.0
  %904 = vmatprep.subr.mxu0 0.0
  %905 = vmatpush1.msra.mxu0 0.0
  %906 = vmatprep.subr.mxu0 0.0
  %907 = vmatpush1.msra.mxu0 0.0
  %908 = vmatprep.subr.mxu0 0.0
  %909 = vmatpush1.msra.mxu0 0.0
  %910 = vmatprep.subr.mxu0 0.0
  %911 = vmatpush1.msra.mxu0 0.0
  %912 = vmatprep.subr.mxu0 0.0
  %913 = vmatpush1.msra.mxu0 0.0
  %914 = vmatprep.subr.mxu0 0.0
  %915 = vmatpush1.msra.mxu0 0.0
  %916 = vmatprep.subr.mxu0 0.0
  %917 = vmatpush1.msra.mxu0 0.0
  %918 = vmatprep.mubr.f32.mxu0 0.0
  %919 = vmatmul.mubr.f32.gmra.mrb[0].mxu0 %v852
  %v920 = vpop.f32.mrb[0].mxu0
  %v921 = vadd.f32 %v839, %v920
  %v922 = vpop.f32.mrb[0].mxu0
  %923 = vdwg.mxu0
  %v924 = vadd.f32 %v921, %v89
  %v925 = vtanh.pop %v924
  %v926 = vadd.f32 %v925, 1.0
  %v927 = vmul.f32 %v926, 0.5
  %v928 = vmul.f32 %v927, %v669
  %930 = vrot.lane.b32.xlu0 %v925, 64
  %v931 = vpop.permute.xlu0 %930
  %v933 = vmul.f32 %v927, %v931
  %935 = vrot.lane.b32.xlu0 %v933, 32
  %v936 = vpop.permute.xlu0 %935
  %v938 = vadd.f32 %v928, %v936
  %v939 = vtanh.pop %v938
  %941 = vrot.lane.b32.xlu0 %v939, 64
  %v942 = vpop.permute.xlu0 %941
  %v944 = vmul.f32 %v927, %v942
  %945 = vmatprep.subr.mxu0 0.0
  %946 = vmatpush1.msra.mxu0 %v64
  %947 = vmatprep.subr.mxu0 0.0
  %948 = vmatpush1.msra.mxu0 %v65
  %949 = vmatprep.subr.mxu0 0.0
  %950 = vmatpush1.msra.mxu0 %v66
  %951 = vmatprep.subr.mxu0 0.0
  %952 = vmatpush1.msra.mxu0 %v67
  %953 = vmatprep.subr.mxu0 0.0
  %954 = vmatpush1.msra.mxu0 0.0
  %955 = vmatprep.subr.mxu0 0.0
  %956 = vmatpush1.msra.mxu0 0.0
  %957 = vmatprep.subr.mxu0 0.0
  %958 = vmatpush1.msra.mxu0 0.0
  %959 = vmatprep.subr.mxu0 0.0
  %960 = vmatpush1.msra.mxu0 0.0
  %961 = vmatprep.subr.mxu0 0.0
  %962 = vmatpush1.msra.mxu0 0.0
  %963 = vmatprep.subr.mxu0 0.0
  %964 = vmatpush1.msra.mxu0 0.0
  %965 = vmatprep.subr.mxu0 0.0
  %966 = vmatpush1.msra.mxu0 0.0
  %967 = vmatprep.subr.mxu0 0.0
  %968 = vmatpush1.msra.mxu0 0.0
  %969 = vmatprep.subr.mxu0 0.0
  %970 = vmatpush1.msra.mxu0 0.0
  %971 = vmatprep.subr.mxu0 0.0
  %972 = vmatpush1.msra.mxu0 0.0
  %973 = vmatprep.subr.mxu0 0.0
  %974 = vmatpush1.msra.mxu0 0.0
  %975 = vmatprep.subr.mxu0 0.0
  %976 = vmatpush1.msra.mxu0 0.0
  %977 = vmatprep.subr.mxu0 0.0
  %978 = vmatpush1.msra.mxu0 0.0
  %979 = vmatprep.subr.mxu0 0.0
  %980 = vmatpush1.msra.mxu0 0.0
  %981 = vmatprep.subr.mxu0 0.0
  %982 = vmatpush1.msra.mxu0 0.0
  %983 = vmatprep.subr.mxu0 0.0
  %984 = vmatpush1.msra.mxu0 0.0
  %985 = vmatprep.subr.mxu0 0.0
  %986 = vmatpush1.msra.mxu0 0.0
  %987 = vmatprep.subr.mxu0 0.0
  %988 = vmatpush1.msra.mxu0 0.0
  %989 = vmatprep.subr.mxu0 0.0
  %990 = vmatpush1.msra.mxu0 0.0
  %991 = vmatprep.subr.mxu0 0.0
  %992 = vmatpush1.msra.mxu0 0.0
  %993 = vmatprep.subr.mxu0 0.0
  %994 = vmatpush1.msra.mxu0 0.0
  %995 = vmatprep.subr.mxu0 0.0
  %996 = vmatpush1.msra.mxu0 0.0
  %997 = vmatprep.subr.mxu0 0.0
  %998 = vmatpush1.msra.mxu0 0.0
  %999 = vmatprep.subr.mxu0 0.0
  %1000 = vmatpush1.msra.mxu0 0.0
  %1001 = vmatprep.subr.mxu0 0.0
  %1002 = vmatpush1.msra.mxu0 0.0
  %1003 = vmatprep.subr.mxu0 0.0
  %1004 = vmatpush1.msra.mxu0 0.0
  %1005 = vmatprep.subr.mxu0 0.0
  %1006 = vmatpush1.msra.mxu0 0.0
  %1007 = vmatprep.subr.mxu0 0.0
  %1008 = vmatpush1.msra.mxu0 0.0
  %1009 = vmatprep.mubr.f32.mxu0 0.0
  %1010 = vmatmul.mubr.f32.gmra.mrb[0].mxu0 %v852
  %v1011 = vpop.f32.mrb[0].mxu0
  %v1012 = vadd.f32 0.0, %v1011
  %v1013 = vpop.f32.mrb[0].mxu0
  %1014 = vdwg.mxu0
  %v1015 = vadd.f32 %v262, %v1012
  %v1016 = vtanh.pop %v1015
  %v1017 = vadd.f32 %v1016, 1.0
  %v1018 = vmul.f32 %v1017, 0.5
  %v1019 = vmul.f32 %v1018, %v760
  %1021 = vrot.lane.b32.xlu0 %v1016, 64
  %v1022 = vpop.permute.xlu0 %1021
  %v1024 = vmul.f32 %v1018, %v1022
  %1026 = vrot.lane.b32.xlu0 %v1024, 32
  %v1027 = vpop.permute.xlu0 %1026
  %v1029 = vadd.f32 %v1019, %v1027
  %v1030 = vtanh.pop %v1029
  %1032 = vrot.lane.b32.xlu0 %v1030, 64
  %v1033 = vpop.permute.xlu0 %1032
  %v1035 = vmul.f32 %v1018, %v1033
  %1037 = vrot.lane.b32.xlu0 %v944, 32
  %v1038 = vpop.permute.xlu0 %1037
  %v1039 = vsel %vm312, %v1038, 0
  %1041 = vmatprep.subr.mxu0 0.0
  %1042 = vmatpush1.msra.mxu0 %v72
  %1043 = vmatprep.subr.mxu0 0.0
  %1044 = vmatpush1.msra.mxu0 %v73
  %1045 = vmatprep.subr.mxu0 0.0
  %1046 = vmatpush1.msra.mxu0 %v74
  %1047 = vmatprep.subr.mxu0 0.0
  %1048 = vmatpush1.msra.mxu0 %v75
  %1049 = vmatprep.subr.mxu0 0.0
  %1050 = vmatpush1.msra.mxu0 0.0
  %1051 = vmatprep.subr.mxu0 0.0
  %1052 = vmatpush1.msra.mxu0 0.0
  %1053 = vmatprep.subr.mxu0 0.0
  %1054 = vmatpush1.msra.mxu0 0.0
  %1055 = vmatprep.subr.mxu0 0.0
  %1056 = vmatpush1.msra.mxu0 0.0
  %1057 = vmatprep.subr.mxu0 0.0
  %1058 = vmatpush1.msra.mxu0 0.0
  %1059 = vmatprep.subr.mxu0 0.0
  %1060 = vmatpush1.msra.mxu0 0.0
  %1061 = vmatprep.subr.mxu0 0.0
  %1062 = vmatpush1.msra.mxu0 0.0
  %1063 = vmatprep.subr.mxu0 0.0
  %1064 = vmatpush1.msra.mxu0 0.0
  %1065 = vmatprep.subr.mxu0 0.0
  %1066 = vmatpush1.msra.mxu0 0.0
  %1067 = vmatprep.subr.mxu0 0.0
  %1068 = vmatpush1.msra.mxu0 0.0
  %1069 = vmatprep.subr.mxu0 0.0
  %1070 = vmatpush1.msra.mxu0 0.0
  %1071 = vmatprep.subr.mxu0 0.0
  %1072 = vmatpush1.msra.mxu0 0.0
  %1073 = vmatprep.subr.mxu0 0.0
  %1074 = vmatpush1.msra.mxu0 0.0
  %1075 = vmatprep.subr.mxu0 0.0
  %1076 = vmatpush1.msra.mxu0 0.0
  %1077 = vmatprep.subr.mxu0 0.0
  %1078 = vmatpush1.msra.mxu0 0.0
  %1079 = vmatprep.subr.mxu0 0.0
  %1080 = vmatpush1.msra.mxu0 0.0
  %1081 = vmatprep.subr.mxu0 0.0
  %1082 = vmatpush1.msra.mxu0 0.0
  %1083 = vmatprep.subr.mxu0 0.0
  %1084 = vmatpush1.msra.mxu0 0.0
  %1085 = vmatprep.subr.mxu0 0.0
  %1086 = vmatpush1.msra.mxu0 0.0
  %1087 = vmatprep.subr.mxu0 0.0
  %1088 = vmatpush1.msra.mxu0 0.0
  %1089 = vmatprep.subr.mxu0 0.0
  %1090 = vmatpush1.msra.mxu0 0.0
  %1091 = vmatprep.subr.mxu0 0.0
  %1092 = vmatpush1.msra.mxu0 0.0
  %1093 = vmatprep.subr.mxu0 0.0
  %1094 = vmatpush1.msra.mxu0 0.0
  %1095 = vmatprep.subr.mxu0 0.0
  %1096 = vmatpush1.msra.mxu0 0.0
  %1097 = vmatprep.subr.mxu0 0.0
  %1098 = vmatpush1.msra.mxu0 0.0
  %1099 = vmatprep.subr.mxu0 0.0
  %1100 = vmatpush1.msra.mxu0 0.0
  %1101 = vmatprep.subr.mxu0 0.0
  %1102 = vmatpush1.msra.mxu0 0.0
  %1103 = vmatprep.subr.mxu0 0.0
  %1104 = vmatpush1.msra.mxu0 0.0
  %1105 = vmatprep.mubr.f32.mxu0 0.0
  %1106 = vmatmul.mubr.f32.gmra.mrb[0].mxu0 %v1039
  %v1107 = vpop.f32.mrb[0].mxu0
  %v1108 = vadd.f32 0.0, %v1107
  %v1109 = vpop.f32.mrb[0].mxu0
  %1110 = vdwg.mxu0
  %v1113 = vunpack.c.l.s4 1983009808
  %v1114 = vunpack.c.0.s8 %v1113
  %v1115 = vlaneseq
  %v1116 = vshrl.u32 %v1115, 7
  %v1117 = vsub.s32 %v1114, %v1116
  %v1118 = vrot.slane %v1035, %v1117
  %1119 = vrot.lane.b32.xlu0 %v1118, 32
  %v1120 = vpop.permute.xlu0 %1119
  %v1121 = vsel %vm312, %v1120, 0
  %1123 = vmatprep.subr.mxu0 0.0
  %1124 = vmatpush1.msra.mxu0 %v68
  %1125 = vmatprep.subr.mxu0 0.0
  %1126 = vmatpush1.msra.mxu0 %v69
  %1127 = vmatprep.subr.mxu0 0.0
  %1128 = vmatpush1.msra.mxu0 %v70
  %1129 = vmatprep.subr.mxu0 0.0
  %1130 = vmatpush1.msra.mxu0 %v71
  %1131 = vmatprep.subr.mxu0 0.0
  %1132 = vmatpush1.msra.mxu0 0.0
  %1133 = vmatprep.subr.mxu0 0.0
  %1134 = vmatpush1.msra.mxu0 0.0
  %1135 = vmatprep.subr.mxu0 0.0
  %1136 = vmatpush1.msra.mxu0 0.0
  %1137 = vmatprep.subr.mxu0 0.0
  %1138 = vmatpush1.msra.mxu0 0.0
  %1139 = vmatprep.subr.mxu0 0.0
  %1140 = vmatpush1.msra.mxu0 0.0
  %1141 = vmatprep.subr.mxu0 0.0
  %1142 = vmatpush1.msra.mxu0 0.0
  %1143 = vmatprep.subr.mxu0 0.0
  %1144 = vmatpush1.msra.mxu0 0.0
  %1145 = vmatprep.subr.mxu0 0.0
  %1146 = vmatpush1.msra.mxu0 0.0
  %1147 = vmatprep.subr.mxu0 0.0
  %1148 = vmatpush1.msra.mxu0 0.0
  %1149 = vmatprep.subr.mxu0 0.0
  %1150 = vmatpush1.msra.mxu0 0.0
  %1151 = vmatprep.subr.mxu0 0.0
  %1152 = vmatpush1.msra.mxu0 0.0
  %1153 = vmatprep.subr.mxu0 0.0
  %1154 = vmatpush1.msra.mxu0 0.0
  %1155 = vmatprep.subr.mxu0 0.0
  %1156 = vmatpush1.msra.mxu0 0.0
  %1157 = vmatprep.subr.mxu0 0.0
  %1158 = vmatpush1.msra.mxu0 0.0
  %1159 = vmatprep.subr.mxu0 0.0
  %1160 = vmatpush1.msra.mxu0 0.0
  %1161 = vmatprep.subr.mxu0 0.0
  %1162 = vmatpush1.msra.mxu0 0.0
  %1163 = vmatprep.subr.mxu0 0.0
  %1164 = vmatpush1.msra.mxu0 0.0
  %1165 = vmatprep.subr.mxu0 0.0
  %1166 = vmatpush1.msra.mxu0 0.0
  %1167 = vmatprep.subr.mxu0 0.0
  %1168 = vmatpush1.msra.mxu0 0.0
  %1169 = vmatprep.subr.mxu0 0.0
  %1170 = vmatpush1.msra.mxu0 0.0
  %1171 = vmatprep.subr.mxu0 0.0
  %1172 = vmatpush1.msra.mxu0 0.0
  %1173 = vmatprep.subr.mxu0 0.0
  %1174 = vmatpush1.msra.mxu0 0.0
  %1175 = vmatprep.subr.mxu0 0.0
  %1176 = vmatpush1.msra.mxu0 0.0
  %1177 = vmatprep.subr.mxu0 0.0
  %1178 = vmatpush1.msra.mxu0 0.0
  %1179 = vmatprep.subr.mxu0 0.0
  %1180 = vmatpush1.msra.mxu0 0.0
  %1181 = vmatprep.subr.mxu0 0.0
  %1182 = vmatpush1.msra.mxu0 0.0
  %1183 = vmatprep.subr.mxu0 0.0
  %1184 = vmatpush1.msra.mxu0 0.0
  %1185 = vmatprep.subr.mxu0 0.0
  %1186 = vmatpush1.msra.mxu0 0.0
  %1187 = vmatprep.mubr.f32.mxu0 0.0
  %1188 = vmatmul.mubr.f32.gmra.mrb[0].mxu0 %v1121
  %v1189 = vpop.f32.mrb[0].mxu0
  %v1190 = vadd.f32 %v1108, %v1189
  %v1191 = vpop.f32.mrb[0].mxu0
  %1192 = vdwg.mxu0
  %v1193 = vadd.f32 %v1190, %v89
  %v1194 = vtanh.pop %v1193
  %v1195 = vadd.f32 %v1194, 1.0
  %v1196 = vmul.f32 %v1195, 0.5
  %v1197 = vmul.f32 %v1196, %v938
  %1199 = vrot.lane.b32.xlu0 %v1194, 64
  %v1200 = vpop.permute.xlu0 %1199
  %v1202 = vmul.f32 %v1196, %v1200
  %1204 = vrot.lane.b32.xlu0 %v1202, 32
  %v1205 = vpop.permute.xlu0 %1204
  %v1207 = vadd.f32 %v1197, %v1205
  %v1208 = vtanh.pop %v1207
  %1210 = vrot.lane.b32.xlu0 %v1208, 64
  %v1211 = vpop.permute.xlu0 %1210
  %v1213 = vmul.f32 %v1196, %v1211
  %1214 = vmatprep.subr.mxu0 0.0
  %1215 = vmatpush1.msra.mxu0 %v64
  %1216 = vmatprep.subr.mxu0 0.0
  %1217 = vmatpush1.msra.mxu0 %v65
  %1218 = vmatprep.subr.mxu0 0.0
  %1219 = vmatpush1.msra.mxu0 %v66
  %1220 = vmatprep.subr.mxu0 0.0
  %1221 = vmatpush1.msra.mxu0 %v67
  %1222 = vmatprep.subr.mxu0 0.0
  %1223 = vmatpush1.msra.mxu0 0.0
  %1224 = vmatprep.subr.mxu0 0.0
  %1225 = vmatpush1.msra.mxu0 0.0
  %1226 = vmatprep.subr.mxu0 0.0
  %1227 = vmatpush1.msra.mxu0 0.0
  %1228 = vmatprep.subr.mxu0 0.0
  %1229 = vmatpush1.msra.mxu0 0.0
  %1230 = vmatprep.subr.mxu0 0.0
  %1231 = vmatpush1.msra.mxu0 0.0
  %1232 = vmatprep.subr.mxu0 0.0
  %1233 = vmatpush1.msra.mxu0 0.0
  %1234 = vmatprep.subr.mxu0 0.0
  %1235 = vmatpush1.msra.mxu0 0.0
  %1236 = vmatprep.subr.mxu0 0.0
  %1237 = vmatpush1.msra.mxu0 0.0
  %1238 = vmatprep.subr.mxu0 0.0
  %1239 = vmatpush1.msra.mxu0 0.0
  %1240 = vmatprep.subr.mxu0 0.0
  %1241 = vmatpush1.msra.mxu0 0.0
  %1242 = vmatprep.subr.mxu0 0.0
  %1243 = vmatpush1.msra.mxu0 0.0
  %1244 = vmatprep.subr.mxu0 0.0
  %1245 = vmatpush1.msra.mxu0 0.0
  %1246 = vmatprep.subr.mxu0 0.0
  %1247 = vmatpush1.msra.mxu0 0.0
  %1248 = vmatprep.subr.mxu0 0.0
  %1249 = vmatpush1.msra.mxu0 0.0
  %1250 = vmatprep.subr.mxu0 0.0
  %1251 = vmatpush1.msra.mxu0 0.0
  %1252 = vmatprep.subr.mxu0 0.0
  %1253 = vmatpush1.msra.mxu0 0.0
  %1254 = vmatprep.subr.mxu0 0.0
  %1255 = vmatpush1.msra.mxu0 0.0
  %1256 = vmatprep.subr.mxu0 0.0
  %1257 = vmatpush1.msra.mxu0 0.0
  %1258 = vmatprep.subr.mxu0 0.0
  %1259 = vmatpush1.msra.mxu0 0.0
  %1260 = vmatprep.subr.mxu0 0.0
  %1261 = vmatpush1.msra.mxu0 0.0
  %1262 = vmatprep.subr.mxu0 0.0
  %1263 = vmatpush1.msra.mxu0 0.0
  %1264 = vmatprep.subr.mxu0 0.0
  %1265 = vmatpush1.msra.mxu0 0.0
  %1266 = vmatprep.subr.mxu0 0.0
  %1267 = vmatpush1.msra.mxu0 0.0
  %1268 = vmatprep.subr.mxu0 0.0
  %1269 = vmatpush1.msra.mxu0 0.0
  %1270 = vmatprep.subr.mxu0 0.0
  %1271 = vmatpush1.msra.mxu0 0.0
  %1272 = vmatprep.subr.mxu0 0.0
  %1273 = vmatpush1.msra.mxu0 0.0
  %1274 = vmatprep.subr.mxu0 0.0
  %1275 = vmatpush1.msra.mxu0 0.0
  %1276 = vmatprep.subr.mxu0 0.0
  %1277 = vmatpush1.msra.mxu0 0.0
  %1278 = vmatprep.mubr.f32.mxu0 0.0
  %1279 = vmatmul.mubr.f32.gmra.mrb[0].mxu0 %v1121
  %v1280 = vpop.f32.mrb[0].mxu0
  %v1281 = vadd.f32 0.0, %v1280
  %v1282 = vpop.f32.mrb[0].mxu0
  %1283 = vdwg.mxu0
  %v1284 = vadd.f32 %v270, %v1281
  %v1285 = vtanh.pop %v1284
  %v1286 = vadd.f32 %v1285, 1.0
  %v1287 = vmul.f32 %v1286, 0.5
  %v1288 = vmul.f32 %v1287, %v1029
  %1290 = vrot.lane.b32.xlu0 %v1285, 64
  %v1291 = vpop.permute.xlu0 %1290
  %v1293 = vmul.f32 %v1287, %v1291
  %1295 = vrot.lane.b32.xlu0 %v1293, 32
  %v1296 = vpop.permute.xlu0 %1295
  %v1298 = vadd.f32 %v1288, %v1296
  %v1299 = vtanh.pop %v1298
  %1301 = vrot.lane.b32.xlu0 %v1299, 64
  %v1302 = vpop.permute.xlu0 %1301
  %v1304 = vmul.f32 %v1287, %v1302
  %1306 = vrot.lane.b32.xlu0 %v1213, 32
  %v1307 = vpop.permute.xlu0 %1306
  %v1308 = vsel %vm312, %v1307, 0
  %1310 = vmatprep.subr.mxu0 0.0
  %1311 = vmatpush1.msra.mxu0 %v72
  %1312 = vmatprep.subr.mxu0 0.0
  %1313 = vmatpush1.msra.mxu0 %v73
  %1314 = vmatprep.subr.mxu0 0.0
  %1315 = vmatpush1.msra.mxu0 %v74
  %1316 = vmatprep.subr.mxu0 0.0
  %1317 = vmatpush1.msra.mxu0 %v75
  %1318 = vmatprep.subr.mxu0 0.0
  %1319 = vmatpush1.msra.mxu0 0.0
  %1320 = vmatprep.subr.mxu0 0.0
  %1321 = vmatpush1.msra.mxu0 0.0
  %1322 = vmatprep.subr.mxu0 0.0
  %1323 = vmatpush1.msra.mxu0 0.0
  %1324 = vmatprep.subr.mxu0 0.0
  %1325 = vmatpush1.msra.mxu0 0.0
  %1326 = vmatprep.subr.mxu0 0.0
  %1327 = vmatpush1.msra.mxu0 0.0
  %1328 = vmatprep.subr.mxu0 0.0
  %1329 = vmatpush1.msra.mxu0 0.0
  %1330 = vmatprep.subr.mxu0 0.0
  %1331 = vmatpush1.msra.mxu0 0.0
  %1332 = vmatprep.subr.mxu0 0.0
  %1333 = vmatpush1.msra.mxu0 0.0
  %1334 = vmatprep.subr.mxu0 0.0
  %1335 = vmatpush1.msra.mxu0 0.0
  %1336 = vmatprep.subr.mxu0 0.0
  %1337 = vmatpush1.msra.mxu0 0.0
  %1338 = vmatprep.subr.mxu0 0.0
  %1339 = vmatpush1.msra.mxu0 0.0
  %1340 = vmatprep.subr.mxu0 0.0
  %1341 = vmatpush1.msra.mxu0 0.0
  %1342 = vmatprep.subr.mxu0 0.0
  %1343 = vmatpush1.msra.mxu0 0.0
  %1344 = vmatprep.subr.mxu0 0.0
  %1345 = vmatpush1.msra.mxu0 0.0
  %1346 = vmatprep.subr.mxu0 0.0
  %1347 = vmatpush1.msra.mxu0 0.0
  %1348 = vmatprep.subr.mxu0 0.0
  %1349 = vmatpush1.msra.mxu0 0.0
  %1350 = vmatprep.subr.mxu0 0.0
  %1351 = vmatpush1.msra.mxu0 0.0
  %1352 = vmatprep.subr.mxu0 0.0
  %1353 = vmatpush1.msra.mxu0 0.0
  %1354 = vmatprep.subr.mxu0 0.0
  %1355 = vmatpush1.msra.mxu0 0.0
  %1356 = vmatprep.subr.mxu0 0.0
  %1357 = vmatpush1.msra.mxu0 0.0
  %1358 = vmatprep.subr.mxu0 0.0
  %1359 = vmatpush1.msra.mxu0 0.0
  %1360 = vmatprep.subr.mxu0 0.0
  %1361 = vmatpush1.msra.mxu0 0.0
  %1362 = vmatprep.subr.mxu0 0.0
  %1363 = vmatpush1.msra.mxu0 0.0
  %1364 = vmatprep.subr.mxu0 0.0
  %1365 = vmatpush1.msra.mxu0 0.0
  %1366 = vmatprep.subr.mxu0 0.0
  %1367 = vmatpush1.msra.mxu0 0.0
  %1368 = vmatprep.subr.mxu0 0.0
  %1369 = vmatpush1.msra.mxu0 0.0
  %1370 = vmatprep.subr.mxu0 0.0
  %1371 = vmatpush1.msra.mxu0 0.0
  %1372 = vmatprep.subr.mxu0 0.0
  %1373 = vmatpush1.msra.mxu0 0.0
  %1374 = vmatprep.mubr.f32.mxu0 0.0
  %1375 = vmatmul.mubr.f32.gmra.mrb[0].mxu0 %v1308
  %v1376 = vpop.f32.mrb[0].mxu0
  %v1377 = vadd.f32 0.0, %v1376
  %v1378 = vpop.f32.mrb[0].mxu0
  %1379 = vdwg.mxu0
  %v1382 = vunpack.c.l.s4 1983009808
  %v1383 = vunpack.c.0.s8 %v1382
  %v1384 = vlaneseq
  %v1385 = vshrl.u32 %v1384, 7
  %v1386 = vsub.s32 %v1383, %v1385
  %v1387 = vrot.slane %v1304, %v1386
  %1388 = vrot.lane.b32.xlu0 %v1387, 32
  %v1389 = vpop.permute.xlu0 %1388
  %v1390 = vsel %vm312, %v1389, 0
  %1392 = vmatprep.subr.mxu0 0.0
  %1393 = vmatpush1.msra.mxu0 %v68
  %1394 = vmatprep.subr.mxu0 0.0
  %1395 = vmatpush1.msra.mxu0 %v69
  %1396 = vmatprep.subr.mxu0 0.0
  %1397 = vmatpush1.msra.mxu0 %v70
  %1398 = vmatprep.subr.mxu0 0.0
  %1399 = vmatpush1.msra.mxu0 %v71
  %1400 = vmatprep.subr.mxu0 0.0
  %1401 = vmatpush1.msra.mxu0 0.0
  %1402 = vmatprep.subr.mxu0 0.0
  %1403 = vmatpush1.msra.mxu0 0.0
  %1404 = vmatprep.subr.mxu0 0.0
  %1405 = vmatpush1.msra.mxu0 0.0
  %1406 = vmatprep.subr.mxu0 0.0
  %1407 = vmatpush1.msra.mxu0 0.0
  %1408 = vmatprep.subr.mxu0 0.0
  %1409 = vmatpush1.msra.mxu0 0.0
  %1410 = vmatprep.subr.mxu0 0.0
  %1411 = vmatpush1.msra.mxu0 0.0
  %1412 = vmatprep.subr.mxu0 0.0
  %1413 = vmatpush1.msra.mxu0 0.0
  %1414 = vmatprep.subr.mxu0 0.0
  %1415 = vmatpush1.msra.mxu0 0.0
  %1416 = vmatprep.subr.mxu0 0.0
  %1417 = vmatpush1.msra.mxu0 0.0
  %1418 = vmatprep.subr.mxu0 0.0
  %1419 = vmatpush1.msra.mxu0 0.0
  %1420 = vmatprep.subr.mxu0 0.0
  %1421 = vmatpush1.msra.mxu0 0.0
  %1422 = vmatprep.subr.mxu0 0.0
  %1423 = vmatpush1.msra.mxu0 0.0
  %1424 = vmatprep.subr.mxu0 0.0
  %1425 = vmatpush1.msra.mxu0 0.0
  %1426 = vmatprep.subr.mxu0 0.0
  %1427 = vmatpush1.msra.mxu0 0.0
  %1428 = vmatprep.subr.mxu0 0.0
  %1429 = vmatpush1.msra.mxu0 0.0
  %1430 = vmatprep.subr.mxu0 0.0
  %1431 = vmatpush1.msra.mxu0 0.0
  %1432 = vmatprep.subr.mxu0 0.0
  %1433 = vmatpush1.msra.mxu0 0.0
  %1434 = vmatprep.subr.mxu0 0.0
  %1435 = vmatpush1.msra.mxu0 0.0
  %1436 = vmatprep.subr.mxu0 0.0
  %1437 = vmatpush1.msra.mxu0 0.0
  %1438 = vmatprep.subr.mxu0 0.0
  %1439 = vmatpush1.msra.mxu0 0.0
  %1440 = vmatprep.subr.mxu0 0.0
  %1441 = vmatpush1.msra.mxu0 0.0
  %1442 = vmatprep.subr.mxu0 0.0
  %1443 = vmatpush1.msra.mxu0 0.0
  %1444 = vmatprep.subr.mxu0 0.0
  %1445 = vmatpush1.msra.mxu0 0.0
  %1446 = vmatprep.subr.mxu0 0.0
  %1447 = vmatpush1.msra.mxu0 0.0
  %1448 = vmatprep.subr.mxu0 0.0
  %1449 = vmatpush1.msra.mxu0 0.0
  %1450 = vmatprep.subr.mxu0 0.0
  %1451 = vmatpush1.msra.mxu0 0.0
  %1452 = vmatprep.subr.mxu0 0.0
  %1453 = vmatpush1.msra.mxu0 0.0
  %1454 = vmatprep.subr.mxu0 0.0
  %1455 = vmatpush1.msra.mxu0 0.0
  %1456 = vmatprep.mubr.f32.mxu0 0.0
  %1457 = vmatmul.mubr.f32.gmra.mrb[0].mxu0 %v1390
  %v1458 = vpop.f32.mrb[0].mxu0
  %v1459 = vadd.f32 %v1377, %v1458
  %v1460 = vpop.f32.mrb[0].mxu0
  %1461 = vdwg.mxu0
  %v1462 = vadd.f32 %v1459, %v89
  %v1463 = vtanh.pop %v1462
  %v1464 = vadd.f32 %v1463, 1.0
  %v1465 = vmul.f32 %v1464, 0.5
  %v1466 = vmul.f32 %v1465, %v1207
  %1468 = vrot.lane.b32.xlu0 %v1463, 64
  %v1469 = vpop.permute.xlu0 %1468
  %v1471 = vmul.f32 %v1465, %v1469
  %1473 = vrot.lane.b32.xlu0 %v1471, 32
  %v1474 = vpop.permute.xlu0 %1473
  %v1476 = vadd.f32 %v1466, %v1474
  %v1477 = vtanh.pop %v1476
  %1479 = vrot.lane.b32.xlu0 %v1477, 64
  %v1480 = vpop.permute.xlu0 %1479
  %v1482 = vmul.f32 %v1465, %v1480
  %1483 = vmatprep.subr.mxu0 0.0
  %1484 = vmatpush1.msra.mxu0 %v64
  %1485 = vmatprep.subr.mxu0 0.0
  %1486 = vmatpush1.msra.mxu0 %v65
  %1487 = vmatprep.subr.mxu0 0.0
  %1488 = vmatpush1.msra.mxu0 %v66
  %1489 = vmatprep.subr.mxu0 0.0
  %1490 = vmatpush1.msra.mxu0 %v67
  %1491 = vmatprep.subr.mxu0 0.0
  %1492 = vmatpush1.msra.mxu0 0.0
  %1493 = vmatprep.subr.mxu0 0.0
  %1494 = vmatpush1.msra.mxu0 0.0
  %1495 = vmatprep.subr.mxu0 0.0
  %1496 = vmatpush1.msra.mxu0 0.0
  %1497 = vmatprep.subr.mxu0 0.0
  %1498 = vmatpush1.msra.mxu0 0.0
  %1499 = vmatprep.subr.mxu0 0.0
  %1500 = vmatpush1.msra.mxu0 0.0
  %1501 = vmatprep.subr.mxu0 0.0
  %1502 = vmatpush1.msra.mxu0 0.0
  %1503 = vmatprep.subr.mxu0 0.0
  %1504 = vmatpush1.msra.mxu0 0.0
  %1505 = vmatprep.subr.mxu0 0.0
  %1506 = vmatpush1.msra.mxu0 0.0
  %1507 = vmatprep.subr.mxu0 0.0
  %1508 = vmatpush1.msra.mxu0 0.0
  %1509 = vmatprep.subr.mxu0 0.0
  %1510 = vmatpush1.msra.mxu0 0.0
  %1511 = vmatprep.subr.mxu0 0.0
  %1512 = vmatpush1.msra.mxu0 0.0
  %1513 = vmatprep.subr.mxu0 0.0
  %1514 = vmatpush1.msra.mxu0 0.0
  %1515 = vmatprep.subr.mxu0 0.0
  %1516 = vmatpush1.msra.mxu0 0.0
  %1517 = vmatprep.subr.mxu0 0.0
  %1518 = vmatpush1.msra.mxu0 0.0
  %1519 = vmatprep.subr.mxu0 0.0
  %1520 = vmatpush1.msra.mxu0 0.0
  %1521 = vmatprep.subr.mxu0 0.0
  %1522 = vmatpush1.msra.mxu0 0.0
  %1523 = vmatprep.subr.mxu0 0.0
  %1524 = vmatpush1.msra.mxu0 0.0
  %1525 = vmatprep.subr.mxu0 0.0
  %1526 = vmatpush1.msra.mxu0 0.0
  %1527 = vmatprep.subr.mxu0 0.0
  %1528 = vmatpush1.msra.mxu0 0.0
  %1529 = vmatprep.subr.mxu0 0.0
  %1530 = vmatpush1.msra.mxu0 0.0
  %1531 = vmatprep.subr.mxu0 0.0
  %1532 = vmatpush1.msra.mxu0 0.0
  %1533 = vmatprep.subr.mxu0 0.0
  %1534 = vmatpush1.msra.mxu0 0.0
  %1535 = vmatprep.subr.mxu0 0.0
  %1536 = vmatpush1.msra.mxu0 0.0
  %1537 = vmatprep.subr.mxu0 0.0
  %1538 = vmatpush1.msra.mxu0 0.0
  %1539 = vmatprep.subr.mxu0 0.0
  %1540 = vmatpush1.msra.mxu0 0.0
  %1541 = vmatprep.subr.mxu0 0.0
  %1542 = vmatpush1.msra.mxu0 0.0
  %1543 = vmatprep.subr.mxu0 0.0
  %1544 = vmatpush1.msra.mxu0 0.0
  %1545 = vmatprep.subr.mxu0 0.0
  %1546 = vmatpush1.msra.mxu0 0.0
  %1547 = vmatprep.mubr.f32.mxu0 0.0
  %1548 = vmatmul.mubr.f32.gmra.mrb[0].mxu0 %v1390
  %v1549 = vpop.f32.mrb[0].mxu0
  %v1550 = vadd.f32 0.0, %v1549
  %v1551 = vpop.f32.mrb[0].mxu0
  %1552 = vdwg.mxu0
  %v1553 = vadd.f32 %v278, %v1550
  %v1554 = vtanh.pop %v1553
  %v1555 = vadd.f32 %v1554, 1.0
  %v1556 = vmul.f32 %v1555, 0.5
  %v1557 = vmul.f32 %v1556, %v1298
  %1559 = vrot.lane.b32.xlu0 %v1554, 64
  %v1560 = vpop.permute.xlu0 %1559
  %v1562 = vmul.f32 %v1556, %v1560
  %1564 = vrot.lane.b32.xlu0 %v1562, 32
  %v1565 = vpop.permute.xlu0 %1564
  %v1567 = vadd.f32 %v1557, %v1565
  %v1568 = vtanh.pop %v1567
  %1570 = vrot.lane.b32.xlu0 %v1568, 64
  %v1571 = vpop.permute.xlu0 %1570
  %v1573 = vmul.f32 %v1556, %v1571
  %1575 = vrot.lane.b32.xlu0 %v1482, 32
  %v1576 = vpop.permute.xlu0 %1575
  %v1577 = vsel %vm312, %v1576, 0
  %1579 = vmatprep.subr.mxu0 0.0
  %1580 = vmatpush1.msra.mxu0 %v72
  %1581 = vmatprep.subr.mxu0 0.0
  %1582 = vmatpush1.msra.mxu0 %v73
  %1583 = vmatprep.subr.mxu0 0.0
  %1584 = vmatpush1.msra.mxu0 %v74
  %1585 = vmatprep.subr.mxu0 0.0
  %1586 = vmatpush1.msra.mxu0 %v75
  %1587 = vmatprep.subr.mxu0 0.0
  %1588 = vmatpush1.msra.mxu0 0.0
  %1589 = vmatprep.subr.mxu0 0.0
  %1590 = vmatpush1.msra.mxu0 0.0
  %1591 = vmatprep.subr.mxu0 0.0
  %1592 = vmatpush1.msra.mxu0 0.0
  %1593 = vmatprep.subr.mxu0 0.0
  %1594 = vmatpush1.msra.mxu0 0.0
  %1595 = vmatprep.subr.mxu0 0.0
  %1596 = vmatpush1.msra.mxu0 0.0
  %1597 = vmatprep.subr.mxu0 0.0
  %1598 = vmatpush1.msra.mxu0 0.0
  %1599 = vmatprep.subr.mxu0 0.0
  %1600 = vmatpush1.msra.mxu0 0.0
  %1601 = vmatprep.subr.mxu0 0.0
  %1602 = vmatpush1.msra.mxu0 0.0
  %1603 = vmatprep.subr.mxu0 0.0
  %1604 = vmatpush1.msra.mxu0 0.0
  %1605 = vmatprep.subr.mxu0 0.0
  %1606 = vmatpush1.msra.mxu0 0.0
  %1607 = vmatprep.subr.mxu0 0.0
  %1608 = vmatpush1.msra.mxu0 0.0
  %1609 = vmatprep.subr.mxu0 0.0
  %1610 = vmatpush1.msra.mxu0 0.0
  %1611 = vmatprep.subr.mxu0 0.0
  %1612 = vmatpush1.msra.mxu0 0.0
  %1613 = vmatprep.subr.mxu0 0.0
  %1614 = vmatpush1.msra.mxu0 0.0
  %1615 = vmatprep.subr.mxu0 0.0
  %1616 = vmatpush1.msra.mxu0 0.0
  %1617 = vmatprep.subr.mxu0 0.0
  %1618 = vmatpush1.msra.mxu0 0.0
  %1619 = vmatprep.subr.mxu0 0.0
  %1620 = vmatpush1.msra.mxu0 0.0
  %1621 = vmatprep.subr.mxu0 0.0
  %1622 = vmatpush1.msra.mxu0 0.0
  %1623 = vmatprep.subr.mxu0 0.0
  %1624 = vmatpush1.msra.mxu0 0.0
  %1625 = vmatprep.subr.mxu0 0.0
  %1626 = vmatpush1.msra.mxu0 0.0
  %1627 = vmatprep.subr.mxu0 0.0
  %1628 = vmatpush1.msra.mxu0 0.0
  %1629 = vmatprep.subr.mxu0 0.0
  %1630 = vmatpush1.msra.mxu0 0.0
  %1631 = vmatprep.subr.mxu0 0.0
  %1632 = vmatpush1.msra.mxu0 0.0
  %1633 = vmatprep.subr.mxu0 0.0
  %1634 = vmatpush1.msra.mxu0 0.0
  %1635 = vmatprep.subr.mxu0 0.0
  %1636 = vmatpush1.msra.mxu0 0.0
  %1637 = vmatprep.subr.mxu0 0.0
  %1638 = vmatpush1.msra.mxu0 0.0
  %1639 = vmatprep.subr.mxu0 0.0
  %1640 = vmatpush1.msra.mxu0 0.0
  %1641 = vmatprep.subr.mxu0 0.0
  %1642 = vmatpush1.msra.mxu0 0.0
  %1643 = vmatprep.mubr.f32.mxu0 0.0
  %1644 = vmatmul.mubr.f32.gmra.mrb[0].mxu0 %v1577
  %v1645 = vpop.f32.mrb[0].mxu0
  %v1646 = vadd.f32 0.0, %v1645
  %v1647 = vpop.f32.mrb[0].mxu0
  %1648 = vdwg.mxu0
  %v1651 = vunpack.c.l.s4 1983009808
  %v1652 = vunpack.c.0.s8 %v1651
  %v1653 = vlaneseq
  %v1654 = vshrl.u32 %v1653, 7
  %v1655 = vsub.s32 %v1652, %v1654
  %v1656 = vrot.slane %v1573, %v1655
  %1657 = vrot.lane.b32.xlu0 %v1656, 32
  %v1658 = vpop.permute.xlu0 %1657
  %v1659 = vsel %vm312, %v1658, 0
  %1661 = vmatprep.subr.mxu0 0.0
  %1662 = vmatpush1.msra.mxu0 %v68
  %1663 = vmatprep.subr.mxu0 0.0
  %1664 = vmatpush1.msra.mxu0 %v69
  %1665 = vmatprep.subr.mxu0 0.0
  %1666 = vmatpush1.msra.mxu0 %v70
  %1667 = vmatprep.subr.mxu0 0.0
  %1668 = vmatpush1.msra.mxu0 %v71
  %1669 = vmatprep.subr.mxu0 0.0
  %1670 = vmatpush1.msra.mxu0 0.0
  %1671 = vmatprep.subr.mxu0 0.0
  %1672 = vmatpush1.msra.mxu0 0.0
  %1673 = vmatprep.subr.mxu0 0.0
  %1674 = vmatpush1.msra.mxu0 0.0
  %1675 = vmatprep.subr.mxu0 0.0
  %1676 = vmatpush1.msra.mxu0 0.0
  %1677 = vmatprep.subr.mxu0 0.0
  %1678 = vmatpush1.msra.mxu0 0.0
  %1679 = vmatprep.subr.mxu0 0.0
  %1680 = vmatpush1.msra.mxu0 0.0
  %1681 = vmatprep.subr.mxu0 0.0
  %1682 = vmatpush1.msra.mxu0 0.0
  %1683 = vmatprep.subr.mxu0 0.0
  %1684 = vmatpush1.msra.mxu0 0.0
  %1685 = vmatprep.subr.mxu0 0.0
  %1686 = vmatpush1.msra.mxu0 0.0
  %1687 = vmatprep.subr.mxu0 0.0
  %1688 = vmatpush1.msra.mxu0 0.0
  %1689 = vmatprep.subr.mxu0 0.0
  %1690 = vmatpush1.msra.mxu0 0.0
  %1691 = vmatprep.subr.mxu0 0.0
  %1692 = vmatpush1.msra.mxu0 0.0
  %1693 = vmatprep.subr.mxu0 0.0
  %1694 = vmatpush1.msra.mxu0 0.0
  %1695 = vmatprep.subr.mxu0 0.0
  %1696 = vmatpush1.msra.mxu0 0.0
  %1697 = vmatprep.subr.mxu0 0.0
  %1698 = vmatpush1.msra.mxu0 0.0
  %1699 = vmatprep.subr.mxu0 0.0
  %1700 = vmatpush1.msra.mxu0 0.0
  %1701 = vmatprep.subr.mxu0 0.0
  %1702 = vmatpush1.msra.mxu0 0.0
  %1703 = vmatprep.subr.mxu0 0.0
  %1704 = vmatpush1.msra.mxu0 0.0
  %1705 = vmatprep.subr.mxu0 0.0
  %1706 = vmatpush1.msra.mxu0 0.0
  %1707 = vmatprep.subr.mxu0 0.0
  %1708 = vmatpush1.msra.mxu0 0.0
  %1709 = vmatprep.subr.mxu0 0.0
  %1710 = vmatpush1.msra.mxu0 0.0
  %1711 = vmatprep.subr.mxu0 0.0
  %1712 = vmatpush1.msra.mxu0 0.0
  %1713 = vmatprep.subr.mxu0 0.0
  %1714 = vmatpush1.msra.mxu0 0.0
  %1715 = vmatprep.subr.mxu0 0.0
  %1716 = vmatpush1.msra.mxu0 0.0
  %1717 = vmatprep.subr.mxu0 0.0
  %1718 = vmatpush1.msra.mxu0 0.0
  %1719 = vmatprep.subr.mxu0 0.0
  %1720 = vmatpush1.msra.mxu0 0.0
  %1721 = vmatprep.subr.mxu0 0.0
  %1722 = vmatpush1.msra.mxu0 0.0
  %1723 = vmatprep.subr.mxu0 0.0
  %1724 = vmatpush1.msra.mxu0 0.0
  %1725 = vmatprep.mubr.f32.mxu0 0.0
  %1726 = vmatmul.mubr.f32.gmra.mrb[0].mxu0 %v1659
  %v1727 = vpop.f32.mrb[0].mxu0
  %v1728 = vadd.f32 %v1646, %v1727
  %v1729 = vpop.f32.mrb[0].mxu0
  %1730 = vdwg.mxu0
  %v1731 = vadd.f32 %v1728, %v89
  %v1732 = vtanh.pop %v1731
  %v1733 = vadd.f32 %v1732, 1.0
  %v1734 = vmul.f32 %v1733, 0.5
  %v1735 = vmul.f32 %v1734, %v1476
  %1737 = vrot.lane.b32.xlu0 %v1732, 64
  %v1738 = vpop.permute.xlu0 %1737
  %v1740 = vmul.f32 %v1734, %v1738
  %1742 = vrot.lane.b32.xlu0 %v1740, 32
  %v1743 = vpop.permute.xlu0 %1742
  %v1745 = vadd.f32 %v1735, %v1743
  %v1746 = vtanh.pop %v1745
  %1748 = vrot.lane.b32.xlu0 %v1746, 64
  %v1749 = vpop.permute.xlu0 %1748
  %v1751 = vmul.f32 %v1734, %v1749
  %1752 = vmatprep.subr.mxu0 0.0
  %1753 = vmatpush1.msra.mxu0 %v64
  %1754 = vmatprep.subr.mxu0 0.0
  %1755 = vmatpush1.msra.mxu0 %v65
  %1756 = vmatprep.subr.mxu0 0.0
  %1757 = vmatpush1.msra.mxu0 %v66
  %1758 = vmatprep.subr.mxu0 0.0
  %1759 = vmatpush1.msra.mxu0 %v67
  %1760 = vmatprep.subr.mxu0 0.0
  %1761 = vmatpush1.msra.mxu0 0.0
  %1762 = vmatprep.subr.mxu0 0.0
  %1763 = vmatpush1.msra.mxu0 0.0
  %1764 = vmatprep.subr.mxu0 0.0
  %1765 = vmatpush1.msra.mxu0 0.0
  %1766 = vmatprep.subr.mxu0 0.0
  %1767 = vmatpush1.msra.mxu0 0.0
  %1768 = vmatprep.subr.mxu0 0.0
  %1769 = vmatpush1.msra.mxu0 0.0
  %1770 = vmatprep.subr.mxu0 0.0
  %1771 = vmatpush1.msra.mxu0 0.0
  %1772 = vmatprep.subr.mxu0 0.0
  %1773 = vmatpush1.msra.mxu0 0.0
  %1774 = vmatprep.subr.mxu0 0.0
  %1775 = vmatpush1.msra.mxu0 0.0
  %1776 = vmatprep.subr.mxu0 0.0
  %1777 = vmatpush1.msra.mxu0 0.0
  %1778 = vmatprep.subr.mxu0 0.0
  %1779 = vmatpush1.msra.mxu0 0.0
  %1780 = vmatprep.subr.mxu0 0.0
  %1781 = vmatpush1.msra.mxu0 0.0
  %1782 = vmatprep.subr.mxu0 0.0
  %1783 = vmatpush1.msra.mxu0 0.0
  %1784 = vmatprep.subr.mxu0 0.0
  %1785 = vmatpush1.msra.mxu0 0.0
  %1786 = vmatprep.subr.mxu0 0.0
  %1787 = vmatpush1.msra.mxu0 0.0
  %1788 = vmatprep.subr.mxu0 0.0
  %1789 = vmatpush1.msra.mxu0 0.0
  %1790 = vmatprep.subr.mxu0 0.0
  %1791 = vmatpush1.msra.mxu0 0.0
  %1792 = vmatprep.subr.mxu0 0.0
  %1793 = vmatpush1.msra.mxu0 0.0
  %1794 = vmatprep.subr.mxu0 0.0
  %1795 = vmatpush1.msra.mxu0 0.0
  %1796 = vmatprep.subr.mxu0 0.0
  %1797 = vmatpush1.msra.mxu0 0.0
  %1798 = vmatprep.subr.mxu0 0.0
  %1799 = vmatpush1.msra.mxu0 0.0
  %1800 = vmatprep.subr.mxu0 0.0
  %1801 = vmatpush1.msra.mxu0 0.0
  %1802 = vmatprep.subr.mxu0 0.0
  %1803 = vmatpush1.msra.mxu0 0.0
  %1804 = vmatprep.subr.mxu0 0.0
  %1805 = vmatpush1.msra.mxu0 0.0
  %1806 = vmatprep.subr.mxu0 0.0
  %1807 = vmatpush1.msra.mxu0 0.0
  %1808 = vmatprep.subr.mxu0 0.0
  %1809 = vmatpush1.msra.mxu0 0.0
  %1810 = vmatprep.subr.mxu0 0.0
  %1811 = vmatpush1.msra.mxu0 0.0
  %1812 = vmatprep.subr.mxu0 0.0
  %1813 = vmatpush1.msra.mxu0 0.0
  %1814 = vmatprep.subr.mxu0 0.0
  %1815 = vmatpush1.msra.mxu0 0.0
  %1816 = vmatprep.mubr.f32.mxu0 0.0
  %1817 = vmatmul.mubr.f32.gmra.mrb[0].mxu0 %v1659
  %v1818 = vpop.f32.mrb[0].mxu0
  %v1819 = vadd.f32 0.0, %v1818
  %v1820 = vpop.f32.mrb[0].mxu0
  %1821 = vdwg.mxu0
  %v1822 = vadd.f32 %v277, %v1819
  %v1823 = vtanh.pop %v1822
  %v1824 = vadd.f32 %v1823, 1.0
  %v1825 = vmul.f32 %v1824, 0.5
  %v1826 = vmul.f32 %v1825, %v1567
  %1828 = vrot.lane.b32.xlu0 %v1823, 64
  %v1829 = vpop.permute.xlu0 %1828
  %v1831 = vmul.f32 %v1825, %v1829
  %1833 = vrot.lane.b32.xlu0 %v1831, 32
  %v1834 = vpop.permute.xlu0 %1833
  %v1836 = vadd.f32 %v1826, %v1834
  %v1837 = vtanh.pop %v1836
  %1839 = vrot.lane.b32.xlu0 %v1837, 64
  %v1840 = vpop.permute.xlu0 %1839
  %v1842 = vmul.f32 %v1825, %v1840
  %1844 = vrot.lane.b32.xlu0 %v1751, 32
  %v1845 = vpop.permute.xlu0 %1844
  %v1846 = vsel %vm312, %v1845, 0
  %1848 = vmatprep.subr.mxu0 0.0
  %1849 = vmatpush1.msra.mxu0 %v72
  %1850 = vmatprep.subr.mxu0 0.0
  %1851 = vmatpush1.msra.mxu0 %v73
  %1852 = vmatprep.subr.mxu0 0.0
  %1853 = vmatpush1.msra.mxu0 %v74
  %1854 = vmatprep.subr.mxu0 0.0
  %1855 = vmatpush1.msra.mxu0 %v75
  %1856 = vmatprep.subr.mxu0 0.0
  %1857 = vmatpush1.msra.mxu0 0.0
  %1858 = vmatprep.subr.mxu0 0.0
  %1859 = vmatpush1.msra.mxu0 0.0
  %1860 = vmatprep.subr.mxu0 0.0
  %1861 = vmatpush1.msra.mxu0 0.0
  %1862 = vmatprep.subr.mxu0 0.0
  %1863 = vmatpush1.msra.mxu0 0.0
  %1864 = vmatprep.subr.mxu0 0.0
  %1865 = vmatpush1.msra.mxu0 0.0
  %1866 = vmatprep.subr.mxu0 0.0
  %1867 = vmatpush1.msra.mxu0 0.0
  %1868 = vmatprep.subr.mxu0 0.0
  %1869 = vmatpush1.msra.mxu0 0.0
  %1870 = vmatprep.subr.mxu0 0.0
  %1871 = vmatpush1.msra.mxu0 0.0
  %1872 = vmatprep.subr.mxu0 0.0
  %1873 = vmatpush1.msra.mxu0 0.0
  %1874 = vmatprep.subr.mxu0 0.0
  %1875 = vmatpush1.msra.mxu0 0.0
  %1876 = vmatprep.subr.mxu0 0.0
  %1877 = vmatpush1.msra.mxu0 0.0
  %1878 = vmatprep.subr.mxu0 0.0
  %1879 = vmatpush1.msra.mxu0 0.0
  %1880 = vmatprep.subr.mxu0 0.0
  %1881 = vmatpush1.msra.mxu0 0.0
  %1882 = vmatprep.subr.mxu0 0.0
  %1883 = vmatpush1.msra.mxu0 0.0
  %1884 = vmatprep.subr.mxu0 0.0
  %1885 = vmatpush1.msra.mxu0 0.0
  %1886 = vmatprep.subr.mxu0 0.0
  %1887 = vmatpush1.msra.mxu0 0.0
  %1888 = vmatprep.subr.mxu0 0.0
  %1889 = vmatpush1.msra.mxu0 0.0
  %1890 = vmatprep.subr.mxu0 0.0
  %1891 = vmatpush1.msra.mxu0 0.0
  %1892 = vmatprep.subr.mxu0 0.0
  %1893 = vmatpush1.msra.mxu0 0.0
  %1894 = vmatprep.subr.mxu0 0.0
  %1895 = vmatpush1.msra.mxu0 0.0
  %1896 = vmatprep.subr.mxu0 0.0
  %1897 = vmatpush1.msra.mxu0 0.0
  %1898 = vmatprep.subr.mxu0 0.0
  %1899 = vmatpush1.msra.mxu0 0.0
  %1900 = vmatprep.subr.mxu0 0.0
  %1901 = vmatpush1.msra.mxu0 0.0
  %1902 = vmatprep.subr.mxu0 0.0
  %1903 = vmatpush1.msra.mxu0 0.0
  %1904 = vmatprep.subr.mxu0 0.0
  %1905 = vmatpush1.msra.mxu0 0.0
  %1906 = vmatprep.subr.mxu0 0.0
  %1907 = vmatpush1.msra.mxu0 0.0
  %1908 = vmatprep.subr.mxu0 0.0
  %1909 = vmatpush1.msra.mxu0 0.0
  %1910 = vmatprep.subr.mxu0 0.0
  %1911 = vmatpush1.msra.mxu0 0.0
  %1912 = vmatprep.mubr.f32.mxu0 0.0
  %1913 = vmatmul.mubr.f32.gmra.mrb[0].mxu0 %v1846
  %v1914 = vpop.f32.mrb[0].mxu0
  %v1915 = vadd.f32 0.0, %v1914
  %v1916 = vpop.f32.mrb[0].mxu0
  %1917 = vdwg.mxu0
  %v1920 = vunpack.c.l.s4 1983009808
  %v1921 = vunpack.c.0.s8 %v1920
  %v1922 = vlaneseq
  %v1923 = vshrl.u32 %v1922, 7
  %v1924 = vsub.s32 %v1921, %v1923
  %v1925 = vrot.slane %v1842, %v1924
  %1926 = vrot.lane.b32.xlu0 %v1925, 32
  %v1927 = vpop.permute.xlu0 %1926
  %v1928 = vsel %vm312, %v1927, 0
  %1930 = vmatprep.subr.mxu0 0.0
  %1931 = vmatpush1.msra.mxu0 %v68
  %1932 = vmatprep.subr.mxu0 0.0
  %1933 = vmatpush1.msra.mxu0 %v69
  %1934 = vmatprep.subr.mxu0 0.0
  %1935 = vmatpush1.msra.mxu0 %v70
  %1936 = vmatprep.subr.mxu0 0.0
  %1937 = vmatpush1.msra.mxu0 %v71
  %1938 = vmatprep.subr.mxu0 0.0
  %1939 = vmatpush1.msra.mxu0 0.0
  %1940 = vmatprep.subr.mxu0 0.0
  %1941 = vmatpush1.msra.mxu0 0.0
  %1942 = vmatprep.subr.mxu0 0.0
  %1943 = vmatpush1.msra.mxu0 0.0
  %1944 = vmatprep.subr.mxu0 0.0
  %1945 = vmatpush1.msra.mxu0 0.0
  %1946 = vmatprep.subr.mxu0 0.0
  %1947 = vmatpush1.msra.mxu0 0.0
  %1948 = vmatprep.subr.mxu0 0.0
  %1949 = vmatpush1.msra.mxu0 0.0
  %1950 = vmatprep.subr.mxu0 0.0
  %1951 = vmatpush1.msra.mxu0 0.0
  %1952 = vmatprep.subr.mxu0 0.0
  %1953 = vmatpush1.msra.mxu0 0.0
  %1954 = vmatprep.subr.mxu0 0.0
  %1955 = vmatpush1.msra.mxu0 0.0
  %1956 = vmatprep.subr.mxu0 0.0
  %1957 = vmatpush1.msra.mxu0 0.0
  %1958 = vmatprep.subr.mxu0 0.0
  %1959 = vmatpush1.msra.mxu0 0.0
  %1960 = vmatprep.subr.mxu0 0.0
  %1961 = vmatpush1.msra.mxu0 0.0
  %1962 = vmatprep.subr.mxu0 0.0
  %1963 = vmatpush1.msra.mxu0 0.0
  %1964 = vmatprep.subr.mxu0 0.0
  %1965 = vmatpush1.msra.mxu0 0.0
  %1966 = vmatprep.subr.mxu0 0.0
  %1967 = vmatpush1.msra.mxu0 0.0
  %1968 = vmatprep.subr.mxu0 0.0
  %1969 = vmatpush1.msra.mxu0 0.0
  %1970 = vmatprep.subr.mxu0 0.0
  %1971 = vmatpush1.msra.mxu0 0.0
  %1972 = vmatprep.subr.mxu0 0.0
  %1973 = vmatpush1.msra.mxu0 0.0
  %1974 = vmatprep.subr.mxu0 0.0
  %1975 = vmatpush1.msra.mxu0 0.0
  %1976 = vmatprep.subr.mxu0 0.0
  %1977 = vmatpush1.msra.mxu0 0.0
  %1978 = vmatprep.subr.mxu0 0.0
  %1979 = vmatpush1.msra.mxu0 0.0
  %1980 = vmatprep.subr.mxu0 0.0
  %1981 = vmatpush1.msra.mxu0 0.0
  %1982 = vmatprep.subr.mxu0 0.0
  %1983 = vmatpush1.msra.mxu0 0.0
  %1984 = vmatprep.subr.mxu0 0.0
  %1985 = vmatpush1.msra.mxu0 0.0
  %1986 = vmatprep.subr.mxu0 0.0
  %1987 = vmatpush1.msra.mxu0 0.0
  %1988 = vmatprep.subr.mxu0 0.0
  %1989 = vmatpush1.msra.mxu0 0.0
  %1990 = vmatprep.subr.mxu0 0.0
  %1991 = vmatpush1.msra.mxu0 0.0
  %1992 = vmatprep.subr.mxu0 0.0
  %1993 = vmatpush1.msra.mxu0 0.0
  %1994 = vmatprep.mubr.f32.mxu0 0.0
  %1995 = vmatmul.mubr.f32.gmra.mrb[0].mxu0 %v1928
  %v1996 = vpop.f32.mrb[0].mxu0
  %v1997 = vadd.f32 %v1915, %v1996
  %v1998 = vpop.f32.mrb[0].mxu0
  %1999 = vdwg.mxu0
  %v2000 = vadd.f32 %v1997, %v89
  %v2001 = vtanh.pop %v2000
  %v2002 = vadd.f32 %v2001, 1.0
  %v2003 = vmul.f32 %v2002, 0.5
  %v2004 = vmul.f32 %v2003, %v1745
  %2006 = vrot.lane.b32.xlu0 %v2001, 64
  %v2007 = vpop.permute.xlu0 %2006
  %v2009 = vmul.f32 %v2003, %v2007
  %2011 = vrot.lane.b32.xlu0 %v2009, 32
  %v2012 = vpop.permute.xlu0 %2011
  %v2014 = vadd.f32 %v2004, %v2012
  %v2015 = vtanh.pop %v2014
  %2017 = vrot.lane.b32.xlu0 %v2015, 64
  %v2018 = vpop.permute.xlu0 %2017
  %v2020 = vmul.f32 %v2003, %v2018
  %2021 = vmatprep.subr.mxu0 0.0
  %2022 = vmatpush1.msra.mxu0 %v64
  %2023 = vmatprep.subr.mxu0 0.0
  %2024 = vmatpush1.msra.mxu0 %v65
  %2025 = vmatprep.subr.mxu0 0.0
  %2026 = vmatpush1.msra.mxu0 %v66
  %2027 = vmatprep.subr.mxu0 0.0
  %2028 = vmatpush1.msra.mxu0 %v67
  %2029 = vmatprep.subr.mxu0 0.0
  %2030 = vmatpush1.msra.mxu0 0.0
  %2031 = vmatprep.subr.mxu0 0.0
  %2032 = vmatpush1.msra.mxu0 0.0
  %2033 = vmatprep.subr.mxu0 0.0
  %2034 = vmatpush1.msra.mxu0 0.0
  %2035 = vmatprep.subr.mxu0 0.0
  %2036 = vmatpush1.msra.mxu0 0.0
  %2037 = vmatprep.subr.mxu0 0.0
  %2038 = vmatpush1.msra.mxu0 0.0
  %2039 = vmatprep.subr.mxu0 0.0
  %2040 = vmatpush1.msra.mxu0 0.0
  %2041 = vmatprep.subr.mxu0 0.0
  %2042 = vmatpush1.msra.mxu0 0.0
  %2043 = vmatprep.subr.mxu0 0.0
  %2044 = vmatpush1.msra.mxu0 0.0
  %2045 = vmatprep.subr.mxu0 0.0
  %2046 = vmatpush1.msra.mxu0 0.0
  %2047 = vmatprep.subr.mxu0 0.0
  %2048 = vmatpush1.msra.mxu0 0.0
  %2049 = vmatprep.subr.mxu0 0.0
  %2050 = vmatpush1.msra.mxu0 0.0
  %2051 = vmatprep.subr.mxu0 0.0
  %2052 = vmatpush1.msra.mxu0 0.0
  %2053 = vmatprep.subr.mxu0 0.0
  %2054 = vmatpush1.msra.mxu0 0.0
  %2055 = vmatprep.subr.mxu0 0.0
  %2056 = vmatpush1.msra.mxu0 0.0
  %2057 = vmatprep.subr.mxu0 0.0
  %2058 = vmatpush1.msra.mxu0 0.0
  %2059 = vmatprep.subr.mxu0 0.0
  %2060 = vmatpush1.msra.mxu0 0.0
  %2061 = vmatprep.subr.mxu0 0.0
  %2062 = vmatpush1.msra.mxu0 0.0
  %2063 = vmatprep.subr.mxu0 0.0
  %2064 = vmatpush1.msra.mxu0 0.0
  %2065 = vmatprep.subr.mxu0 0.0
  %2066 = vmatpush1.msra.mxu0 0.0
  %2067 = vmatprep.subr.mxu0 0.0
  %2068 = vmatpush1.msra.mxu0 0.0
  %2069 = vmatprep.subr.mxu0 0.0
  %2070 = vmatpush1.msra.mxu0 0.0
  %2071 = vmatprep.subr.mxu0 0.0
  %2072 = vmatpush1.msra.mxu0 0.0
  %2073 = vmatprep.subr.mxu0 0.0
  %2074 = vmatpush1.msra.mxu0 0.0
  %2075 = vmatprep.subr.mxu0 0.0
  %2076 = vmatpush1.msra.mxu0 0.0
  %2077 = vmatprep.subr.mxu0 0.0
  %2078 = vmatpush1.msra.mxu0 0.0
  %2079 = vmatprep.subr.mxu0 0.0
  %2080 = vmatpush1.msra.mxu0 0.0
  %2081 = vmatprep.subr.mxu0 0.0
  %2082 = vmatpush1.msra.mxu0 0.0
  %2083 = vmatprep.subr.mxu0 0.0
  %2084 = vmatpush1.msra.mxu0 0.0
  %2085 = vmatprep.mubr.f32.mxu0 0.0
  %2086 = vmatmul.mubr.f32.gmra.mrb[0].mxu0 %v1928
  %v2087 = vpop.f32.mrb[0].mxu0
  %v2088 = vadd.f32 0.0, %v2087
  %v2089 = vpop.f32.mrb[0].mxu0
  %2090 = vdwg.mxu0
  %v2091 = vadd.f32 %v279, %v2088
  %v2092 = vtanh.pop %v2091
  %v2093 = vadd.f32 %v2092, 1.0
  %v2094 = vmul.f32 %v2093, 0.5
  %v2095 = vmul.f32 %v2094, %v1836
  %2097 = vrot.lane.b32.xlu0 %v2092, 64
  %v2098 = vpop.permute.xlu0 %2097
  %v2100 = vmul.f32 %v2094, %v2098
  %2102 = vrot.lane.b32.xlu0 %v2100, 32
  %v2103 = vpop.permute.xlu0 %2102
  %v2105 = vadd.f32 %v2095, %v2103
  %v2106 = vtanh.pop %v2105
  %2108 = vrot.lane.b32.xlu0 %v2106, 64
  %v2109 = vpop.permute.xlu0 %2108
  %v2111 = vmul.f32 %v2094, %v2109
  %2113 = vrot.lane.b32.xlu0 %v2020, 32
  %v2114 = vpop.permute.xlu0 %2113
  %v2115 = vsel %vm312, %v2114, 0
  %2117 = vmatprep.subr.mxu0 0.0
  %2118 = vmatpush1.msra.mxu0 %v72
  %2119 = vmatprep.subr.mxu0 0.0
  %2120 = vmatpush1.msra.mxu0 %v73
  %2121 = vmatprep.subr.mxu0 0.0
  %2122 = vmatpush1.msra.mxu0 %v74
  %2123 = vmatprep.subr.mxu0 0.0
  %2124 = vmatpush1.msra.mxu0 %v75
  %2125 = vmatprep.subr.mxu0 0.0
  %2126 = vmatpush1.msra.mxu0 0.0
  %2127 = vmatprep.subr.mxu0 0.0
  %2128 = vmatpush1.msra.mxu0 0.0
  %2129 = vmatprep.subr.mxu0 0.0
  %2130 = vmatpush1.msra.mxu0 0.0
  %2131 = vmatprep.subr.mxu0 0.0
  %2132 = vmatpush1.msra.mxu0 0.0
  %2133 = vmatprep.subr.mxu0 0.0
  %2134 = vmatpush1.msra.mxu0 0.0
  %2135 = vmatprep.subr.mxu0 0.0
  %2136 = vmatpush1.msra.mxu0 0.0
  %2137 = vmatprep.subr.mxu0 0.0
  %2138 = vmatpush1.msra.mxu0 0.0
  %2139 = vmatprep.subr.mxu0 0.0
  %2140 = vmatpush1.msra.mxu0 0.0
  %2141 = vmatprep.subr.mxu0 0.0
  %2142 = vmatpush1.msra.mxu0 0.0
  %2143 = vmatprep.subr.mxu0 0.0
  %2144 = vmatpush1.msra.mxu0 0.0
  %2145 = vmatprep.subr.mxu0 0.0
  %2146 = vmatpush1.msra.mxu0 0.0
  %2147 = vmatprep.subr.mxu0 0.0
  %2148 = vmatpush1.msra.mxu0 0.0
  %2149 = vmatprep.subr.mxu0 0.0
  %2150 = vmatpush1.msra.mxu0 0.0
  %2151 = vmatprep.subr.mxu0 0.0
  %2152 = vmatpush1.msra.mxu0 0.0
  %2153 = vmatprep.subr.mxu0 0.0
  %2154 = vmatpush1.msra.mxu0 0.0
  %2155 = vmatprep.subr.mxu0 0.0
  %2156 = vmatpush1.msra.mxu0 0.0
  %2157 = vmatprep.subr.mxu0 0.0
  %2158 = vmatpush1.msra.mxu0 0.0
  %2159 = vmatprep.subr.mxu0 0.0
  %2160 = vmatpush1.msra.mxu0 0.0
  %2161 = vmatprep.subr.mxu0 0.0
  %2162 = vmatpush1.msra.mxu0 0.0
  %2163 = vmatprep.subr.mxu0 0.0
  %2164 = vmatpush1.msra.mxu0 0.0
  %2165 = vmatprep.subr.mxu0 0.0
  %2166 = vmatpush1.msra.mxu0 0.0
  %2167 = vmatprep.subr.mxu0 0.0
  %2168 = vmatpush1.msra.mxu0 0.0
  %2169 = vmatprep.subr.mxu0 0.0
  %2170 = vmatpush1.msra.mxu0 0.0
  %2171 = vmatprep.subr.mxu0 0.0
  %2172 = vmatpush1.msra.mxu0 0.0
  %2173 = vmatprep.subr.mxu0 0.0
  %2174 = vmatpush1.msra.mxu0 0.0
  %2175 = vmatprep.subr.mxu0 0.0
  %2176 = vmatpush1.msra.mxu0 0.0
  %2177 = vmatprep.subr.mxu0 0.0
  %2178 = vmatpush1.msra.mxu0 0.0
  %2179 = vmatprep.subr.mxu0 0.0
  %2180 = vmatpush1.msra.mxu0 0.0
  %2181 = vmatprep.mubr.f32.mxu0 0.0
  %2182 = vmatmul.mubr.f32.gmra.mrb[0].mxu0 %v2115
  %v2183 = vpop.f32.mrb[0].mxu0
  %v2184 = vadd.f32 0.0, %v2183
  %v2185 = vpop.f32.mrb[0].mxu0
  %2186 = vdwg.mxu0
  %v2189 = vunpack.c.l.s4 1983009808
  %v2190 = vunpack.c.0.s8 %v2189
  %v2191 = vlaneseq
  %v2192 = vshrl.u32 %v2191, 7
  %v2193 = vsub.s32 %v2190, %v2192
  %v2194 = vrot.slane %v2111, %v2193
  %2195 = vrot.lane.b32.xlu0 %v2194, 32
  %v2196 = vpop.permute.xlu0 %2195
  %v2197 = vsel %vm312, %v2196, 0
  %2199 = vmatprep.subr.mxu0 0.0
  %2200 = vmatpush1.msra.mxu0 %v68
  %2201 = vmatprep.subr.mxu0 0.0
  %2202 = vmatpush1.msra.mxu0 %v69
  %2203 = vmatprep.subr.mxu0 0.0
  %2204 = vmatpush1.msra.mxu0 %v70
  %2205 = vmatprep.subr.mxu0 0.0
  %2206 = vmatpush1.msra.mxu0 %v71
  %2207 = vmatprep.subr.mxu0 0.0
  %2208 = vmatpush1.msra.mxu0 0.0
  %2209 = vmatprep.subr.mxu0 0.0
  %2210 = vmatpush1.msra.mxu0 0.0
  %2211 = vmatprep.subr.mxu0 0.0
  %2212 = vmatpush1.msra.mxu0 0.0
  %2213 = vmatprep.subr.mxu0 0.0
  %2214 = vmatpush1.msra.mxu0 0.0
  %2215 = vmatprep.subr.mxu0 0.0
  %2216 = vmatpush1.msra.mxu0 0.0
  %2217 = vmatprep.subr.mxu0 0.0
  %2218 = vmatpush1.msra.mxu0 0.0
  %2219 = vmatprep.subr.mxu0 0.0
  %2220 = vmatpush1.msra.mxu0 0.0
  %2221 = vmatprep.subr.mxu0 0.0
  %2222 = vmatpush1.msra.mxu0 0.0
  %2223 = vmatprep.subr.mxu0 0.0
  %2224 = vmatpush1.msra.mxu0 0.0
  %2225 = vmatprep.subr.mxu0 0.0
  %2226 = vmatpush1.msra.mxu0 0.0
  %2227 = vmatprep.subr.mxu0 0.0
  %2228 = vmatpush1.msra.mxu0 0.0
  %2229 = vmatprep.subr.mxu0 0.0
  %2230 = vmatpush1.msra.mxu0 0.0
  %2231 = vmatprep.subr.mxu0 0.0
  %2232 = vmatpush1.msra.mxu0 0.0
  %2233 = vmatprep.subr.mxu0 0.0
  %2234 = vmatpush1.msra.mxu0 0.0
  %2235 = vmatprep.subr.mxu0 0.0
  %2236 = vmatpush1.msra.mxu0 0.0
  %2237 = vmatprep.subr.mxu0 0.0
  %2238 = vmatpush1.msra.mxu0 0.0
  %2239 = vmatprep.subr.mxu0 0.0
  %2240 = vmatpush1.msra.mxu0 0.0
  %2241 = vmatprep.subr.mxu0 0.0
  %2242 = vmatpush1.msra.mxu0 0.0
  %2243 = vmatprep.subr.mxu0 0.0
  %2244 = vmatpush1.msra.mxu0 0.0
  %2245 = vmatprep.subr.mxu0 0.0
  %2246 = vmatpush1.msra.mxu0 0.0
  %2247 = vmatprep.subr.mxu0 0.0
  %2248 = vmatpush1.msra.mxu0 0.0
  %2249 = vmatprep.subr.mxu0 0.0
  %2250 = vmatpush1.msra.mxu0 0.0
  %2251 = vmatprep.subr.mxu0 0.0
  %2252 = vmatpush1.msra.mxu0 0.0
  %2253 = vmatprep.subr.mxu0 0.0
  %2254 = vmatpush1.msra.mxu0 0.0
  %2255 = vmatprep.subr.mxu0 0.0
  %2256 = vmatpush1.msra.mxu0 0.0
  %2257 = vmatprep.subr.mxu0 0.0
  %2258 = vmatpush1.msra.mxu0 0.0
  %2259 = vmatprep.subr.mxu0 0.0
  %2260 = vmatpush1.msra.mxu0 0.0
  %2261 = vmatprep.subr.mxu0 0.0
  %2262 = vmatpush1.msra.mxu0 0.0
  %2263 = vmatprep.mubr.f32.mxu0 0.0
  %2264 = vmatmul.mubr.f32.gmra.mrb[0].mxu0 %v2197
  %v2265 = vpop.f32.mrb[0].mxu0
  %v2266 = vadd.f32 %v2184, %v2265
  %v2267 = vpop.f32.mrb[0].mxu0
  %2268 = vdwg.mxu0
  %v2269 = vadd.f32 %v2266, %v89
  %v2270 = vtanh.pop %v2269
  %v2271 = vadd.f32 %v2270, 1.0
  %v2272 = vmul.f32 %v2271, 0.5
  %v2273 = vmul.f32 %v2272, %v2014
  %2275 = vrot.lane.b32.xlu0 %v2270, 64
  %v2276 = vpop.permute.xlu0 %2275
  %v2278 = vmul.f32 %v2272, %v2276
  %2280 = vrot.lane.b32.xlu0 %v2278, 32
  %v2281 = vpop.permute.xlu0 %2280
  %v2283 = vadd.f32 %v2273, %v2281
  %v2284 = vtanh.pop %v2283
  %2286 = vrot.lane.b32.xlu0 %v2284, 64
  %v2287 = vpop.permute.xlu0 %2286
  %v2289 = vmul.f32 %v2272, %v2287
  %v2290 = vld [vmem:[%s8] sm:$0xff]
  %v2291 = vld [vmem:[%s8 + $0x8] sm:$0xff]
  %v2292 = vld [vmem:[%s8 + $0x10] sm:$0xff]
  %v2293 = vld [vmem:[%s8 + $0x18] sm:$0xff]
  %v2294 = vld [vmem:[%s9] sm:$0x1]
  %v2296 = vlaneseq
  %v2297 = vshrl.u32 %v2296, 7
  %v2298 = vsub.s32 0, %v2297
  %v2299 = vrot.slane %v2294, %v2298
  %2302 = vrot.lane.b32.xlu0 %v2289, 32
  %v2303 = vpop.permute.xlu0 %2302
  %v2304 = vsel %vm312, %v2303, 0
  %2306 = vmatprep.subr.mxu0 0.0
  %2307 = vmatpush1.msra.mxu0 %v2290
  %2308 = vmatprep.subr.mxu0 0.0
  %2309 = vmatpush1.msra.mxu0 %v2291
  %2310 = vmatprep.subr.mxu0 0.0
  %2311 = vmatpush1.msra.mxu0 %v2292
  %2312 = vmatprep.subr.mxu0 0.0
  %2313 = vmatpush1.msra.mxu0 %v2293
  %2314 = vmatprep.subr.mxu0 0.0
  %2315 = vmatpush1.msra.mxu0 0.0
  %2316 = vmatprep.subr.mxu0 0.0
  %2317 = vmatpush1.msra.mxu0 0.0
  %2318 = vmatprep.subr.mxu0 0.0
  %2319 = vmatpush1.msra.mxu0 0.0
  %2320 = vmatprep.subr.mxu0 0.0
  %2321 = vmatpush1.msra.mxu0 0.0
  %2322 = vmatprep.subr.mxu0 0.0
  %2323 = vmatpush1.msra.mxu0 0.0
  %2324 = vmatprep.subr.mxu0 0.0
  %2325 = vmatpush1.msra.mxu0 0.0
  %2326 = vmatprep.subr.mxu0 0.0
  %2327 = vmatpush1.msra.mxu0 0.0
  %2328 = vmatprep.subr.mxu0 0.0
  %2329 = vmatpush1.msra.mxu0 0.0
  %2330 = vmatprep.subr.mxu0 0.0
  %2331 = vmatpush1.msra.mxu0 0.0
  %2332 = vmatprep.subr.mxu0 0.0
  %2333 = vmatpush1.msra.mxu0 0.0
  %2334 = vmatprep.subr.mxu0 0.0
  %2335 = vmatpush1.msra.mxu0 0.0
  %2336 = vmatprep.subr.mxu0 0.0
  %2337 = vmatpush1.msra.mxu0 0.0
  %2338 = vmatprep.subr.mxu0 0.0
  %2339 = vmatpush1.msra.mxu0 0.0
  %2340 = vmatprep.subr.mxu0 0.0
  %2341 = vmatpush1.msra.mxu0 0.0
  %2342 = vmatprep.subr.mxu0 0.0
  %2343 = vmatpush1.msra.mxu0 0.0
  %2344 = vmatprep.subr.mxu0 0.0
  %2345 = vmatpush1.msra.mxu0 0.0
  %2346 = vmatprep.subr.mxu0 0.0
  %2347 = vmatpush1.msra.mxu0 0.0
  %2348 = vmatprep.subr.mxu0 0.0
  %2349 = vmatpush1.msra.mxu0 0.0
  %2350 = vmatprep.subr.mxu0 0.0
  %2351 = vmatpush1.msra.mxu0 0.0
  %2352 = vmatprep.subr.mxu0 0.0
  %2353 = vmatpush1.msra.mxu0 0.0
  %2354 = vmatprep.subr.mxu0 0.0
  %2355 = vmatpush1.msra.mxu0 0.0
  %2356 = vmatprep.subr.mxu0 0.0
  %2357 = vmatpush1.msra.mxu0 0.0
  %2358 = vmatprep.subr.mxu0 0.0
  %2359 = vmatpush1.msra.mxu0 0.0
  %2360 = vmatprep.subr.mxu0 0.0
  %2361 = vmatpush1.msra.mxu0 0.0
  %2362 = vmatprep.subr.mxu0 0.0
  %2363 = vmatpush1.msra.mxu0 0.0
  %2364 = vmatprep.subr.mxu0 0.0
  %2365 = vmatpush1.msra.mxu0 0.0
  %2366 = vmatprep.subr.mxu0 0.0
  %2367 = vmatpush1.msra.mxu0 0.0
  %2368 = vmatprep.subr.mxu0 0.0
  %2369 = vmatpush1.msra.mxu0 0.0
  %2370 = vmatprep.mubr.f32.mxu0 0.0
  %2371 = vmatmul.mubr.f32.gmra.mrb[0].mxu0 %v2304
  %v2372 = vpop.f32.mrb[0].mxu0
  %v2373 = vadd.f32 %v2299, %v2372
  %v2374 = vpop.f32.mrb[0].mxu0
  %2375 = vdwg.mxu0
  %vm2376 = vcmask 254976
  %2377 = vst.msk [vmem:[%s20] sm:$0x3] %vm2376, %v2373
  %v2378 = vmul.f32 %v2373, 0.5
  %v2379 = vmul.f32 %v2378, 1.442695
  %v2380 = vpow.pop %v2379
  %v2381 = vld [vmem:[%s1] sm:$0x3]
  %2383 = vrot.lane.b32.xlu0 %v2381, 16
  %v2384 = vpop.permute.xlu0 %2383
  %v2386 = vmul.f32 %v2380, %v2384
  %2388 = vrot.lane.b32.xlu0 %v2386, 112
  %v2389 = vpop.permute.xlu0 %2388
  %v2391 = vadd.f32 %v2373, %v2389
  %v2392 = vld [vmem:[%s10] sm:$0xff]
  %v2393 = vld [vmem:[%s10 + $0x8] sm:$0xff]
  %v2394 = vld [vmem:[%s11] sm:$0x1]
  %v2396 = vlaneseq
  %v2397 = vshrl.u32 %v2396, 7
  %v2398 = vsub.s32 0, %v2397
  %v2399 = vrot.slane %v2394, %v2398
  %vm2401 = vcmask 130048
  %v2403 = vsel %vm2401, %v2391, 0
  %2405 = vmatprep.subr.mxu0 0.0
  %2406 = vmatpush1.msra.mxu0 %v2392
  %2407 = vmatprep.subr.mxu0 0.0
  %2408 = vmatpush1.msra.mxu0 %v2393
  %2409 = vmatprep.subr.mxu0 0.0
  %2410 = vmatpush1.msra.mxu0 0.0
  %2411 = vmatprep.subr.mxu0 0.0
  %2412 = vmatpush1.msra.mxu0 0.0
  %2413 = vmatprep.subr.mxu0 0.0
  %2414 = vmatpush1.msra.mxu0 0.0
  %2415 = vmatprep.subr.mxu0 0.0
  %2416 = vmatpush1.msra.mxu0 0.0
  %2417 = vmatprep.subr.mxu0 0.0
  %2418 = vmatpush1.msra.mxu0 0.0
  %2419 = vmatprep.subr.mxu0 0.0
  %2420 = vmatpush1.msra.mxu0 0.0
  %2421 = vmatprep.subr.mxu0 0.0
  %2422 = vmatpush1.msra.mxu0 0.0
  %2423 = vmatprep.subr.mxu0 0.0
  %2424 = vmatpush1.msra.mxu0 0.0
  %2425 = vmatprep.subr.mxu0 0.0
  %2426 = vmatpush1.msra.mxu0 0.0
  %2427 = vmatprep.subr.mxu0 0.0
  %2428 = vmatpush1.msra.mxu0 0.0
  %2429 = vmatprep.subr.mxu0 0.0
  %2430 = vmatpush1.msra.mxu0 0.0
  %2431 = vmatprep.subr.mxu0 0.0
  %2432 = vmatpush1.msra.mxu0 0.0
  %2433 = vmatprep.subr.mxu0 0.0
  %2434 = vmatpush1.msra.mxu0 0.0
  %2435 = vmatprep.subr.mxu0 0.0
  %2436 = vmatpush1.msra.mxu0 0.0
  %2437 = vmatprep.subr.mxu0 0.0
  %2438 = vmatpush1.msra.mxu0 0.0
  %2439 = vmatprep.subr.mxu0 0.0
  %2440 = vmatpush1.msra.mxu0 0.0
  %2441 = vmatprep.subr.mxu0 0.0
  %2442 = vmatpush1.msra.mxu0 0.0
  %2443 = vmatprep.subr.mxu0 0.0
  %2444 = vmatpush1.msra.mxu0 0.0
  %2445 = vmatprep.subr.mxu0 0.0
  %2446 = vmatpush1.msra.mxu0 0.0
  %2447 = vmatprep.subr.mxu0 0.0
  %2448 = vmatpush1.msra.mxu0 0.0
  %2449 = vmatprep.subr.mxu0 0.0
  %2450 = vmatpush1.msra.mxu0 0.0
  %2451 = vmatprep.subr.mxu0 0.0
  %2452 = vmatpush1.msra.mxu0 0.0
  %2453 = vmatprep.subr.mxu0 0.0
  %2454 = vmatpush1.msra.mxu0 0.0
  %2455 = vmatprep.subr.mxu0 0.0
  %2456 = vmatpush1.msra.mxu0 0.0
  %2457 = vmatprep.subr.mxu0 0.0
  %2458 = vmatpush1.msra.mxu0 0.0
  %2459 = vmatprep.subr.mxu0 0.0
  %2460 = vmatpush1.msra.mxu0 0.0
  %2461 = vmatprep.subr.mxu0 0.0
  %2462 = vmatpush1.msra.mxu0 0.0
  %2463 = vmatprep.subr.mxu0 0.0
  %2464 = vmatpush1.msra.mxu0 0.0
  %2465 = vmatprep.subr.mxu0 0.0
  %2466 = vmatpush1.msra.mxu0 0.0
  %2467 = vmatprep.subr.mxu0 0.0
  %2468 = vmatpush1.msra.mxu0 0.0
  %2469 = vmatprep.mubr.f32.mxu0 0.0
  %2470 = vmatmul.mubr.f32.gmra.mrb[0].mxu0 %v2403
  %v2471 = vpop.f32.mrb[0].mxu0
  %v2472 = vadd.f32 %v2399, %v2471
  %v2473 = vpop.f32.mrb[0].mxu0
  %2474 = vdwg.mxu0
  %v2475 = vld [vmem:[%s12] sm:$0xff]
  %v2476 = vld [vmem:[%s12 + $0x8] sm:$0xff]
  %v2477 = vld [vmem:[%s12 + $0x10] sm:$0xff]
  %v2478 = vld [vmem:[%s12 + $0x18] sm:$0xff]
  %v2479 = vld [vmem:[%s12 + $0x20] sm:$0x7f]
  %v2480 = vld [vmem:[%s13] sm:$0xff]
  %v2481 = vld [vmem:[%s13 + $0x8] sm:$0xff]
  %v2482 = vld [vmem:[%s13 + $0x10] sm:$0xff]
  %v2483 = vld [vmem:[%s13 + $0x18] sm:$0xff]
  %v2485 = vsel %vm312, %v2472, 0
  %2487 = vmatprep.subr.mxu0 0.0
  %2488 = vmatpush1.msra.mxu0 %v2480
  %2489 = vmatprep.subr.mxu0 0.0
  %2490 = vmatpush1.msra.mxu0 %v2481
  %2491 = vmatprep.subr.mxu0 0.0
  %2492 = vmatpush1.msra.mxu0 %v2482
  %2493 = vmatprep.subr.mxu0 0.0
  %2494 = vmatpush1.msra.mxu0 %v2483
  %2495 = vmatprep.subr.mxu0 0.0
  %2496 = vmatpush1.msra.mxu0 0.0
  %2497 = vmatprep.subr.mxu0 0.0
  %2498 = vmatpush1.msra.mxu0 0.0
  %2499 = vmatprep.subr.mxu0 0.0
  %2500 = vmatpush1.msra.mxu0 0.0
  %2501 = vmatprep.subr.mxu0 0.0
  %2502 = vmatpush1.msra.mxu0 0.0
  %2503 = vmatprep.subr.mxu0 0.0
  %2504 = vmatpush1.msra.mxu0 0.0
  %2505 = vmatprep.subr.mxu0 0.0
  %2506 = vmatpush1.msra.mxu0 0.0
  %2507 = vmatprep.subr.mxu0 0.0
  %2508 = vmatpush1.msra.mxu0 0.0
  %2509 = vmatprep.subr.mxu0 0.0
  %2510 = vmatpush1.msra.mxu0 0.0
  %2511 = vmatprep.subr.mxu0 0.0
  %2512 = vmatpush1.msra.mxu0 0.0
  %2513 = vmatprep.subr.mxu0 0.0
  %2514 = vmatpush1.msra.mxu0 0.0
  %2515 = vmatprep.subr.mxu0 0.0
  %2516 = vmatpush1.msra.mxu0 0.0
  %2517 = vmatprep.subr.mxu0 0.0
  %2518 = vmatpush1.msra.mxu0 0.0
  %2519 = vmatprep.subr.mxu0 0.0
  %2520 = vmatpush1.msra.mxu0 0.0
  %2521 = vmatprep.subr.mxu0 0.0
  %2522 = vmatpush1.msra.mxu0 0.0
  %2523 = vmatprep.subr.mxu0 0.0
  %2524 = vmatpush1.msra.mxu0 0.0
  %2525 = vmatprep.subr.mxu0 0.0
  %2526 = vmatpush1.msra.mxu0 0.0
  %2527 = vmatprep.subr.mxu0 0.0
  %2528 = vmatpush1.msra.mxu0 0.0
  %2529 = vmatprep.subr.mxu0 0.0
  %2530 = vmatpush1.msra.mxu0 0.0
  %2531 = vmatprep.subr.mxu0 0.0
  %2532 = vmatpush1.msra.mxu0 0.0
  %2533 = vmatprep.subr.mxu0 0.0
  %2534 = vmatpush1.msra.mxu0 0.0
  %2535 = vmatprep.subr.mxu0 0.0
  %2536 = vmatpush1.msra.mxu0 0.0
  %2537 = vmatprep.subr.mxu0 0.0
  %2538 = vmatpush1.msra.mxu0 0.0
  %2539 = vmatprep.subr.mxu0 0.0
  %2540 = vmatpush1.msra.mxu0 0.0
  %2541 = vmatprep.subr.mxu0 0.0
  %2542 = vmatpush1.msra.mxu0 0.0
  %2543 = vmatprep.subr.mxu0 0.0
  %2544 = vmatpush1.msra.mxu0 0.0
  %2545 = vmatprep.subr.mxu0 0.0
  %2546 = vmatpush1.msra.mxu0 0.0
  %2547 = vmatprep.subr.mxu0 0.0
  %2548 = vmatpush1.msra.mxu0 0.0
  %2549 = vmatprep.subr.mxu0 0.0
  %2550 = vmatpush1.msra.mxu0 0.0
  %2551 = vmatprep.mubr.f32.mxu0 0.0
  %2552 = vmatmul.mubr.f32.gmra.mrb[0].mxu0 %v2485
  %v2553 = vpop.f32.mrb[0].mxu0
  %v2554 = vadd.f32 0.0, %v2553
  %v2555 = vpop.f32.mrb[0].mxu0
  %2556 = vdwg.mxu0
  %v2557 = vsel %vm160, %v105, 0
  %v2560 = vsel %vm165, %v2479, 0
  %2562 = vmatprep.subr.mxu0 0.0
  %2563 = vmatpush1.msra.mxu0 %v2475
  %2564 = vmatprep.subr.mxu0 0.0
  %2565 = vmatpush1.msra.mxu0 %v2476
  %2566 = vmatprep.subr.mxu0 0.0
  %2567 = vmatpush1.msra.mxu0 %v2477
  %2568 = vmatprep.subr.mxu0 0.0
  %2569 = vmatpush1.msra.mxu0 %v2478
  %2570 = vmatprep.subr.mxu0 0.0
  %2571 = vmatpush1.msra.mxu0 %v2560
  %2572 = vmatprep.subr.mxu0 0.0
  %2573 = vmatpush1.msra.mxu0 0.0
  %2574 = vmatprep.subr.mxu0 0.0
  %2575 = vmatpush1.msra.mxu0 0.0
  %2576 = vmatprep.subr.mxu0 0.0
  %2577 = vmatpush1.msra.mxu0 0.0
  %2578 = vmatprep.subr.mxu0 0.0
  %2579 = vmatpush1.msra.mxu0 0.0
  %2580 = vmatprep.subr.mxu0 0.0
  %2581 = vmatpush1.msra.mxu0 0.0
  %2582 = vmatprep.subr.mxu0 0.0
  %2583 = vmatpush1.msra.mxu0 0.0
  %2584 = vmatprep.subr.mxu0 0.0
  %2585 = vmatpush1.msra.mxu0 0.0
  %2586 = vmatprep.subr.mxu0 0.0
  %2587 = vmatpush1.msra.mxu0 0.0
  %2588 = vmatprep.subr.mxu0 0.0
  %2589 = vmatpush1.msra.mxu0 0.0
  %2590 = vmatprep.subr.mxu0 0.0
  %2591 = vmatpush1.msra.mxu0 0.0
  %2592 = vmatprep.subr.mxu0 0.0
  %2593 = vmatpush1.msra.mxu0 0.0
  %2594 = vmatprep.subr.mxu0 0.0
  %2595 = vmatpush1.msra.mxu0 0.0
  %2596 = vmatprep.subr.mxu0 0.0
  %2597 = vmatpush1.msra.mxu0 0.0
  %2598 = vmatprep.subr.mxu0 0.0
  %2599 = vmatpush1.msra.mxu0 0.0
  %2600 = vmatprep.subr.mxu0 0.0
  %2601 = vmatpush1.msra.mxu0 0.0
  %2602 = vmatprep.subr.mxu0 0.0
  %2603 = vmatpush1.msra.mxu0 0.0
  %2604 = vmatprep.subr.mxu0 0.0
  %2605 = vmatpush1.msra.mxu0 0.0
  %2606 = vmatprep.subr.mxu0 0.0
  %2607 = vmatpush1.msra.mxu0 0.0
  %2608 = vmatprep.subr.mxu0 0.0
  %2609 = vmatpush1.msra.mxu0 0.0
  %2610 = vmatprep.subr.mxu0 0.0
  %2611 = vmatpush1.msra.mxu0 0.0
  %2612 = vmatprep.subr.mxu0 0.0
  %2613 = vmatpush1.msra.mxu0 0.0
  %2614 = vmatprep.subr.mxu0 0.0
  %2615 = vmatpush1.msra.mxu0 0.0
  %2616 = vmatprep.subr.mxu0 0.0
  %2617 = vmatpush1.msra.mxu0 0.0
  %2618 = vmatprep.subr.mxu0 0.0
  %2619 = vmatpush1.msra.mxu0 0.0
  %2620 = vmatprep.subr.mxu0 0.0
  %2621 = vmatpush1.msra.mxu0 0.0
  %2622 = vmatprep.subr.mxu0 0.0
  %2623 = vmatpush1.msra.mxu0 0.0
  %2624 = vmatprep.subr.mxu0 0.0
  %2625 = vmatpush1.msra.mxu0 0.0
  %2626 = vmatprep.mubr.f32.mxu0 0.0
  %2627 = vmatmul.mubr.f32.gmra.mrb[0].mxu0 %v2557
  %v2628 = vpop.f32.mrb[0].mxu0
  %v2629 = vadd.f32 %v2554, %v2628
  %v2630 = vpop.f32.mrb[0].mxu0
  %2631 = vdwg.mxu0
  %v2632 = vld [vmem:[%s14] sm:$0x1]
  %v2634 = vlaneseq
  %v2635 = vshrl.u32 %v2634, 7
  %v2636 = vsub.s32 0, %v2635
  %v2637 = vrot.slane %v2632, %v2636
  %v2639 = vadd.f32 %v2629, %v2637
  %v2640 = vtanh.pop %v2639
  %v2641 = vadd.f32 %v2640, 1.0
  %v2642 = vmul.f32 %v2641, 0.5
  %2644 = vrot.lane.b32.xlu0 %v2640, 64
  %v2645 = vpop.permute.xlu0 %2644
  %v2647 = vmul.f32 %v2642, %v2645
  %v2648 = vtanh.pop %v2647
  %2650 = vrot.lane.b32.xlu0 %v2648, 96
  %v2651 = vpop.permute.xlu0 %2650
  %v2653 = vmul.f32 %v2642, %v2651
  %2655 = vrot.lane.b32.xlu0 %v2653, 32
  %v2656 = vpop.permute.xlu0 %2655
  %v2657 = vsel %vm312, %v2656, 0
  %2659 = vmatprep.subr.mxu0 0.0
  %2660 = vmatpush1.msra.mxu0 %v76
  %2661 = vmatprep.subr.mxu0 0.0
  %2662 = vmatpush1.msra.mxu0 %v77
  %2663 = vmatprep.subr.mxu0 0.0
  %2664 = vmatpush1.msra.mxu0 %v78
  %2665 = vmatprep.subr.mxu0 0.0
  %2666 = vmatpush1.msra.mxu0 %v79
  %2667 = vmatprep.subr.mxu0 0.0
  %2668 = vmatpush1.msra.mxu0 0.0
  %2669 = vmatprep.subr.mxu0 0.0
  %2670 = vmatpush1.msra.mxu0 0.0
  %2671 = vmatprep.subr.mxu0 0.0
  %2672 = vmatpush1.msra.mxu0 0.0
  %2673 = vmatprep.subr.mxu0 0.0
  %2674 = vmatpush1.msra.mxu0 0.0
  %2675 = vmatprep.subr.mxu0 0.0
  %2676 = vmatpush1.msra.mxu0 0.0
  %2677 = vmatprep.subr.mxu0 0.0
  %2678 = vmatpush1.msra.mxu0 0.0
  %2679 = vmatprep.subr.mxu0 0.0
  %2680 = vmatpush1.msra.mxu0 0.0
  %2681 = vmatprep.subr.mxu0 0.0
  %2682 = vmatpush1.msra.mxu0 0.0
  %2683 = vmatprep.subr.mxu0 0.0
  %2684 = vmatpush1.msra.mxu0 0.0
  %2685 = vmatprep.subr.mxu0 0.0
  %2686 = vmatpush1.msra.mxu0 0.0
  %2687 = vmatprep.subr.mxu0 0.0
  %2688 = vmatpush1.msra.mxu0 0.0
  %2689 = vmatprep.subr.mxu0 0.0
  %2690 = vmatpush1.msra.mxu0 0.0
  %2691 = vmatprep.subr.mxu0 0.0
  %2692 = vmatpush1.msra.mxu0 0.0
  %2693 = vmatprep.subr.mxu0 0.0
  %2694 = vmatpush1.msra.mxu0 0.0
  %2695 = vmatprep.subr.mxu0 0.0
  %2696 = vmatpush1.msra.mxu0 0.0
  %2697 = vmatprep.subr.mxu0 0.0
  %2698 = vmatpush1.msra.mxu0 0.0
  %2699 = vmatprep.subr.mxu0 0.0
  %2700 = vmatpush1.msra.mxu0 0.0
  %2701 = vmatprep.subr.mxu0 0.0
  %2702 = vmatpush1.msra.mxu0 0.0
  %2703 = vmatprep.subr.mxu0 0.0
  %2704 = vmatpush1.msra.mxu0 0.0
  %2705 = vmatprep.subr.mxu0 0.0
  %2706 = vmatpush1.msra.mxu0 0.0
  %2707 = vmatprep.subr.mxu0 0.0
  %2708 = vmatpush1.msra.mxu0 0.0
  %2709 = vmatprep.subr.mxu0 0.0
  %2710 = vmatpush1.msra.mxu0 0.0
  %2711 = vmatprep.subr.mxu0 0.0
  %2712 = vmatpush1.msra.mxu0 0.0
  %2713 = vmatprep.subr.mxu0 0.0
  %2714 = vmatpush1.msra.mxu0 0.0
  %2715 = vmatprep.subr.mxu0 0.0
  %2716 = vmatpush1.msra.mxu0 0.0
  %2717 = vmatprep.subr.mxu0 0.0
  %2718 = vmatpush1.msra.mxu0 0.0
  %2719 = vmatprep.subr.mxu0 0.0
  %2720 = vmatpush1.msra.mxu0 0.0
  %2721 = vmatprep.subr.mxu0 0.0
  %2722 = vmatpush1.msra.mxu0 0.0
  %2723 = vmatprep.mubr.f32.mxu0 0.0
  %2724 = vmatmul.mubr.f32.gmra.mrb[0].mxu0 %v2657
  %v2725 = vpop.f32.mrb[0].mxu0
  %v2726 = vadd.f32 %v96, %v2725
  %v2727 = vpop.f32.mrb[0].mxu0
  %2728 = vdwg.mxu0
  %v2729 = vtanh.pop %v2726
  %v2730 = vadd.f32 %v2729, 1.0
  %v2731 = vmul.f32 %v2730, 0.5
  %2733 = vrot.lane.b32.xlu0 %v2647, 32
  %v2734 = vpop.permute.xlu0 %2733
  %v2736 = vmul.f32 %v2731, %v2734
  %2738 = vrot.lane.b32.xlu0 %v2729, 64
  %v2739 = vpop.permute.xlu0 %2738
  %v2741 = vmul.f32 %v2731, %v2739
  %2743 = vrot.lane.b32.xlu0 %v2741, 32
  %v2744 = vpop.permute.xlu0 %2743
  %v2746 = vadd.f32 %v2736, %v2744
  %v2747 = vtanh.pop %v2746
  %2749 = vrot.lane.b32.xlu0 %v2747, 64
  %v2750 = vpop.permute.xlu0 %2749
  %v2752 = vmul.f32 %v2731, %v2750
  %2754 = vrot.lane.b32.xlu0 %v2752, 32
  %v2755 = vpop.permute.xlu0 %2754
  %v2756 = vsel %vm312, %v2755, 0
  %2758 = vmatprep.subr.mxu0 0.0
  %2759 = vmatpush1.msra.mxu0 %v76
  %2760 = vmatprep.subr.mxu0 0.0
  %2761 = vmatpush1.msra.mxu0 %v77
  %2762 = vmatprep.subr.mxu0 0.0
  %2763 = vmatpush1.msra.mxu0 %v78
  %2764 = vmatprep.subr.mxu0 0.0
  %2765 = vmatpush1.msra.mxu0 %v79
  %2766 = vmatprep.subr.mxu0 0.0
  %2767 = vmatpush1.msra.mxu0 0.0
  %2768 = vmatprep.subr.mxu0 0.0
  %2769 = vmatpush1.msra.mxu0 0.0
  %2770 = vmatprep.subr.mxu0 0.0
  %2771 = vmatpush1.msra.mxu0 0.0
  %2772 = vmatprep.subr.mxu0 0.0
  %2773 = vmatpush1.msra.mxu0 0.0
  %2774 = vmatprep.subr.mxu0 0.0
  %2775 = vmatpush1.msra.mxu0 0.0
  %2776 = vmatprep.subr.mxu0 0.0
  %2777 = vmatpush1.msra.mxu0 0.0
  %2778 = vmatprep.subr.mxu0 0.0
  %2779 = vmatpush1.msra.mxu0 0.0
  %2780 = vmatprep.subr.mxu0 0.0
  %2781 = vmatpush1.msra.mxu0 0.0
  %2782 = vmatprep.subr.mxu0 0.0
  %2783 = vmatpush1.msra.mxu0 0.0
  %2784 = vmatprep.subr.mxu0 0.0
  %2785 = vmatpush1.msra.mxu0 0.0
  %2786 = vmatprep.subr.mxu0 0.0
  %2787 = vmatpush1.msra.mxu0 0.0
  %2788 = vmatprep.subr.mxu0 0.0
  %2789 = vmatpush1.msra.mxu0 0.0
  %2790 = vmatprep.subr.mxu0 0.0
  %2791 = vmatpush1.msra.mxu0 0.0
  %2792 = vmatprep.subr.mxu0 0.0
  %2793 = vmatpush1.msra.mxu0 0.0
  %2794 = vmatprep.subr.mxu0 0.0
  %2795 = vmatpush1.msra.mxu0 0.0
  %2796 = vmatprep.subr.mxu0 0.0
  %2797 = vmatpush1.msra.mxu0 0.0
  %2798 = vmatprep.subr.mxu0 0.0
  %2799 = vmatpush1.msra.mxu0 0.0
  %2800 = vmatprep.subr.mxu0 0.0
  %2801 = vmatpush1.msra.mxu0 0.0
  %2802 = vmatprep.subr.mxu0 0.0
  %2803 = vmatpush1.msra.mxu0 0.0
  %2804 = vmatprep.subr.mxu0 0.0
  %2805 = vmatpush1.msra.mxu0 0.0
  %2806 = vmatprep.subr.mxu0 0.0
  %2807 = vmatpush1.msra.mxu0 0.0
  %2808 = vmatprep.subr.mxu0 0.0
  %2809 = vmatpush1.msra.mxu0 0.0
  %2810 = vmatprep.subr.mxu0 0.0
  %2811 = vmatpush1.msra.mxu0 0.0
  %2812 = vmatprep.subr.mxu0 0.0
  %2813 = vmatpush1.msra.mxu0 0.0
  %2814 = vmatprep.subr.mxu0 0.0
  %2815 = vmatpush1.msra.mxu0 0.0
  %2816 = vmatprep.subr.mxu0 0.0
  %2817 = vmatpush1.msra.mxu0 0.0
  %2818 = vmatprep.subr.mxu0 0.0
  %2819 = vmatpush1.msra.mxu0 0.0
  %2820 = vmatprep.subr.mxu0 0.0
  %2821 = vmatpush1.msra.mxu0 0.0
  %2822 = vmatprep.mubr.f32.mxu0 0.0
  %2823 = vmatmul.mubr.f32.gmra.mrb[0].mxu0 %v2756
  %v2824 = vpop.f32.mrb[0].mxu0
  %v2825 = vadd.f32 %v96, %v2824
  %v2826 = vpop.f32.mrb[0].mxu0
  %2827 = vdwg.mxu0
  %v2828 = vtanh.pop %v2825
  %v2829 = vadd.f32 %v2828, 1.0
  %v2830 = vmul.f32 %v2829, 0.5
  %v2831 = vmul.f32 %v2830, %v2746
  %2833 = vrot.lane.b32.xlu0 %v2828, 64
  %v2834 = vpop.permute.xlu0 %2833
  %v2836 = vmul.f32 %v2830, %v2834
  %2838 = vrot.lane.b32.xlu0 %v2836, 32
  %v2839 = vpop.permute.xlu0 %2838
  %v2841 = vadd.f32 %v2831, %v2839
  %v2842 = vtanh.pop %v2841
  %2844 = vrot.lane.b32.xlu0 %v2842, 64
  %v2845 = vpop.permute.xlu0 %2844
  %v2847 = vmul.f32 %v2830, %v2845
  %2849 = vrot.lane.b32.xlu0 %v2847, 32
  %v2850 = vpop.permute.xlu0 %2849
  %v2851 = vsel %vm312, %v2850, 0
  %2853 = vmatprep.subr.mxu0 0.0
  %2854 = vmatpush1.msra.mxu0 %v76
  %2855 = vmatprep.subr.mxu0 0.0
  %2856 = vmatpush1.msra.mxu0 %v77
  %2857 = vmatprep.subr.mxu0 0.0
  %2858 = vmatpush1.msra.mxu0 %v78
  %2859 = vmatprep.subr.mxu0 0.0
  %2860 = vmatpush1.msra.mxu0 %v79
  %2861 = vmatprep.subr.mxu0 0.0
  %2862 = vmatpush1.msra.mxu0 0.0
  %2863 = vmatprep.subr.mxu0 0.0
  %2864 = vmatpush1.msra.mxu0 0.0
  %2865 = vmatprep.subr.mxu0 0.0
  %2866 = vmatpush1.msra.mxu0 0.0
  %2867 = vmatprep.subr.mxu0 0.0
  %2868 = vmatpush1.msra.mxu0 0.0
  %2869 = vmatprep.subr.mxu0 0.0
  %2870 = vmatpush1.msra.mxu0 0.0
  %2871 = vmatprep.subr.mxu0 0.0
  %2872 = vmatpush1.msra.mxu0 0.0
  %2873 = vmatprep.subr.mxu0 0.0
  %2874 = vmatpush1.msra.mxu0 0.0
  %2875 = vmatprep.subr.mxu0 0.0
  %2876 = vmatpush1.msra.mxu0 0.0
  %2877 = vmatprep.subr.mxu0 0.0
  %2878 = vmatpush1.msra.mxu0 0.0
  %2879 = vmatprep.subr.mxu0 0.0
  %2880 = vmatpush1.msra.mxu0 0.0
  %2881 = vmatprep.subr.mxu0 0.0
  %2882 = vmatpush1.msra.mxu0 0.0
  %2883 = vmatprep.subr.mxu0 0.0
  %2884 = vmatpush1.msra.mxu0 0.0
  %2885 = vmatprep.subr.mxu0 0.0
  %2886 = vmatpush1.msra.mxu0 0.0
  %2887 = vmatprep.subr.mxu0 0.0
  %2888 = vmatpush1.msra.mxu0 0.0
  %2889 = vmatprep.subr.mxu0 0.0
  %2890 = vmatpush1.msra.mxu0 0.0
  %2891 = vmatprep.subr.mxu0 0.0
  %2892 = vmatpush1.msra.mxu0 0.0
  %2893 = vmatprep.subr.mxu0 0.0
  %2894 = vmatpush1.msra.mxu0 0.0
  %2895 = vmatprep.subr.mxu0 0.0
  %2896 = vmatpush1.msra.mxu0 0.0
  %2897 = vmatprep.subr.mxu0 0.0
  %2898 = vmatpush1.msra.mxu0 0.0
  %2899 = vmatprep.subr.mxu0 0.0
  %2900 = vmatpush1.msra.mxu0 0.0
  %2901 = vmatprep.subr.mxu0 0.0
  %2902 = vmatpush1.msra.mxu0 0.0
  %2903 = vmatprep.subr.mxu0 0.0
  %2904 = vmatpush1.msra.mxu0 0.0
  %2905 = vmatprep.subr.mxu0 0.0
  %2906 = vmatpush1.msra.mxu0 0.0
  %2907 = vmatprep.subr.mxu0 0.0
  %2908 = vmatpush1.msra.mxu0 0.0
  %2909 = vmatprep.subr.mxu0 0.0
  %2910 = vmatpush1.msra.mxu0 0.0
  %2911 = vmatprep.subr.mxu0 0.0
  %2912 = vmatpush1.msra.mxu0 0.0
  %2913 = vmatprep.subr.mxu0 0.0
  %2914 = vmatpush1.msra.mxu0 0.0
  %2915 = vmatprep.subr.mxu0 0.0
  %2916 = vmatpush1.msra.mxu0 0.0
  %2917 = vmatprep.mubr.f32.mxu0 0.0
  %2918 = vmatmul.mubr.f32.gmra.mrb[0].mxu0 %v2851
  %v2919 = vpop.f32.mrb[0].mxu0
  %v2920 = vadd.f32 %v96, %v2919
  %v2921 = vpop.f32.mrb[0].mxu0
  %2922 = vdwg.mxu0
  %v2923 = vtanh.pop %v2920
  %v2924 = vadd.f32 %v2923, 1.0
  %v2925 = vmul.f32 %v2924, 0.5
  %v2926 = vmul.f32 %v2925, %v2841
  %2928 = vrot.lane.b32.xlu0 %v2923, 64
  %v2929 = vpop.permute.xlu0 %2928
  %v2931 = vmul.f32 %v2925, %v2929
  %2933 = vrot.lane.b32.xlu0 %v2931, 32
  %v2934 = vpop.permute.xlu0 %2933
  %v2936 = vadd.f32 %v2926, %v2934
  %v2937 = vtanh.pop %v2936
  %2939 = vrot.lane.b32.xlu0 %v2937, 64
  %v2940 = vpop.permute.xlu0 %2939
  %v2942 = vmul.f32 %v2925, %v2940
  %2944 = vrot.lane.b32.xlu0 %v2942, 32
  %v2945 = vpop.permute.xlu0 %2944
  %v2946 = vsel %vm312, %v2945, 0
  %2948 = vmatprep.subr.mxu0 0.0
  %2949 = vmatpush1.msra.mxu0 %v76
  %2950 = vmatprep.subr.mxu0 0.0
  %2951 = vmatpush1.msra.mxu0 %v77
  %2952 = vmatprep.subr.mxu0 0.0
  %2953 = vmatpush1.msra.mxu0 %v78
  %2954 = vmatprep.subr.mxu0 0.0
  %2955 = vmatpush1.msra.mxu0 %v79
  %2956 = vmatprep.subr.mxu0 0.0
  %2957 = vmatpush1.msra.mxu0 0.0
  %2958 = vmatprep.subr.mxu0 0.0
  %2959 = vmatpush1.msra.mxu0 0.0
  %2960 = vmatprep.subr.mxu0 0.0
  %2961 = vmatpush1.msra.mxu0 0.0
  %2962 = vmatprep.subr.mxu0 0.0
  %2963 = vmatpush1.msra.mxu0 0.0
  %2964 = vmatprep.subr.mxu0 0.0
  %2965 = vmatpush1.msra.mxu0 0.0
  %2966 = vmatprep.subr.mxu0 0.0
  %2967 = vmatpush1.msra.mxu0 0.0
  %2968 = vmatprep.subr.mxu0 0.0
  %2969 = vmatpush1.msra.mxu0 0.0
  %2970 = vmatprep.subr.mxu0 0.0
  %2971 = vmatpush1.msra.mxu0 0.0
  %2972 = vmatprep.subr.mxu0 0.0
  %2973 = vmatpush1.msra.mxu0 0.0
  %2974 = vmatprep.subr.mxu0 0.0
  %2975 = vmatpush1.msra.mxu0 0.0
  %2976 = vmatprep.subr.mxu0 0.0
  %2977 = vmatpush1.msra.mxu0 0.0
  %2978 = vmatprep.subr.mxu0 0.0
  %2979 = vmatpush1.msra.mxu0 0.0
  %2980 = vmatprep.subr.mxu0 0.0
  %2981 = vmatpush1.msra.mxu0 0.0
  %2982 = vmatprep.subr.mxu0 0.0
  %2983 = vmatpush1.msra.mxu0 0.0
  %2984 = vmatprep.subr.mxu0 0.0
  %2985 = vmatpush1.msra.mxu0 0.0
  %2986 = vmatprep.subr.mxu0 0.0
  %2987 = vmatpush1.msra.mxu0 0.0
  %2988 = vmatprep.subr.mxu0 0.0
  %2989 = vmatpush1.msra.mxu0 0.0
  %2990 = vmatprep.subr.mxu0 0.0
  %2991 = vmatpush1.msra.mxu0 0.0
  %2992 = vmatprep.subr.mxu0 0.0
  %2993 = vmatpush1.msra.mxu0 0.0
  %2994 = vmatprep.subr.mxu0 0.0
  %2995 = vmatpush1.msra.mxu0 0.0
  %2996 = vmatprep.subr.mxu0 0.0
  %2997 = vmatpush1.msra.mxu0 0.0
  %2998 = vmatprep.subr.mxu0 0.0
  %2999 = vmatpush1.msra.mxu0 0.0
  %3000 = vmatprep.subr.mxu0 0.0
  %3001 = vmatpush1.msra.mxu0 0.0
  %3002 = vmatprep.subr.mxu0 0.0
  %3003 = vmatpush1.msra.mxu0 0.0
  %3004 = vmatprep.subr.mxu0 0.0
  %3005 = vmatpush1.msra.mxu0 0.0
  %3006 = vmatprep.subr.mxu0 0.0
  %3007 = vmatpush1.msra.mxu0 0.0
  %3008 = vmatprep.subr.mxu0 0.0
  %3009 = vmatpush1.msra.mxu0 0.0
  %3010 = vmatprep.subr.mxu0 0.0
  %3011 = vmatpush1.msra.mxu0 0.0
  %3012 = vmatprep.mubr.f32.mxu0 0.0
  %3013 = vmatmul.mubr.f32.gmra.mrb[0].mxu0 %v2946
  %v3014 = vpop.f32.mrb[0].mxu0
  %v3015 = vadd.f32 %v96, %v3014
  %v3016 = vpop.f32.mrb[0].mxu0
  %3017 = vdwg.mxu0
  %v3018 = vtanh.pop %v3015
  %v3019 = vadd.f32 %v3018, 1.0
  %v3020 = vmul.f32 %v3019, 0.5
  %v3021 = vmul.f32 %v3020, %v2936
  %3023 = vrot.lane.b32.xlu0 %v3018, 64
  %v3024 = vpop.permute.xlu0 %3023
  %v3026 = vmul.f32 %v3020, %v3024
  %3028 = vrot.lane.b32.xlu0 %v3026, 32
  %v3029 = vpop.permute.xlu0 %3028
  %v3031 = vadd.f32 %v3021, %v3029
  %v3032 = vtanh.pop %v3031
  %3034 = vrot.lane.b32.xlu0 %v3032, 64
  %v3035 = vpop.permute.xlu0 %3034
  %v3037 = vmul.f32 %v3020, %v3035
  %3039 = vrot.lane.b32.xlu0 %v3037, 32
  %v3040 = vpop.permute.xlu0 %3039
  %v3041 = vsel %vm312, %v3040, 0
  %3043 = vmatprep.subr.mxu0 0.0
  %3044 = vmatpush1.msra.mxu0 %v76
  %3045 = vmatprep.subr.mxu0 0.0
  %3046 = vmatpush1.msra.mxu0 %v77
  %3047 = vmatprep.subr.mxu0 0.0
  %3048 = vmatpush1.msra.mxu0 %v78
  %3049 = vmatprep.subr.mxu0 0.0
  %3050 = vmatpush1.msra.mxu0 %v79
  %3051 = vmatprep.subr.mxu0 0.0
  %3052 = vmatpush1.msra.mxu0 0.0
  %3053 = vmatprep.subr.mxu0 0.0
  %3054 = vmatpush1.msra.mxu0 0.0
  %3055 = vmatprep.subr.mxu0 0.0
  %3056 = vmatpush1.msra.mxu0 0.0
  %3057 = vmatprep.subr.mxu0 0.0
  %3058 = vmatpush1.msra.mxu0 0.0
  %3059 = vmatprep.subr.mxu0 0.0
  %3060 = vmatpush1.msra.mxu0 0.0
  %3061 = vmatprep.subr.mxu0 0.0
  %3062 = vmatpush1.msra.mxu0 0.0
  %3063 = vmatprep.subr.mxu0 0.0
  %3064 = vmatpush1.msra.mxu0 0.0
  %3065 = vmatprep.subr.mxu0 0.0
  %3066 = vmatpush1.msra.mxu0 0.0
  %3067 = vmatprep.subr.mxu0 0.0
  %3068 = vmatpush1.msra.mxu0 0.0
  %3069 = vmatprep.subr.mxu0 0.0
  %3070 = vmatpush1.msra.mxu0 0.0
  %3071 = vmatprep.subr.mxu0 0.0
  %3072 = vmatpush1.msra.mxu0 0.0
  %3073 = vmatprep.subr.mxu0 0.0
  %3074 = vmatpush1.msra.mxu0 0.0
  %3075 = vmatprep.subr.mxu0 0.0
  %3076 = vmatpush1.msra.mxu0 0.0
  %3077 = vmatprep.subr.mxu0 0.0
  %3078 = vmatpush1.msra.mxu0 0.0
  %3079 = vmatprep.subr.mxu0 0.0
  %3080 = vmatpush1.msra.mxu0 0.0
  %3081 = vmatprep.subr.mxu0 0.0
  %3082 = vmatpush1.msra.mxu0 0.0
  %3083 = vmatprep.subr.mxu0 0.0
  %3084 = vmatpush1.msra.mxu0 0.0
  %3085 = vmatprep.subr.mxu0 0.0
  %3086 = vmatpush1.msra.mxu0 0.0
  %3087 = vmatprep.subr.mxu0 0.0
  %3088 = vmatpush1.msra.mxu0 0.0
  %3089 = vmatprep.subr.mxu0 0.0
  %3090 = vmatpush1.msra.mxu0 0.0
  %3091 = vmatprep.subr.mxu0 0.0
  %3092 = vmatpush1.msra.mxu0 0.0
  %3093 = vmatprep.subr.mxu0 0.0
  %3094 = vmatpush1.msra.mxu0 0.0
  %3095 = vmatprep.subr.mxu0 0.0
  %3096 = vmatpush1.msra.mxu0 0.0
  %3097 = vmatprep.subr.mxu0 0.0
  %3098 = vmatpush1.msra.mxu0 0.0
  %3099 = vmatprep.subr.mxu0 0.0
  %3100 = vmatpush1.msra.mxu0 0.0
  %3101 = vmatprep.subr.mxu0 0.0
  %3102 = vmatpush1.msra.mxu0 0.0
  %3103 = vmatprep.subr.mxu0 0.0
  %3104 = vmatpush1.msra.mxu0 0.0
  %3105 = vmatprep.subr.mxu0 0.0
  %3106 = vmatpush1.msra.mxu0 0.0
  %3107 = vmatprep.mubr.f32.mxu0 0.0
  %3108 = vmatmul.mubr.f32.gmra.mrb[0].mxu0 %v3041
  %v3109 = vpop.f32.mrb[0].mxu0
  %v3110 = vadd.f32 %v96, %v3109
  %v3111 = vpop.f32.mrb[0].mxu0
  %3112 = vdwg.mxu0
  %v3113 = vtanh.pop %v3110
  %v3114 = vadd.f32 %v3113, 1.0
  %v3115 = vmul.f32 %v3114, 0.5
  %v3116 = vmul.f32 %v3115, %v3031
  %3118 = vrot.lane.b32.xlu0 %v3113, 64
  %v3119 = vpop.permute.xlu0 %3118
  %v3121 = vmul.f32 %v3115, %v3119
  %3123 = vrot.lane.b32.xlu0 %v3121, 32
  %v3124 = vpop.permute.xlu0 %3123
  %v3126 = vadd.f32 %v3116, %v3124
  %v3127 = vtanh.pop %v3126
  %3129 = vrot.lane.b32.xlu0 %v3127, 64
  %v3130 = vpop.permute.xlu0 %3129
  %v3132 = vmul.f32 %v3115, %v3130
  %3134 = vrot.lane.b32.xlu0 %v3132, 32
  %v3135 = vpop.permute.xlu0 %3134
  %v3136 = vsel %vm312, %v3135, 0
  %3138 = vmatprep.subr.mxu0 0.0
  %3139 = vmatpush1.msra.mxu0 %v76
  %3140 = vmatprep.subr.mxu0 0.0
  %3141 = vmatpush1.msra.mxu0 %v77
  %3142 = vmatprep.subr.mxu0 0.0
  %3143 = vmatpush1.msra.mxu0 %v78
  %3144 = vmatprep.subr.mxu0 0.0
  %3145 = vmatpush1.msra.mxu0 %v79
  %3146 = vmatprep.subr.mxu0 0.0
  %3147 = vmatpush1.msra.mxu0 0.0
  %3148 = vmatprep.subr.mxu0 0.0
  %3149 = vmatpush1.msra.mxu0 0.0
  %3150 = vmatprep.subr.mxu0 0.0
  %3151 = vmatpush1.msra.mxu0 0.0
  %3152 = vmatprep.subr.mxu0 0.0
  %3153 = vmatpush1.msra.mxu0 0.0
  %3154 = vmatprep.subr.mxu0 0.0
  %3155 = vmatpush1.msra.mxu0 0.0
  %3156 = vmatprep.subr.mxu0 0.0
  %3157 = vmatpush1.msra.mxu0 0.0
  %3158 = vmatprep.subr.mxu0 0.0
  %3159 = vmatpush1.msra.mxu0 0.0
  %3160 = vmatprep.subr.mxu0 0.0
  %3161 = vmatpush1.msra.mxu0 0.0
  %3162 = vmatprep.subr.mxu0 0.0
  %3163 = vmatpush1.msra.mxu0 0.0
  %3164 = vmatprep.subr.mxu0 0.0
  %3165 = vmatpush1.msra.mxu0 0.0
  %3166 = vmatprep.subr.mxu0 0.0
  %3167 = vmatpush1.msra.mxu0 0.0
  %3168 = vmatprep.subr.mxu0 0.0
  %3169 = vmatpush1.msra.mxu0 0.0
  %3170 = vmatprep.subr.mxu0 0.0
  %3171 = vmatpush1.msra.mxu0 0.0
  %3172 = vmatprep.subr.mxu0 0.0
  %3173 = vmatpush1.msra.mxu0 0.0
  %3174 = vmatprep.subr.mxu0 0.0
  %3175 = vmatpush1.msra.mxu0 0.0
  %3176 = vmatprep.subr.mxu0 0.0
  %3177 = vmatpush1.msra.mxu0 0.0
  %3178 = vmatprep.subr.mxu0 0.0
  %3179 = vmatpush1.msra.mxu0 0.0
  %3180 = vmatprep.subr.mxu0 0.0
  %3181 = vmatpush1.msra.mxu0 0.0
  %3182 = vmatprep.subr.mxu0 0.0
  %3183 = vmatpush1.msra.mxu0 0.0
  %3184 = vmatprep.subr.mxu0 0.0
  %3185 = vmatpush1.msra.mxu0 0.0
  %3186 = vmatprep.subr.mxu0 0.0
  %3187 = vmatpush1.msra.mxu0 0.0
  %3188 = vmatprep.subr.mxu0 0.0
  %3189 = vmatpush1.msra.mxu0 0.0
  %3190 = vmatprep.subr.mxu0 0.0
  %3191 = vmatpush1.msra.mxu0 0.0
  %3192 = vmatprep.subr.mxu0 0.0
  %3193 = vmatpush1.msra.mxu0 0.0
  %3194 = vmatprep.subr.mxu0 0.0
  %3195 = vmatpush1.msra.mxu0 0.0
  %3196 = vmatprep.subr.mxu0 0.0
  %3197 = vmatpush1.msra.mxu0 0.0
  %3198 = vmatprep.subr.mxu0 0.0
  %3199 = vmatpush1.msra.mxu0 0.0
  %3200 = vmatprep.subr.mxu0 0.0
  %3201 = vmatpush1.msra.mxu0 0.0
  %3202 = vmatprep.mubr.f32.mxu0 0.0
  %3203 = vmatmul.mubr.f32.gmra.mrb[0].mxu0 %v3136
  %v3204 = vpop.f32.mrb[0].mxu0
  %v3205 = vadd.f32 %v96, %v3204
  %v3206 = vpop.f32.mrb[0].mxu0
  %3207 = vdwg.mxu0
  %v3208 = vtanh.pop %v3205
  %v3209 = vadd.f32 %v3208, 1.0
  %v3210 = vmul.f32 %v3209, 0.5
  %v3211 = vmul.f32 %v3210, %v3126
  %3213 = vrot.lane.b32.xlu0 %v3208, 64
  %v3214 = vpop.permute.xlu0 %3213
  %v3216 = vmul.f32 %v3210, %v3214
  %3218 = vrot.lane.b32.xlu0 %v3216, 32
  %v3219 = vpop.permute.xlu0 %3218
  %v3221 = vadd.f32 %v3211, %v3219
  %v3222 = vtanh.pop %v3221
  %3224 = vrot.lane.b32.xlu0 %v3222, 64
  %v3225 = vpop.permute.xlu0 %3224
  %v3227 = vmul.f32 %v3210, %v3225
  %3229 = vrot.lane.b32.xlu0 %v3227, 32
  %v3230 = vpop.permute.xlu0 %3229
  %v3231 = vsel %vm312, %v3230, 0
  %3233 = vmatprep.subr.mxu0 0.0
  %3234 = vmatpush1.msra.mxu0 %v76
  %3235 = vmatprep.subr.mxu0 0.0
  %3236 = vmatpush1.msra.mxu0 %v77
  %3237 = vmatprep.subr.mxu0 0.0
  %3238 = vmatpush1.msra.mxu0 %v78
  %3239 = vmatprep.subr.mxu0 0.0
  %3240 = vmatpush1.msra.mxu0 %v79
  %3241 = vmatprep.subr.mxu0 0.0
  %3242 = vmatpush1.msra.mxu0 0.0
  %3243 = vmatprep.subr.mxu0 0.0
  %3244 = vmatpush1.msra.mxu0 0.0
  %3245 = vmatprep.subr.mxu0 0.0
  %3246 = vmatpush1.msra.mxu0 0.0
  %3247 = vmatprep.subr.mxu0 0.0
  %3248 = vmatpush1.msra.mxu0 0.0
  %3249 = vmatprep.subr.mxu0 0.0
  %3250 = vmatpush1.msra.mxu0 0.0
  %3251 = vmatprep.subr.mxu0 0.0
  %3252 = vmatpush1.msra.mxu0 0.0
  %3253 = vmatprep.subr.mxu0 0.0
  %3254 = vmatpush1.msra.mxu0 0.0
  %3255 = vmatprep.subr.mxu0 0.0
  %3256 = vmatpush1.msra.mxu0 0.0
  %3257 = vmatprep.subr.mxu0 0.0
  %3258 = vmatpush1.msra.mxu0 0.0
  %3259 = vmatprep.subr.mxu0 0.0
  %3260 = vmatpush1.msra.mxu0 0.0
  %3261 = vmatprep.subr.mxu0 0.0
  %3262 = vmatpush1.msra.mxu0 0.0
  %3263 = vmatprep.subr.mxu0 0.0
  %3264 = vmatpush1.msra.mxu0 0.0
  %3265 = vmatprep.subr.mxu0 0.0
  %3266 = vmatpush1.msra.mxu0 0.0
  %3267 = vmatprep.subr.mxu0 0.0
  %3268 = vmatpush1.msra.mxu0 0.0
  %3269 = vmatprep.subr.mxu0 0.0
  %3270 = vmatpush1.msra.mxu0 0.0
  %3271 = vmatprep.subr.mxu0 0.0
  %3272 = vmatpush1.msra.mxu0 0.0
  %3273 = vmatprep.subr.mxu0 0.0
  %3274 = vmatpush1.msra.mxu0 0.0
  %3275 = vmatprep.subr.mxu0 0.0
  %3276 = vmatpush1.msra.mxu0 0.0
  %3277 = vmatprep.subr.mxu0 0.0
  %3278 = vmatpush1.msra.mxu0 0.0
  %3279 = vmatprep.subr.mxu0 0.0
  %3280 = vmatpush1.msra.mxu0 0.0
  %3281 = vmatprep.subr.mxu0 0.0
  %3282 = vmatpush1.msra.mxu0 0.0
  %3283 = vmatprep.subr.mxu0 0.0
  %3284 = vmatpush1.msra.mxu0 0.0
  %3285 = vmatprep.subr.mxu0 0.0
  %3286 = vmatpush1.msra.mxu0 0.0
  %3287 = vmatprep.subr.mxu0 0.0
  %3288 = vmatpush1.msra.mxu0 0.0
  %3289 = vmatprep.subr.mxu0 0.0
  %3290 = vmatpush1.msra.mxu0 0.0
  %3291 = vmatprep.subr.mxu0 0.0
  %3292 = vmatpush1.msra.mxu0 0.0
  %3293 = vmatprep.subr.mxu0 0.0
  %3294 = vmatpush1.msra.mxu0 0.0
  %3295 = vmatprep.subr.mxu0 0.0
  %3296 = vmatpush1.msra.mxu0 0.0
  %3297 = vmatprep.mubr.f32.mxu0 0.0
  %3298 = vmatmul.mubr.f32.gmra.mrb[0].mxu0 %v3231
  %v3299 = vpop.f32.mrb[0].mxu0
  %v3300 = vadd.f32 %v96, %v3299
  %v3301 = vpop.f32.mrb[0].mxu0
  %3302 = vdwg.mxu0
  %v3303 = vtanh.pop %v3300
  %v3304 = vadd.f32 %v3303, 1.0
  %v3305 = vmul.f32 %v3304, 0.5
  %v3306 = vmul.f32 %v3305, %v3221
  %3308 = vrot.lane.b32.xlu0 %v3303, 64
  %v3309 = vpop.permute.xlu0 %3308
  %v3311 = vmul.f32 %v3305, %v3309
  %3313 = vrot.lane.b32.xlu0 %v3311, 32
  %v3314 = vpop.permute.xlu0 %3313
  %v3316 = vadd.f32 %v3306, %v3314
  %v3317 = vtanh.pop %v3316
  %3319 = vrot.lane.b32.xlu0 %v3317, 64
  %v3320 = vpop.permute.xlu0 %3319
  %v3322 = vmul.f32 %v3305, %v3320
  %3324 = vrot.lane.b32.xlu0 %v3322, 32
  %v3325 = vpop.permute.xlu0 %3324
  %v3326 = vsel %vm312, %v3325, 0
  %3328 = vmatprep.subr.mxu0 0.0
  %3329 = vmatpush1.msra.mxu0 %v76
  %3330 = vmatprep.subr.mxu0 0.0
  %3331 = vmatpush1.msra.mxu0 %v77
  %3332 = vmatprep.subr.mxu0 0.0
  %3333 = vmatpush1.msra.mxu0 %v78
  %3334 = vmatprep.subr.mxu0 0.0
  %3335 = vmatpush1.msra.mxu0 %v79
  %3336 = vmatprep.subr.mxu0 0.0
  %3337 = vmatpush1.msra.mxu0 0.0
  %3338 = vmatprep.subr.mxu0 0.0
  %3339 = vmatpush1.msra.mxu0 0.0
  %3340 = vmatprep.subr.mxu0 0.0
  %3341 = vmatpush1.msra.mxu0 0.0
  %3342 = vmatprep.subr.mxu0 0.0
  %3343 = vmatpush1.msra.mxu0 0.0
  %3344 = vmatprep.subr.mxu0 0.0
  %3345 = vmatpush1.msra.mxu0 0.0
  %3346 = vmatprep.subr.mxu0 0.0
  %3347 = vmatpush1.msra.mxu0 0.0
  %3348 = vmatprep.subr.mxu0 0.0
  %3349 = vmatpush1.msra.mxu0 0.0
  %3350 = vmatprep.subr.mxu0 0.0
  %3351 = vmatpush1.msra.mxu0 0.0
  %3352 = vmatprep.subr.mxu0 0.0
  %3353 = vmatpush1.msra.mxu0 0.0
  %3354 = vmatprep.subr.mxu0 0.0
  %3355 = vmatpush1.msra.mxu0 0.0
  %3356 = vmatprep.subr.mxu0 0.0
  %3357 = vmatpush1.msra.mxu0 0.0
  %3358 = vmatprep.subr.mxu0 0.0
  %3359 = vmatpush1.msra.mxu0 0.0
  %3360 = vmatprep.subr.mxu0 0.0
  %3361 = vmatpush1.msra.mxu0 0.0
  %3362 = vmatprep.subr.mxu0 0.0
  %3363 = vmatpush1.msra.mxu0 0.0
  %3364 = vmatprep.subr.mxu0 0.0
  %3365 = vmatpush1.msra.mxu0 0.0
  %3366 = vmatprep.subr.mxu0 0.0
  %3367 = vmatpush1.msra.mxu0 0.0
  %3368 = vmatprep.subr.mxu0 0.0
  %3369 = vmatpush1.msra.mxu0 0.0
  %3370 = vmatprep.subr.mxu0 0.0
  %3371 = vmatpush1.msra.mxu0 0.0
  %3372 = vmatprep.subr.mxu0 0.0
  %3373 = vmatpush1.msra.mxu0 0.0
  %3374 = vmatprep.subr.mxu0 0.0
  %3375 = vmatpush1.msra.mxu0 0.0
  %3376 = vmatprep.subr.mxu0 0.0
  %3377 = vmatpush1.msra.mxu0 0.0
  %3378 = vmatprep.subr.mxu0 0.0
  %3379 = vmatpush1.msra.mxu0 0.0
  %3380 = vmatprep.subr.mxu0 0.0
  %3381 = vmatpush1.msra.mxu0 0.0
  %3382 = vmatprep.subr.mxu0 0.0
  %3383 = vmatpush1.msra.mxu0 0.0
  %3384 = vmatprep.subr.mxu0 0.0
  %3385 = vmatpush1.msra.mxu0 0.0
  %3386 = vmatprep.subr.mxu0 0.0
  %3387 = vmatpush1.msra.mxu0 0.0
  %3388 = vmatprep.subr.mxu0 0.0
  %3389 = vmatpush1.msra.mxu0 0.0
  %3390 = vmatprep.subr.mxu0 0.0
  %3391 = vmatpush1.msra.mxu0 0.0
  %3392 = vmatprep.mubr.f32.mxu0 0.0
  %3393 = vmatmul.mubr.f32.gmra.mrb[0].mxu0 %v3326
  %v3394 = vpop.f32.mrb[0].mxu0
  %v3395 = vadd.f32 %v96, %v3394
  %v3396 = vpop.f32.mrb[0].mxu0
  %3397 = vdwg.mxu0
  %v3398 = vtanh.pop %v3395
  %v3399 = vadd.f32 %v3398, 1.0
  %v3400 = vmul.f32 %v3399, 0.5
  %v3401 = vmul.f32 %v3400, %v3316
  %3403 = vrot.lane.b32.xlu0 %v3398, 64
  %v3404 = vpop.permute.xlu0 %3403
  %v3406 = vmul.f32 %v3400, %v3404
  %3408 = vrot.lane.b32.xlu0 %v3406, 32
  %v3409 = vpop.permute.xlu0 %3408
  %v3411 = vadd.f32 %v3401, %v3409
  %v3412 = vtanh.pop %v3411
  %3414 = vrot.lane.b32.xlu0 %v3412, 64
  %v3415 = vpop.permute.xlu0 %3414
  %v3417 = vmul.f32 %v3400, %v3415
  %3419 = vrot.lane.b32.xlu0 %v3417, 32
  %v3420 = vpop.permute.xlu0 %3419
  %v3421 = vsel %vm312, %v3420, 0
  %3423 = vmatprep.subr.mxu0 0.0
  %3424 = vmatpush1.msra.mxu0 %v76
  %3425 = vmatprep.subr.mxu0 0.0
  %3426 = vmatpush1.msra.mxu0 %v77
  %3427 = vmatprep.subr.mxu0 0.0
  %3428 = vmatpush1.msra.mxu0 %v78
  %3429 = vmatprep.subr.mxu0 0.0
  %3430 = vmatpush1.msra.mxu0 %v79
  %3431 = vmatprep.subr.mxu0 0.0
  %3432 = vmatpush1.msra.mxu0 0.0
  %3433 = vmatprep.subr.mxu0 0.0
  %3434 = vmatpush1.msra.mxu0 0.0
  %3435 = vmatprep.subr.mxu0 0.0
  %3436 = vmatpush1.msra.mxu0 0.0
  %3437 = vmatprep.subr.mxu0 0.0
  %3438 = vmatpush1.msra.mxu0 0.0
  %3439 = vmatprep.subr.mxu0 0.0
  %3440 = vmatpush1.msra.mxu0 0.0
  %3441 = vmatprep.subr.mxu0 0.0
  %3442 = vmatpush1.msra.mxu0 0.0
  %3443 = vmatprep.subr.mxu0 0.0
  %3444 = vmatpush1.msra.mxu0 0.0
  %3445 = vmatprep.subr.mxu0 0.0
  %3446 = vmatpush1.msra.mxu0 0.0
  %3447 = vmatprep.subr.mxu0 0.0
  %3448 = vmatpush1.msra.mxu0 0.0
  %3449 = vmatprep.subr.mxu0 0.0
  %3450 = vmatpush1.msra.mxu0 0.0
  %3451 = vmatprep.subr.mxu0 0.0
  %3452 = vmatpush1.msra.mxu0 0.0
  %3453 = vmatprep.subr.mxu0 0.0
  %3454 = vmatpush1.msra.mxu0 0.0
  %3455 = vmatprep.subr.mxu0 0.0
  %3456 = vmatpush1.msra.mxu0 0.0
  %3457 = vmatprep.subr.mxu0 0.0
  %3458 = vmatpush1.msra.mxu0 0.0
  %3459 = vmatprep.subr.mxu0 0.0
  %3460 = vmatpush1.msra.mxu0 0.0
  %3461 = vmatprep.subr.mxu0 0.0
  %3462 = vmatpush1.msra.mxu0 0.0
  %3463 = vmatprep.subr.mxu0 0.0
  %3464 = vmatpush1.msra.mxu0 0.0
  %3465 = vmatprep.subr.mxu0 0.0
  %3466 = vmatpush1.msra.mxu0 0.0
  %3467 = vmatprep.subr.mxu0 0.0
  %3468 = vmatpush1.msra.mxu0 0.0
  %3469 = vmatprep.subr.mxu0 0.0
  %3470 = vmatpush1.msra.mxu0 0.0
  %3471 = vmatprep.subr.mxu0 0.0
  %3472 = vmatpush1.msra.mxu0 0.0
  %3473 = vmatprep.subr.mxu0 0.0
  %3474 = vmatpush1.msra.mxu0 0.0
  %3475 = vmatprep.subr.mxu0 0.0
  %3476 = vmatpush1.msra.mxu0 0.0
  %3477 = vmatprep.subr.mxu0 0.0
  %3478 = vmatpush1.msra.mxu0 0.0
  %3479 = vmatprep.subr.mxu0 0.0
  %3480 = vmatpush1.msra.mxu0 0.0
  %3481 = vmatprep.subr.mxu0 0.0
  %3482 = vmatpush1.msra.mxu0 0.0
  %3483 = vmatprep.subr.mxu0 0.0
  %3484 = vmatpush1.msra.mxu0 0.0
  %3485 = vmatprep.subr.mxu0 0.0
  %3486 = vmatpush1.msra.mxu0 0.0
  %3487 = vmatprep.mubr.f32.mxu0 0.0
  %3488 = vmatmul.mubr.f32.gmra.mrb[0].mxu0 %v3421
  %v3489 = vpop.f32.mrb[0].mxu0
  %v3490 = vadd.f32 %v96, %v3489
  %v3491 = vpop.f32.mrb[0].mxu0
  %3492 = vdwg.mxu0
  %v3493 = vtanh.pop %v3490
  %v3494 = vadd.f32 %v3493, 1.0
  %v3495 = vmul.f32 %v3494, 0.5
  %v3496 = vmul.f32 %v3495, %v3411
  %3498 = vrot.lane.b32.xlu0 %v3493, 64
  %v3499 = vpop.permute.xlu0 %3498
  %v3501 = vmul.f32 %v3495, %v3499
  %3503 = vrot.lane.b32.xlu0 %v3501, 32
  %v3504 = vpop.permute.xlu0 %3503
  %v3506 = vadd.f32 %v3496, %v3504
  %v3507 = vtanh.pop %v3506
  %3509 = vrot.lane.b32.xlu0 %v3507, 64
  %v3510 = vpop.permute.xlu0 %3509
  %v3512 = vmul.f32 %v3495, %v3510
  %3514 = vrot.lane.b32.xlu0 %v3512, 32
  %v3515 = vpop.permute.xlu0 %3514
  %v3516 = vsel %vm312, %v3515, 0
  %3518 = vmatprep.subr.mxu0 0.0
  %3519 = vmatpush1.msra.mxu0 %v76
  %3520 = vmatprep.subr.mxu0 0.0
  %3521 = vmatpush1.msra.mxu0 %v77
  %3522 = vmatprep.subr.mxu0 0.0
  %3523 = vmatpush1.msra.mxu0 %v78
  %3524 = vmatprep.subr.mxu0 0.0
  %3525 = vmatpush1.msra.mxu0 %v79
  %3526 = vmatprep.subr.mxu0 0.0
  %3527 = vmatpush1.msra.mxu0 0.0
  %3528 = vmatprep.subr.mxu0 0.0
  %3529 = vmatpush1.msra.mxu0 0.0
  %3530 = vmatprep.subr.mxu0 0.0
  %3531 = vmatpush1.msra.mxu0 0.0
  %3532 = vmatprep.subr.mxu0 0.0
  %3533 = vmatpush1.msra.mxu0 0.0
  %3534 = vmatprep.subr.mxu0 0.0
  %3535 = vmatpush1.msra.mxu0 0.0
  %3536 = vmatprep.subr.mxu0 0.0
  %3537 = vmatpush1.msra.mxu0 0.0
  %3538 = vmatprep.subr.mxu0 0.0
  %3539 = vmatpush1.msra.mxu0 0.0
  %3540 = vmatprep.subr.mxu0 0.0
  %3541 = vmatpush1.msra.mxu0 0.0
  %3542 = vmatprep.subr.mxu0 0.0
  %3543 = vmatpush1.msra.mxu0 0.0
  %3544 = vmatprep.subr.mxu0 0.0
  %3545 = vmatpush1.msra.mxu0 0.0
  %3546 = vmatprep.subr.mxu0 0.0
  %3547 = vmatpush1.msra.mxu0 0.0
  %3548 = vmatprep.subr.mxu0 0.0
  %3549 = vmatpush1.msra.mxu0 0.0
  %3550 = vmatprep.subr.mxu0 0.0
  %3551 = vmatpush1.msra.mxu0 0.0
  %3552 = vmatprep.subr.mxu0 0.0
  %3553 = vmatpush1.msra.mxu0 0.0
  %3554 = vmatprep.subr.mxu0 0.0
  %3555 = vmatpush1.msra.mxu0 0.0
  %3556 = vmatprep.subr.mxu0 0.0
  %3557 = vmatpush1.msra.mxu0 0.0
  %3558 = vmatprep.subr.mxu0 0.0
  %3559 = vmatpush1.msra.mxu0 0.0
  %3560 = vmatprep.subr.mxu0 0.0
  %3561 = vmatpush1.msra.mxu0 0.0
  %3562 = vmatprep.subr.mxu0 0.0
  %3563 = vmatpush1.msra.mxu0 0.0
  %3564 = vmatprep.subr.mxu0 0.0
  %3565 = vmatpush1.msra.mxu0 0.0
  %3566 = vmatprep.subr.mxu0 0.0
  %3567 = vmatpush1.msra.mxu0 0.0
  %3568 = vmatprep.subr.mxu0 0.0
  %3569 = vmatpush1.msra.mxu0 0.0
  %3570 = vmatprep.subr.mxu0 0.0
  %3571 = vmatpush1.msra.mxu0 0.0
  %3572 = vmatprep.subr.mxu0 0.0
  %3573 = vmatpush1.msra.mxu0 0.0
  %3574 = vmatprep.subr.mxu0 0.0
  %3575 = vmatpush1.msra.mxu0 0.0
  %3576 = vmatprep.subr.mxu0 0.0
  %3577 = vmatpush1.msra.mxu0 0.0
  %3578 = vmatprep.subr.mxu0 0.0
  %3579 = vmatpush1.msra.mxu0 0.0
  %3580 = vmatprep.subr.mxu0 0.0
  %3581 = vmatpush1.msra.mxu0 0.0
  %3582 = vmatprep.mubr.f32.mxu0 0.0
  %3583 = vmatmul.mubr.f32.gmra.mrb[0].mxu0 %v3516
  %v3584 = vpop.f32.mrb[0].mxu0
  %v3585 = vadd.f32 %v96, %v3584
  %v3586 = vpop.f32.mrb[0].mxu0
  %3587 = vdwg.mxu0
  %v3588 = vtanh.pop %v3585
  %v3589 = vadd.f32 %v3588, 1.0
  %v3590 = vmul.f32 %v3589, 0.5
  %v3591 = vmul.f32 %v3590, %v3506
  %3593 = vrot.lane.b32.xlu0 %v3588, 64
  %v3594 = vpop.permute.xlu0 %3593
  %v3596 = vmul.f32 %v3590, %v3594
  %3598 = vrot.lane.b32.xlu0 %v3596, 32
  %v3599 = vpop.permute.xlu0 %3598
  %v3601 = vadd.f32 %v3591, %v3599
  %v3602 = vtanh.pop %v3601
  %3604 = vrot.lane.b32.xlu0 %v3602, 64
  %v3605 = vpop.permute.xlu0 %3604
  %v3607 = vmul.f32 %v3590, %v3605
  %3609 = vrot.lane.b32.xlu0 %v3607, 32
  %v3610 = vpop.permute.xlu0 %3609
  %v3611 = vsel %vm312, %v3610, 0
  %3613 = vmatprep.subr.mxu0 0.0
  %3614 = vmatpush1.msra.mxu0 %v76
  %3615 = vmatprep.subr.mxu0 0.0
  %3616 = vmatpush1.msra.mxu0 %v77
  %3617 = vmatprep.subr.mxu0 0.0
  %3618 = vmatpush1.msra.mxu0 %v78
  %3619 = vmatprep.subr.mxu0 0.0
  %3620 = vmatpush1.msra.mxu0 %v79
  %3621 = vmatprep.subr.mxu0 0.0
  %3622 = vmatpush1.msra.mxu0 0.0
  %3623 = vmatprep.subr.mxu0 0.0
  %3624 = vmatpush1.msra.mxu0 0.0
  %3625 = vmatprep.subr.mxu0 0.0
  %3626 = vmatpush1.msra.mxu0 0.0
  %3627 = vmatprep.subr.mxu0 0.0
  %3628 = vmatpush1.msra.mxu0 0.0
  %3629 = vmatprep.subr.mxu0 0.0
  %3630 = vmatpush1.msra.mxu0 0.0
  %3631 = vmatprep.subr.mxu0 0.0
  %3632 = vmatpush1.msra.mxu0 0.0
  %3633 = vmatprep.subr.mxu0 0.0
  %3634 = vmatpush1.msra.mxu0 0.0
  %3635 = vmatprep.subr.mxu0 0.0
  %3636 = vmatpush1.msra.mxu0 0.0
  %3637 = vmatprep.subr.mxu0 0.0
  %3638 = vmatpush1.msra.mxu0 0.0
  %3639 = vmatprep.subr.mxu0 0.0
  %3640 = vmatpush1.msra.mxu0 0.0
  %3641 = vmatprep.subr.mxu0 0.0
  %3642 = vmatpush1.msra.mxu0 0.0
  %3643 = vmatprep.subr.mxu0 0.0
  %3644 = vmatpush1.msra.mxu0 0.0
  %3645 = vmatprep.subr.mxu0 0.0
  %3646 = vmatpush1.msra.mxu0 0.0
  %3647 = vmatprep.subr.mxu0 0.0
  %3648 = vmatpush1.msra.mxu0 0.0
  %3649 = vmatprep.subr.mxu0 0.0
  %3650 = vmatpush1.msra.mxu0 0.0
  %3651 = vmatprep.subr.mxu0 0.0
  %3652 = vmatpush1.msra.mxu0 0.0
  %3653 = vmatprep.subr.mxu0 0.0
  %3654 = vmatpush1.msra.mxu0 0.0
  %3655 = vmatprep.subr.mxu0 0.0
  %3656 = vmatpush1.msra.mxu0 0.0
  %3657 = vmatprep.subr.mxu0 0.0
  %3658 = vmatpush1.msra.mxu0 0.0
  %3659 = vmatprep.subr.mxu0 0.0
  %3660 = vmatpush1.msra.mxu0 0.0
  %3661 = vmatprep.subr.mxu0 0.0
  %3662 = vmatpush1.msra.mxu0 0.0
  %3663 = vmatprep.subr.mxu0 0.0
  %3664 = vmatpush1.msra.mxu0 0.0
  %3665 = vmatprep.subr.mxu0 0.0
  %3666 = vmatpush1.msra.mxu0 0.0
  %3667 = vmatprep.subr.mxu0 0.0
  %3668 = vmatpush1.msra.mxu0 0.0
  %3669 = vmatprep.subr.mxu0 0.0
  %3670 = vmatpush1.msra.mxu0 0.0
  %3671 = vmatprep.subr.mxu0 0.0
  %3672 = vmatpush1.msra.mxu0 0.0
  %3673 = vmatprep.subr.mxu0 0.0
  %3674 = vmatpush1.msra.mxu0 0.0
  %3675 = vmatprep.subr.mxu0 0.0
  %3676 = vmatpush1.msra.mxu0 0.0
  %3677 = vmatprep.mubr.f32.mxu0 0.0
  %3678 = vmatmul.mubr.f32.gmra.mrb[0].mxu0 %v3611
  %v3679 = vpop.f32.mrb[0].mxu0
  %v3680 = vadd.f32 %v96, %v3679
  %v3681 = vpop.f32.mrb[0].mxu0
  %3682 = vdwg.mxu0
  %v3683 = vtanh.pop %v3680
  %v3684 = vadd.f32 %v3683, 1.0
  %v3685 = vmul.f32 %v3684, 0.5
  %v3686 = vmul.f32 %v3685, %v3601
  %3688 = vrot.lane.b32.xlu0 %v3683, 64
  %v3689 = vpop.permute.xlu0 %3688
  %v3691 = vmul.f32 %v3685, %v3689
  %3693 = vrot.lane.b32.xlu0 %v3691, 32
  %v3694 = vpop.permute.xlu0 %3693
  %v3696 = vadd.f32 %v3686, %v3694
  %v3697 = vtanh.pop %v3696
  %3699 = vrot.lane.b32.xlu0 %v3697, 64
  %v3700 = vpop.permute.xlu0 %3699
  %v3702 = vmul.f32 %v3685, %v3700
  %3704 = vrot.lane.b32.xlu0 %v3702, 32
  %v3705 = vpop.permute.xlu0 %3704
  %v3706 = vsel %vm312, %v3705, 0
  %3708 = vmatprep.subr.mxu0 0.0
  %3709 = vmatpush1.msra.mxu0 %v76
  %3710 = vmatprep.subr.mxu0 0.0
  %3711 = vmatpush1.msra.mxu0 %v77
  %3712 = vmatprep.subr.mxu0 0.0
  %3713 = vmatpush1.msra.mxu0 %v78
  %3714 = vmatprep.subr.mxu0 0.0
  %3715 = vmatpush1.msra.mxu0 %v79
  %3716 = vmatprep.subr.mxu0 0.0
  %3717 = vmatpush1.msra.mxu0 0.0
  %3718 = vmatprep.subr.mxu0 0.0
  %3719 = vmatpush1.msra.mxu0 0.0
  %3720 = vmatprep.subr.mxu0 0.0
  %3721 = vmatpush1.msra.mxu0 0.0
  %3722 = vmatprep.subr.mxu0 0.0
  %3723 = vmatpush1.msra.mxu0 0.0
  %3724 = vmatprep.subr.mxu0 0.0
  %3725 = vmatpush1.msra.mxu0 0.0
  %3726 = vmatprep.subr.mxu0 0.0
  %3727 = vmatpush1.msra.mxu0 0.0
  %3728 = vmatprep.subr.mxu0 0.0
  %3729 = vmatpush1.msra.mxu0 0.0
  %3730 = vmatprep.subr.mxu0 0.0
  %3731 = vmatpush1.msra.mxu0 0.0
  %3732 = vmatprep.subr.mxu0 0.0
  %3733 = vmatpush1.msra.mxu0 0.0
  %3734 = vmatprep.subr.mxu0 0.0
  %3735 = vmatpush1.msra.mxu0 0.0
  %3736 = vmatprep.subr.mxu0 0.0
  %3737 = vmatpush1.msra.mxu0 0.0
  %3738 = vmatprep.subr.mxu0 0.0
  %3739 = vmatpush1.msra.mxu0 0.0
  %3740 = vmatprep.subr.mxu0 0.0
  %3741 = vmatpush1.msra.mxu0 0.0
  %3742 = vmatprep.subr.mxu0 0.0
  %3743 = vmatpush1.msra.mxu0 0.0
  %3744 = vmatprep.subr.mxu0 0.0
  %3745 = vmatpush1.msra.mxu0 0.0
  %3746 = vmatprep.subr.mxu0 0.0
  %3747 = vmatpush1.msra.mxu0 0.0
  %3748 = vmatprep.subr.mxu0 0.0
  %3749 = vmatpush1.msra.mxu0 0.0
  %3750 = vmatprep.subr.mxu0 0.0
  %3751 = vmatpush1.msra.mxu0 0.0
  %3752 = vmatprep.subr.mxu0 0.0
  %3753 = vmatpush1.msra.mxu0 0.0
  %3754 = vmatprep.subr.mxu0 0.0
  %3755 = vmatpush1.msra.mxu0 0.0
  %3756 = vmatprep.subr.mxu0 0.0
  %3757 = vmatpush1.msra.mxu0 0.0
  %3758 = vmatprep.subr.mxu0 0.0
  %3759 = vmatpush1.msra.mxu0 0.0
  %3760 = vmatprep.subr.mxu0 0.0
  %3761 = vmatpush1.msra.mxu0 0.0
  %3762 = vmatprep.subr.mxu0 0.0
  %3763 = vmatpush1.msra.mxu0 0.0
  %3764 = vmatprep.subr.mxu0 0.0
  %3765 = vmatpush1.msra.mxu0 0.0
  %3766 = vmatprep.subr.mxu0 0.0
  %3767 = vmatpush1.msra.mxu0 0.0
  %3768 = vmatprep.subr.mxu0 0.0
  %3769 = vmatpush1.msra.mxu0 0.0
  %3770 = vmatprep.subr.mxu0 0.0
  %3771 = vmatpush1.msra.mxu0 0.0
  %3772 = vmatprep.mubr.f32.mxu0 0.0
  %3773 = vmatmul.mubr.f32.gmra.mrb[0].mxu0 %v3706
  %v3774 = vpop.f32.mrb[0].mxu0
  %v3775 = vadd.f32 %v96, %v3774
  %v3776 = vpop.f32.mrb[0].mxu0
  %3777 = vdwg.mxu0
  %v3778 = vtanh.pop %v3775
  %v3779 = vadd.f32 %v3778, 1.0
  %v3780 = vmul.f32 %v3779, 0.5
  %v3781 = vmul.f32 %v3780, %v3696
  %3783 = vrot.lane.b32.xlu0 %v3778, 64
  %v3784 = vpop.permute.xlu0 %3783
  %v3786 = vmul.f32 %v3780, %v3784
  %3788 = vrot.lane.b32.xlu0 %v3786, 32
  %v3789 = vpop.permute.xlu0 %3788
  %v3791 = vadd.f32 %v3781, %v3789
  %v3792 = vtanh.pop %v3791
  %3794 = vrot.lane.b32.xlu0 %v3792, 64
  %v3795 = vpop.permute.xlu0 %3794
  %v3797 = vmul.f32 %v3780, %v3795
  %3799 = vrot.lane.b32.xlu0 %v3797, 32
  %v3800 = vpop.permute.xlu0 %3799
  %v3801 = vsel %vm312, %v3800, 0
  %3803 = vmatprep.subr.mxu0 0.0
  %3804 = vmatpush1.msra.mxu0 %v76
  %3805 = vmatprep.subr.mxu0 0.0
  %3806 = vmatpush1.msra.mxu0 %v77
  %3807 = vmatprep.subr.mxu0 0.0
  %3808 = vmatpush1.msra.mxu0 %v78
  %3809 = vmatprep.subr.mxu0 0.0
  %3810 = vmatpush1.msra.mxu0 %v79
  %3811 = vmatprep.subr.mxu0 0.0
  %3812 = vmatpush1.msra.mxu0 0.0
  %3813 = vmatprep.subr.mxu0 0.0
  %3814 = vmatpush1.msra.mxu0 0.0
  %3815 = vmatprep.subr.mxu0 0.0
  %3816 = vmatpush1.msra.mxu0 0.0
  %3817 = vmatprep.subr.mxu0 0.0
  %3818 = vmatpush1.msra.mxu0 0.0
  %3819 = vmatprep.subr.mxu0 0.0
  %3820 = vmatpush1.msra.mxu0 0.0
  %3821 = vmatprep.subr.mxu0 0.0
  %3822 = vmatpush1.msra.mxu0 0.0
  %3823 = vmatprep.subr.mxu0 0.0
  %3824 = vmatpush1.msra.mxu0 0.0
  %3825 = vmatprep.subr.mxu0 0.0
  %3826 = vmatpush1.msra.mxu0 0.0
  %3827 = vmatprep.subr.mxu0 0.0
  %3828 = vmatpush1.msra.mxu0 0.0
  %3829 = vmatprep.subr.mxu0 0.0
  %3830 = vmatpush1.msra.mxu0 0.0
  %3831 = vmatprep.subr.mxu0 0.0
  %3832 = vmatpush1.msra.mxu0 0.0
  %3833 = vmatprep.subr.mxu0 0.0
  %3834 = vmatpush1.msra.mxu0 0.0
  %3835 = vmatprep.subr.mxu0 0.0
  %3836 = vmatpush1.msra.mxu0 0.0
  %3837 = vmatprep.subr.mxu0 0.0
  %3838 = vmatpush1.msra.mxu0 0.0
  %3839 = vmatprep.subr.mxu0 0.0
  %3840 = vmatpush1.msra.mxu0 0.0
  %3841 = vmatprep.subr.mxu0 0.0
  %3842 = vmatpush1.msra.mxu0 0.0
  %3843 = vmatprep.subr.mxu0 0.0
  %3844 = vmatpush1.msra.mxu0 0.0
  %3845 = vmatprep.subr.mxu0 0.0
  %3846 = vmatpush1.msra.mxu0 0.0
  %3847 = vmatprep.subr.mxu0 0.0
  %3848 = vmatpush1.msra.mxu0 0.0
  %3849 = vmatprep.subr.mxu0 0.0
  %3850 = vmatpush1.msra.mxu0 0.0
  %3851 = vmatprep.subr.mxu0 0.0
  %3852 = vmatpush1.msra.mxu0 0.0
  %3853 = vmatprep.subr.mxu0 0.0
  %3854 = vmatpush1.msra.mxu0 0.0
  %3855 = vmatprep.subr.mxu0 0.0
  %3856 = vmatpush1.msra.mxu0 0.0
  %3857 = vmatprep.subr.mxu0 0.0
  %3858 = vmatpush1.msra.mxu0 0.0
  %3859 = vmatprep.subr.mxu0 0.0
  %3860 = vmatpush1.msra.mxu0 0.0
  %3861 = vmatprep.subr.mxu0 0.0
  %3862 = vmatpush1.msra.mxu0 0.0
  %3863 = vmatprep.subr.mxu0 0.0
  %3864 = vmatpush1.msra.mxu0 0.0
  %3865 = vmatprep.subr.mxu0 0.0
  %3866 = vmatpush1.msra.mxu0 0.0
  %3867 = vmatprep.mubr.f32.mxu0 0.0
  %3868 = vmatmul.mubr.f32.gmra.mrb[0].mxu0 %v3801
  %v3869 = vpop.f32.mrb[0].mxu0
  %v3870 = vadd.f32 %v96, %v3869
  %v3871 = vpop.f32.mrb[0].mxu0
  %3872 = vdwg.mxu0
  %v3873 = vtanh.pop %v3870
  %v3874 = vadd.f32 %v3873, 1.0
  %v3875 = vmul.f32 %v3874, 0.5
  %v3876 = vmul.f32 %v3875, %v3791
  %3878 = vrot.lane.b32.xlu0 %v3873, 64
  %v3879 = vpop.permute.xlu0 %3878
  %v3881 = vmul.f32 %v3875, %v3879
  %3883 = vrot.lane.b32.xlu0 %v3881, 32
  %v3884 = vpop.permute.xlu0 %3883
  %v3886 = vadd.f32 %v3876, %v3884
  %v3887 = vtanh.pop %v3886
  %3889 = vrot.lane.b32.xlu0 %v3887, 64
  %v3890 = vpop.permute.xlu0 %3889
  %v3892 = vmul.f32 %v3875, %v3890
  %v3893 = vld [vmem:[%s18] sm:$0x1]
  %v3895 = vlaneseq
  %v3896 = vshrl.u32 %v3895, 7
  %v3897 = vsub.s32 0, %v3896
  %v3898 = vrot.slane %v3893, %v3897
  %v3901 = vcombine.low %v2653, %v2752
  %v3902 = vcombine.low %v2847, %v2942
  %v3904 = vunpack.c.l.s4 1983009808
  %v3905 = vunpack.c.0.s8 %v3904
  %v3906 = vlaneseq
  %v3907 = vshrl.u32 %v3906, 7
  %v3908 = vsub.s32 %v3905, %v3907
  %v3909 = vrot.slane %v3901, %v3908
  %v3911 = vunpack.c.l.s4 1983009808
  %v3912 = vunpack.c.0.s8 %v3911
  %v3913 = vlaneseq
  %v3914 = vshrl.u32 %v3913, 7
  %v3915 = vsub.s32 %v3912, %v3914
  %v3916 = vrot.slane %v3902, %v3915
  %v3917 = vcombine.low %v3909, %v3916
  %v3918 = vcombine.low %v3037, %v3132
  %v3919 = vcombine.low %v3227, %v3322
  %v3921 = vunpack.c.l.s4 1983009808
  %v3922 = vunpack.c.0.s8 %v3921
  %v3923 = vlaneseq
  %v3924 = vshrl.u32 %v3923, 7
  %v3925 = vsub.s32 %v3922, %v3924
  %v3926 = vrot.slane %v3918, %v3925
  %v3928 = vunpack.c.l.s4 1983009808
  %v3929 = vunpack.c.0.s8 %v3928
  %v3930 = vlaneseq
  %v3931 = vshrl.u32 %v3930, 7
  %v3932 = vsub.s32 %v3929, %v3931
  %v3933 = vrot.slane %v3919, %v3932
  %v3934 = vcombine.low %v3926, %v3933
  %v3935 = vcombine.low %v3417, %v3512
  %v3936 = vcombine.low %v3607, %v3702
  %v3938 = vunpack.c.l.s4 1983009808
  %v3939 = vunpack.c.0.s8 %v3938
  %v3940 = vlaneseq
  %v3941 = vshrl.u32 %v3940, 7
  %v3942 = vsub.s32 %v3939, %v3941
  %v3943 = vrot.slane %v3935, %v3942
  %v3945 = vunpack.c.l.s4 1983009808
  %v3946 = vunpack.c.0.s8 %v3945
  %v3947 = vlaneseq
  %v3948 = vshrl.u32 %v3947, 7
  %v3949 = vsub.s32 %v3946, %v3948
  %v3950 = vrot.slane %v3936, %v3949
  %v3951 = vcombine.low %v3943, %v3950
  %v3952 = vcombine.low %v3797, %v3892
  %v3954 = vunpack.c.l.s4 1983009808
  %v3955 = vunpack.c.0.s8 %v3954
  %v3956 = vlaneseq
  %v3957 = vshrl.u32 %v3956, 7
  %v3958 = vsub.s32 %v3955, %v3957
  %v3959 = vrot.slane %v3952, %v3958
  %3960 = vrot.lane.b32.xlu0 %v3917, 32
  %v3961 = vpop.permute.xlu0 %3960
  %3962 = vrot.lane.b32.xlu0 %v3934, 32
  %v3963 = vpop.permute.xlu0 %3962
  %3964 = vrot.lane.b32.xlu0 %v3951, 32
  %v3965 = vpop.permute.xlu0 %3964
  %3966 = vrot.lane.b32.xlu0 %v3959, 32
  %v3967 = vpop.permute.xlu0 %3966
  %v3968 = vsel %vm312, %v3961, 0
  %v3970 = vsel %vm312, %v3963, 0
  %v3972 = vsel %vm312, %v3965, 0
  %v3974 = vsel %vm312, %v3967, 0
  %3976 = vmatprep.subr.mxu0 0.0
  %3977 = vmatpush1.msra.mxu0 %v80
  %3978 = vmatprep.subr.mxu0 0.0
  %3979 = vmatpush1.msra.mxu0 %v81
  %3980 = vmatprep.subr.mxu0 0.0
  %3981 = vmatpush1.msra.mxu0 %v82
  %3982 = vmatprep.subr.mxu0 0.0
  %3983 = vmatpush1.msra.mxu0 %v83
  %3984 = vmatprep.subr.mxu0 0.0
  %3985 = vmatpush1.msra.mxu0 0.0
  %3986 = vmatprep.subr.mxu0 0.0
  %3987 = vmatpush1.msra.mxu0 0.0
  %3988 = vmatprep.subr.mxu0 0.0
  %3989 = vmatpush1.msra.mxu0 0.0
  %3990 = vmatprep.subr.mxu0 0.0
  %3991 = vmatpush1.msra.mxu0 0.0
  %3992 = vmatprep.subr.mxu0 0.0
  %3993 = vmatpush1.msra.mxu0 0.0
  %3994 = vmatprep.subr.mxu0 0.0
  %3995 = vmatpush1.msra.mxu0 0.0
  %3996 = vmatprep.subr.mxu0 0.0
  %3997 = vmatpush1.msra.mxu0 0.0
  %3998 = vmatprep.subr.mxu0 0.0
  %3999 = vmatpush1.msra.mxu0 0.0
  %4000 = vmatprep.subr.mxu0 0.0
  %4001 = vmatpush1.msra.mxu0 0.0
  %4002 = vmatprep.subr.mxu0 0.0
  %4003 = vmatpush1.msra.mxu0 0.0
  %4004 = vmatprep.subr.mxu0 0.0
  %4005 = vmatpush1.msra.mxu0 0.0
  %4006 = vmatprep.subr.mxu0 0.0
  %4007 = vmatpush1.msra.mxu0 0.0
  %4008 = vmatprep.subr.mxu0 0.0
  %4009 = vmatpush1.msra.mxu0 0.0
  %4010 = vmatprep.subr.mxu0 0.0
  %4011 = vmatpush1.msra.mxu0 0.0
  %4012 = vmatprep.subr.mxu0 0.0
  %4013 = vmatpush1.msra.mxu0 0.0
  %4014 = vmatprep.subr.mxu0 0.0
  %4015 = vmatpush1.msra.mxu0 0.0
  %4016 = vmatprep.subr.mxu0 0.0
  %4017 = vmatpush1.msra.mxu0 0.0
  %4018 = vmatprep.subr.mxu0 0.0
  %4019 = vmatpush1.msra.mxu0 0.0
  %4020 = vmatprep.subr.mxu0 0.0
  %4021 = vmatpush1.msra.mxu0 0.0
  %4022 = vmatprep.subr.mxu0 0.0
  %4023 = vmatpush1.msra.mxu0 0.0
  %4024 = vmatprep.subr.mxu0 0.0
  %4025 = vmatpush1.msra.mxu0 0.0
  %4026 = vmatprep.subr.mxu0 0.0
  %4027 = vmatpush1.msra.mxu0 0.0
  %4028 = vmatprep.subr.mxu0 0.0
  %4029 = vmatpush1.msra.mxu0 0.0
  %4030 = vmatprep.subr.mxu0 0.0
  %4031 = vmatpush1.msra.mxu0 0.0
  %4032 = vmatprep.subr.mxu0 0.0
  %4033 = vmatpush1.msra.mxu0 0.0
  %4034 = vmatprep.subr.mxu0 0.0
  %4035 = vmatpush1.msra.mxu0 0.0
  %4036 = vmatprep.subr.mxu0 0.0
  %4037 = vmatpush1.msra.mxu0 0.0
  %4038 = vmatprep.subr.mxu0 0.0
  %4039 = vmatpush1.msra.mxu0 0.0
  %4040 = vmatprep.mubr.f32.mxu0 0.0
  %4041 = vmatmul.mubr.f32.gmra.mrb[0].mxu0 %v3968
  %v4042 = vpop.f32.mrb[0].mxu0
  %v4043 = vadd.f32 %v3898, %v4042
  %v4044 = vpop.f32.mrb[0].mxu0
  %4045 = vmatprep.mubr.f32.mxu0 0.0
  %4046 = vmatmul.mubr.f32.gmra.mrb[0].mxu0 %v3970
  %v4047 = vpop.f32.mrb[0].mxu0
  %v4048 = vadd.f32 %v3898, %v4047
  %v4049 = vpop.f32.mrb[0].mxu0
  %4050 = vmatprep.mubr.f32.mxu0 0.0
  %4051 = vmatmul.mubr.f32.gmra.mrb[0].mxu0 %v3972
  %v4052 = vpop.f32.mrb[0].mxu0
  %v4053 = vadd.f32 %v3898, %v4052
  %v4054 = vpop.f32.mrb[0].mxu0
  %4055 = vmatprep.mubr.f32.mxu0 0.0
  %4056 = vmatmul.mubr.f32.gmra.mrb[0].mxu0 %v3974
  %v4057 = vpop.f32.mrb[0].mxu0
  %v4058 = vadd.f32 %v3898, %v4057
  %v4059 = vpop.f32.mrb[0].mxu0
  %4060 = vdwg.mxu0
  %4061 = vst.msk [vmem:[%s19] sm:$0xff] %vm160, %v4043
  %4062 = vst.msk [vmem:[%s19 + $0x8] sm:$0xff] %vm160, %v4048
  %4063 = vst.msk [vmem:[%s19 + $0x10] sm:$0xff] %vm160, %v4053
  %vm4064 = vcmask 314368
  %4065 = vst.msk [vmem:[%s19 + $0x18] sm:$0xf] %vm4064, %v4058
  // Predicated region
  $region78: #{vae_forward.1} parent=0 // pred_check
    _
  $region79: #{vae_forward.1} parent=0 // pred_check_branch
    %4067 = sbr.rel (0) target = $region81
  $region80: #{vae_forward.1} parent=0 // pred_region
    _
  $region81: #{vae_forward.1} parent=0 // pred_fallthru
    _
  // Predicated region
  $region82: #{vae_forward.1} parent=0 // pred_check
    _
  $region83: #{vae_forward.1} parent=0 // pred_check_branch
    %4069 = sbr.rel (0) target = $region85
  $region84: #{vae_forward.1} parent=0 // pred_region
    _
  $region85: #{vae_forward.1} parent=0 // pred_fallthru
    _
  // Predicated region
  $region86: #{vae_forward.1} parent=0 // pred_check
    _
  $region87: #{vae_forward.1} parent=0 // pred_check_branch
    %4071 = sbr.rel (0) target = $region89
  $region88: #{vae_forward.1} parent=0 // pred_region
    _
  $region89: #{vae_forward.1} parent=0 // pred_fallthru
    _
  // Predicated region
  $region90: #{vae_forward.1} parent=0 // pred_check
    _
  $region91: #{vae_forward.1} parent=0 // pred_check_branch
    %4073 = sbr.rel (0) target = $region93
  $region92: #{vae_forward.1} parent=0 // pred_region
    _
  $region93: #{vae_forward.1} parent=0 // pred_fallthru
    _

</llo_original>
